<compile_context>
chip_gen: v6e
topology: v6e:2x2x1
jax: 0.10.0
libtpu: 0.0.40
codegen_flags: <defaults>
</compile_context>

<pallas_src>
import functools

import jax
import jax.numpy as jnp
from jax.experimental import pallas as pl
from jax.experimental.pallas import tpu as pltpu

BN_EPS = 1e-5


# --------------------------------------------------------------------------
# Fused kernel
# --------------------------------------------------------------------------
def _basic_block_kernel(x_ref, w1_ref, b1_ref, w2_ref, b2_ref, out_ref,
                        xpad_ref, ypad_ref, *, B, H):
    """B images per grid step, row-flattened NHWC layout.

    x_ref   : (B, H, WC)      input activations (f32 or bf16)
    w*_ref  : (3, WC, WC)     banded conv weights (BN scale folded), matmul dtype
    b*_ref  : (1, WC)         folded BN bias, tiled over W (f32)
    out_ref : (B, H, WC)
    xpad_ref, ypad_ref : (B*(H+2), WC) VMEM scratch in matmul dtype.
        Per-image slab of H+2 rows: [zero halo, H data rows, zero halo].
    """
    Hp = H + 2
    M = B * Hp - 2                      # rows of the "wide" conv result

    # ---- zero ONLY the halo rows (they ARE the conv zero padding) ----------
    # Interior rows are fully overwritten below.  Re-zeroed every step (not
    # under pl.when(program_id == 0)): with dimension_semantics=("parallel",)
    # a TensorCore is not guaranteed to execute step 0 and each core owns its
    # own scratch.  Halo rows must never be written anywhere else.
    zero1 = jnp.zeros((1, xpad_ref.shape[1]), xpad_ref.dtype)
    zero2 = jnp.zeros((2, xpad_ref.shape[1]), xpad_ref.dtype)
    for pad in (xpad_ref, ypad_ref):
        pad[0:1, :] = zero1                         # top halo, image 0
        for i in range(B - 1):                      # adjacent halo pairs
            r = i * Hp + H + 1                      # bottom(i) + top(i+1)
            pad[r:r + 2, :] = zero2
        pad[B * Hp - 1:B * Hp, :] = zero1           # bottom halo, last image

    # ---- stage input into the padded scratch (interior rows only) ----------
    for i in range(B):
        xpad_ref[i * Hp + 1:i * Hp + 1 + H, :] = x_ref[i].astype(xpad_ref.dtype)

    # ---- conv1 + BN1 + ReLU (activation never leaves VMEM) -----------------
    # One tall matmul per kernel row dy; the 2 junk rows per image boundary
    # are simply never read back at the write-out stage.
    y = jnp.dot(xpad_ref[0:M, :], w1_ref[0],
                preferred_element_type=jnp.float32)
    y += jnp.dot(xpad_ref[1:M + 1, :], w1_ref[1],
                 preferred_element_type=jnp.float32)
    y += jnp.dot(xpad_ref[2:M + 2, :], w1_ref[2],
                 preferred_element_type=jnp.float32)
    b1 = b1_ref[...]
    for i in range(B):
        y1 = jnp.maximum(y[i * Hp:i * Hp + H, :] + b1, 0.0)
        ypad_ref[i * Hp + 1:i * Hp + 1 + H, :] = y1.astype(ypad_ref.dtype)

    # ---- conv2 + BN2 + residual add + ReLU ----------------------------------
    z = jnp.dot(ypad_ref[0:M, :], w2_ref[0],
                preferred_element_type=jnp.float32)
    z += jnp.dot(ypad_ref[1:M + 1, :], w2_ref[1],
                 preferred_element_type=jnp.float32)
    z += jnp.dot(ypad_ref[2:M + 2, :], w2_ref[2],
                 preferred_element_type=jnp.float32)
    b2 = b2_ref[...]
    for i in range(B):
        y2 = z[i * Hp:i * Hp + H, :] + b2 + x_ref[i].astype(jnp.float32)
        out_ref[i] = jnp.maximum(y2, 0.0).astype(out_ref.dtype)


def _pick_batch_block(N, H, target_rows=256):
    """Largest divisor B of N with B*(H+2) <= target_rows (at least 1)."""
    cap = max(1, target_rows // (H + 2))
    best = 1
    for b in range(1, min(N, cap) + 1):
        if N % b == 0:
            best = b
    return best


def _basic_block_pallas(x_flat, wb1, b1f, wb2, b2f, *, B, H, WC, matmul_dtype):
    N = x_flat.shape[0]
    kernel = functools.partial(_basic_block_kernel, B=B, H=H)
    return pl.pallas_call(
        kernel,
        out_shape=jax.ShapeDtypeStruct((N, H, WC), x_flat.dtype),
        grid=(N // B,),
        in_specs=[
            pl.BlockSpec((B, H, WC), lambda n: (n, 0, 0)),    # x (B images)
            pl.BlockSpec((3, WC, WC), lambda n: (0, 0, 0)),   # banded w1
            pl.BlockSpec((1, WC), lambda n: (0, 0)),          # bias1 (tiled)
            pl.BlockSpec((3, WC, WC), lambda n: (0, 0, 0)),   # banded w2
            pl.BlockSpec((1, WC), lambda n: (0, 0)),          # bias2 (tiled)
        ],
        out_specs=pl.BlockSpec((B, H, WC), lambda n: (n, 0, 0)),
        scratch_shapes=[
            pltpu.VMEM((B * (H + 2), WC), matmul_dtype),      # padded input
            pltpu.VMEM((B * (H + 2), WC), matmul_dtype),      # padded conv1 out
        ],
        compiler_params=pltpu.CompilerParams(
            dimension_semantics=("parallel",)),
    )(x_flat, wb1, b1f, wb2, b2f)


# --------------------------------------------------------------------------
# Trace-time parameter preparation
# --------------------------------------------------------------------------
def _fold_bn(gamma, beta, mean, var, eps=BN_EPS):
    scale = gamma / jnp.sqrt(var + eps)
    bias = beta - mean * scale
    return scale, bias


def _banded_conv_weights(w_oihw, scale, W, dtype):
    """(Cout,Cin,3,3) OIHW conv weight with BN scale folded ->
    (3, W*Cin, W*Cout) banded matrices (one per kernel row dy).

    wb[dy][x'*Cin + ci, x*Cout + co] = w[dy, x'-x+1, ci, co] when |x'-x| <= 1,
    so the dx taps and the W-direction zero padding are baked into the matmul.
    """
    Cout, Cin, _, KW = w_oihw.shape
    w = jnp.transpose(w_oihw, (2, 3, 1, 0)) * scale[None, None, None, :]
    wb = jnp.zeros((3, W * Cin, W * Cout), jnp.float32)
    for x in range(W):
        for dx in range(KW):
            xs = x + dx - 1
            if 0 <= xs < W:
                wb = wb.at[:, xs * Cin:(xs + 1) * Cin,
                           x * Cout:(x + 1) * Cout].set(w[:, dx])
    return wb.astype(dtype)


# --------------------------------------------------------------------------
# Public forward (BasicBlock, stride=1, downsample=None, eval-mode BN)
# --------------------------------------------------------------------------
def basic_block_forward_flat(x_flat, params, *, W, C,
                             matmul_dtype=jnp.bfloat16, batch_block=None):
    """x_flat: (N, H, W*C) row-flattened NHWC (f32 or bf16).
    Output has the same dtype/layout; use this directly when chaining blocks
    so activations stay flat (and optionally bf16) at the HBM boundary."""
    N, H, WC = x_flat.shape
    assert WC == W * C
    assert WC % 128 == 0, "lane-dense layout requires W*C % 128 == 0"
    B = batch_block if batch_block is not None else _pick_batch_block(N, H)
    assert N % B == 0

    s1, b1 = _fold_bn(*params["bn1"])
    s2, b2 = _fold_bn(*params["bn2"])
    wb1 = _banded_conv_weights(params["conv1_w"], s1, W, matmul_dtype)
    wb2 = _banded_conv_weights(params["conv2_w"], s2, W, matmul_dtype)
    b1f = jnp.tile(b1, W).reshape(1, WC).astype(jnp.float32)
    b2f = jnp.tile(b2, W).reshape(1, WC).astype(jnp.float32)
    return _basic_block_pallas(x_flat, wb1, b1f, wb2, b2f,
                               B=B, H=H, WC=WC, matmul_dtype=matmul_dtype)


def basic_block_forward(x_nchw, params, *, matmul_dtype=jnp.bfloat16,
                        batch_block=None):
    """BasicBlock.forward (stride=1, downsample=None). NCHW in / NCHW out.
    Output dtype follows the input dtype (pass bf16 input for bf16 boundary)."""
    N, C, H, W = x_nchw.shape
    x_flat = jnp.transpose(x_nchw, (0, 2, 3, 1)).reshape(N, H, W * C)
    y_flat = basic_block_forward_flat(x_flat, params, W=W, C=C,
                                      matmul_dtype=matmul_dtype,
                                      batch_block=batch_block)
    return jnp.transpose(y_flat.reshape(N, H, W, C), (0, 3, 1, 2))


# --------------------------------------------------------------------------
# Pure-JAX reference
# --------------------------------------------------------------------------
def _reference_forward(x_nchw, w1_oihw, w2_oihw, bn1, bn2):
    def conv(x, w):
        return jax.lax.conv_general_dilated(
            x, w, window_strides=(1, 1), padding=((1, 1), (1, 1)),
            dimension_numbers=("NCHW", "OIHW", "NCHW"),
            precision=jax.lax.Precision.HIGHEST)

    def bn(x, g, b, m, v):
        return ((x - m[None, :, None, None])
                / jnp.sqrt(v[None, :, None, None] + BN_EPS)
                * g[None, :, None, None] + b[None, :, None, None])

    y = jax.nn.relu(bn(conv(x_nchw, w1_oihw), *bn1))
    y = bn(conv(y, w2_oihw), *bn2)
    return jax.nn.relu(y + x_nchw)


if __name__ == "__main__":
    key = jax.random.PRNGKey(0)
    # stride=1 block: in_channels == out_channels.  W*C = 8*16 = 128 lanes.
    N, C, H, W = 32, 16, 8, 8
    k = jax.random.split(key, 8)

    x = jax.random.normal(k[0], (N, C, H, W), jnp.float32)
    w1 = jax.random.normal(k[1], (C, C, 3, 3), jnp.float32) * 0.1
    w2 = jax.random.normal(k[2], (C, C, 3, 3), jnp.float32) * 0.1
    bn1 = (1.0 + 0.1 * jax.random.normal(k[3], (C,)),            # gamma
           0.1 * jax.random.normal(k[4], (C,)),                  # beta
           0.1 * jax.random.normal(k[5], (C,)),                  # running_mean
           1.0 + 0.1 * jax.random.uniform(k[6], (C,)))           # running_var
    bn2 = (1.0 + 0.1 * jax.random.normal(k[7], (C,)),
           jnp.zeros((C,)), jnp.zeros((C,)), jnp.ones((C,)))
    params = {"conv1_w": w1, "conv2_w": w2, "bn1": bn1, "bn2": bn2}

    ref = _reference_forward(x, w1, w2, bn1, bn2)

    # f32-operand / f32-activation path: close to the f32 reference.
    out_f32 = jax.block_until_ready(
        basic_block_forward(x, params, matmul_dtype=jnp.float32))
    assert out_f32.shape == (N, C, H, W)
    assert jnp.allclose(out_f32, ref, atol=1e-3, rtol=1e-3), "f32 mismatch"

    # bf16 boundary + bf16 matmul operands (perf-preferred), f32 accumulation.
    x_bf16 = x.astype(jnp.bfloat16)
    ref_bf16_in = _reference_forward(x_bf16.astype(jnp.float32), w1, w2,
                                     bn1, bn2)
    out_bf16 = jax.block_until_ready(
        basic_block_forward(x_bf16, params, matmul_dtype=jnp.bfloat16))
    assert out_bf16.dtype == jnp.bfloat16
    err = float(jnp.max(jnp.abs(out_bf16.astype(jnp.float32) - ref_bf16_in)))
    assert err < 0.15, f"bf16 mismatch: max abs err {err}"

    print("KERNEL_OK")
</pallas_src>

<mosaic_0001>
module attributes {stable_mosaic.version = 11 : i64} {
  func.func @_basic_block_kernel(%arg0: i32, %arg1: memref<16x8x128xf32, #tpu.memory_space<vmem>>, %arg2: memref<3x128x128xf32, #tpu.memory_space<vmem>>, %arg3: memref<1x128xf32, #tpu.memory_space<vmem>>, %arg4: memref<3x128x128xf32, #tpu.memory_space<vmem>>, %arg5: memref<1x128xf32, #tpu.memory_space<vmem>>, %arg6: memref<16x8x128xf32, #tpu.memory_space<vmem>>, %arg7: memref<160x128xf32, #tpu.memory_space<vmem>>, %arg8: memref<160x128xf32, #tpu.memory_space<vmem>>) attributes {dimension_semantics = [#tpu.dimension_semantics<parallel>], iteration_bounds = array<i64: 2>, scalar_prefetch = 0 : i64, scratch_operands = 2 : i64, tpu.core_type = #tpu.core_type<tc>, window_params = [{transform_indices = @transform_0, window_bounds = array<i64: 16, 8, 128>}, {pipeline_mode = #tpu.pipeline_mode<synchronous>, transform_indices = @transform_1, window_bounds = array<i64: 3, 128, 128>}, {pipeline_mode = #tpu.pipeline_mode<synchronous>, transform_indices = @transform_2, window_bounds = array<i64: 1, 128>}, {pipeline_mode = #tpu.pipeline_mode<synchronous>, transform_indices = @transform_3, window_bounds = array<i64: 3, 128, 128>}, {pipeline_mode = #tpu.pipeline_mode<synchronous>, transform_indices = @transform_4, window_bounds = array<i64: 1, 128>}, {transform_indices = @transform_5, window_bounds = array<i64: 16, 8, 128>}]} {
    %cst = arith.constant 0.000000e+00 : f32
    %0 = vector.broadcast %cst : f32 to vector<1x128xf32>
    %cst_0 = arith.constant 0.000000e+00 : f32
    %1 = vector.broadcast %cst_0 : f32 to vector<2x128xf32>
    %c0 = arith.constant 0 : index
    %c0_1 = arith.constant 0 : index
    %2 = vector.load %arg7[%c0, %c0_1] : memref<160x128xf32, #tpu.memory_space<vmem>>, vector<1x128xf32>
    tpu.vector_store %arg7[%c0, %c0_1], %0 {strides = array<i32>} : memref<160x128xf32, #tpu.memory_space<vmem>>, vector<1x128xf32>,
    %c9 = arith.constant 9 : index
    %c0_2 = arith.constant 0 : index
    %3 = vector.load %arg7[%c9, %c0_2] : memref<160x128xf32, #tpu.memory_space<vmem>>, vector<2x128xf32>
    tpu.vector_store %arg7[%c9, %c0_2], %1 {strides = array<i32>} : memref<160x128xf32, #tpu.memory_space<vmem>>, vector<2x128xf32>,
    %c19 = arith.constant 19 : index
    %c0_3 = arith.constant 0 : index
    %4 = vector.load %arg7[%c19, %c0_3] : memref<160x128xf32, #tpu.memory_space<vmem>>, vector<2x128xf32>
    tpu.vector_store %arg7[%c19, %c0_3], %1 {strides = array<i32>} : memref<160x128xf32, #tpu.memory_space<vmem>>, vector<2x128xf32>,
    %c29 = arith.constant 29 : index
    %c0_4 = arith.constant 0 : index
    %5 = vector.load %arg7[%c29, %c0_4] : memref<160x128xf32, #tpu.memory_space<vmem>>, vector<2x128xf32>
    tpu.vector_store %arg7[%c29, %c0_4], %1 {strides = array<i32>} : memref<160x128xf32, #tpu.memory_space<vmem>>, vector<2x128xf32>,
    %c39 = arith.constant 39 : index
    %c0_5 = arith.constant 0 : index
    %6 = vector.load %arg7[%c39, %c0_5] : memref<160x128xf32, #tpu.memory_space<vmem>>, vector<2x128xf32>
    tpu.vector_store %arg7[%c39, %c0_5], %1 {strides = array<i32>} : memref<160x128xf32, #tpu.memory_space<vmem>>, vector<2x128xf32>,
    %c49 = arith.constant 49 : index
    %c0_6 = arith.constant 0 : index
    %7 = vector.load %arg7[%c49, %c0_6] : memref<160x128xf32, #tpu.memory_space<vmem>>, vector<2x128xf32>
    tpu.vector_store %arg7[%c49, %c0_6], %1 {strides = array<i32>} : memref<160x128xf32, #tpu.memory_space<vmem>>, vector<2x128xf32>,
    %c59 = arith.constant 59 : index
    %c0_7 = arith.constant 0 : index
    %8 = vector.load %arg7[%c59, %c0_7] : memref<160x128xf32, #tpu.memory_space<vmem>>, vector<2x128xf32>
    tpu.vector_store %arg7[%c59, %c0_7], %1 {strides = array<i32>} : memref<160x128xf32, #tpu.memory_space<vmem>>, vector<2x128xf32>,
    %c69 = arith.constant 69 : index
    %c0_8 = arith.constant 0 : index
    %9 = vector.load %arg7[%c69, %c0_8] : memref<160x128xf32, #tpu.memory_space<vmem>>, vector<2x128xf32>
    tpu.vector_store %arg7[%c69, %c0_8], %1 {strides = array<i32>} : memref<160x128xf32, #tpu.memory_space<vmem>>, vector<2x128xf32>,
    %c79 = arith.constant 79 : index
    %c0_9 = arith.constant 0 : index
    %10 = vector.load %arg7[%c79, %c0_9] : memref<160x128xf32, #tpu.memory_space<vmem>>, vector<2x128xf32>
    tpu.vector_store %arg7[%c79, %c0_9], %1 {strides = array<i32>} : memref<160x128xf32, #tpu.memory_space<vmem>>, vector<2x128xf32>,
    %c89 = arith.constant 89 : index
    %c0_10 = arith.constant 0 : index
    %11 = vector.load %arg7[%c89, %c0_10] : memref<160x128xf32, #tpu.memory_space<vmem>>, vector<2x128xf32>
    tpu.vector_store %arg7[%c89, %c0_10], %1 {strides = array<i32>} : memref<160x128xf32, #tpu.memory_space<vmem>>, vector<2x128xf32>,
    %c99 = arith.constant 99 : index
    %c0_11 = arith.constant 0 : index
    %12 = vector.load %arg7[%c99, %c0_11] : memref<160x128xf32, #tpu.memory_space<vmem>>, vector<2x128xf32>
    tpu.vector_store %arg7[%c99, %c0_11], %1 {strides = array<i32>} : memref<160x128xf32, #tpu.memory_space<vmem>>, vector<2x128xf32>,
    %c109 = arith.constant 109 : index
    %c0_12 = arith.constant 0 : index
    %13 = vector.load %arg7[%c109, %c0_12] : memref<160x128xf32, #tpu.memory_space<vmem>>, vector<2x128xf32>
    tpu.vector_store %arg7[%c109, %c0_12], %1 {strides = array<i32>} : memref<160x128xf32, #tpu.memory_space<vmem>>, vector<2x128xf32>,
    %c119 = arith.constant 119 : index
    %c0_13 = arith.constant 0 : index
    %14 = vector.load %arg7[%c119, %c0_13] : memref<160x128xf32, #tpu.memory_space<vmem>>, vector<2x128xf32>
    tpu.vector_store %arg7[%c119, %c0_13], %1 {strides = array<i32>} : memref<160x128xf32, #tpu.memory_space<vmem>>, vector<2x128xf32>,
    %c129 = arith.constant 129 : index
    %c0_14 = arith.constant 0 : index
    %15 = vector.load %arg7[%c129, %c0_14] : memref<160x128xf32, #tpu.memory_space<vmem>>, vector<2x128xf32>
    tpu.vector_store %arg7[%c129, %c0_14], %1 {strides = array<i32>} : memref<160x128xf32, #tpu.memory_space<vmem>>, vector<2x128xf32>,
    %c139 = arith.constant 139 : index
    %c0_15 = arith.constant 0 : index
    %16 = vector.load %arg7[%c139, %c0_15] : memref<160x128xf32, #tpu.memory_space<vmem>>, vector<2x128xf32>
    tpu.vector_store %arg7[%c139, %c0_15], %1 {strides = array<i32>} : memref<160x128xf32, #tpu.memory_space<vmem>>, vector<2x128xf32>,
    %c149 = arith.constant 149 : index
    %c0_16 = arith.constant 0 : index
    %17 = vector.load %arg7[%c149, %c0_16] : memref<160x128xf32, #tpu.memory_space<vmem>>, vector<2x128xf32>
    tpu.vector_store %arg7[%c149, %c0_16], %1 {strides = array<i32>} : memref<160x128xf32, #tpu.memory_space<vmem>>, vector<2x128xf32>,
    %c159 = arith.constant 159 : index
    %c0_17 = arith.constant 0 : index
    %18 = vector.load %arg7[%c159, %c0_17] : memref<160x128xf32, #tpu.memory_space<vmem>>, vector<1x128xf32>
    tpu.vector_store %arg7[%c159, %c0_17], %0 {strides = array<i32>} : memref<160x128xf32, #tpu.memory_space<vmem>>, vector<1x128xf32>,
    %c0_18 = arith.constant 0 : index
    %c0_19 = arith.constant 0 : index
    %19 = vector.load %arg8[%c0_18, %c0_19] : memref<160x128xf32, #tpu.memory_space<vmem>>, vector<1x128xf32>
    tpu.vector_store %arg8[%c0_18, %c0_19], %0 {strides = array<i32>} : memref<160x128xf32, #tpu.memory_space<vmem>>, vector<1x128xf32>,
    %c9_20 = arith.constant 9 : index
    %c0_21 = arith.constant 0 : index
    %20 = vector.load %arg8[%c9_20, %c0_21] : memref<160x128xf32, #tpu.memory_space<vmem>>, vector<2x128xf32>
    tpu.vector_store %arg8[%c9_20, %c0_21], %1 {strides = array<i32>} : memref<160x128xf32, #tpu.memory_space<vmem>>, vector<2x128xf32>,
    %c19_22 = arith.constant 19 : index
    %c0_23 = arith.constant 0 : index
    %21 = vector.load %arg8[%c19_22, %c0_23] : memref<160x128xf32, #tpu.memory_space<vmem>>, vector<2x128xf32>
    tpu.vector_store %arg8[%c19_22, %c0_23], %1 {strides = array<i32>} : memref<160x128xf32, #tpu.memory_space<vmem>>, vector<2x128xf32>,
    %c29_24 = arith.constant 29 : index
    %c0_25 = arith.constant 0 : index
    %22 = vector.load %arg8[%c29_24, %c0_25] : memref<160x128xf32, #tpu.memory_space<vmem>>, vector<2x128xf32>
    tpu.vector_store %arg8[%c29_24, %c0_25], %1 {strides = array<i32>} : memref<160x128xf32, #tpu.memory_space<vmem>>, vector<2x128xf32>,
    %c39_26 = arith.constant 39 : index
    %c0_27 = arith.constant 0 : index
    %23 = vector.load %arg8[%c39_26, %c0_27] : memref<160x128xf32, #tpu.memory_space<vmem>>, vector<2x128xf32>
    tpu.vector_store %arg8[%c39_26, %c0_27], %1 {strides = array<i32>} : memref<160x128xf32, #tpu.memory_space<vmem>>, vector<2x128xf32>,
    %c49_28 = arith.constant 49 : index
    %c0_29 = arith.constant 0 : index
    %24 = vector.load %arg8[%c49_28, %c0_29] : memref<160x128xf32, #tpu.memory_space<vmem>>, vector<2x128xf32>
    tpu.vector_store %arg8[%c49_28, %c0_29], %1 {strides = array<i32>} : memref<160x128xf32, #tpu.memory_space<vmem>>, vector<2x128xf32>,
    %c59_30 = arith.constant 59 : index
    %c0_31 = arith.constant 0 : index
    %25 = vector.load %arg8[%c59_30, %c0_31] : memref<160x128xf32, #tpu.memory_space<vmem>>, vector<2x128xf32>
    tpu.vector_store %arg8[%c59_30, %c0_31], %1 {strides = array<i32>} : memref<160x128xf32, #tpu.memory_space<vmem>>, vector<2x128xf32>,
    %c69_32 = arith.constant 69 : index
    %c0_33 = arith.constant 0 : index
    %26 = vector.load %arg8[%c69_32, %c0_33] : memref<160x128xf32, #tpu.memory_space<vmem>>, vector<2x128xf32>
    tpu.vector_store %arg8[%c69_32, %c0_33], %1 {strides = array<i32>} : memref<160x128xf32, #tpu.memory_space<vmem>>, vector<2x128xf32>,
    %c79_34 = arith.constant 79 : index
    %c0_35 = arith.constant 0 : index
    %27 = vector.load %arg8[%c79_34, %c0_35] : memref<160x128xf32, #tpu.memory_space<vmem>>, vector<2x128xf32>
    tpu.vector_store %arg8[%c79_34, %c0_35], %1 {strides = array<i32>} : memref<160x128xf32, #tpu.memory_space<vmem>>, vector<2x128xf32>,
    %c89_36 = arith.constant 89 : index
    %c0_37 = arith.constant 0 : index
    %28 = vector.load %arg8[%c89_36, %c0_37] : memref<160x128xf32, #tpu.memory_space<vmem>>, vector<2x128xf32>
    tpu.vector_store %arg8[%c89_36, %c0_37], %1 {strides = array<i32>} : memref<160x128xf32, #tpu.memory_space<vmem>>, vector<2x128xf32>,
    %c99_38 = arith.constant 99 : index
    %c0_39 = arith.constant 0 : index
    %29 = vector.load %arg8[%c99_38, %c0_39] : memref<160x128xf32, #tpu.memory_space<vmem>>, vector<2x128xf32>
    tpu.vector_store %arg8[%c99_38, %c0_39], %1 {strides = array<i32>} : memref<160x128xf32, #tpu.memory_space<vmem>>, vector<2x128xf32>,
    %c109_40 = arith.constant 109 : index
    %c0_41 = arith.constant 0 : index
    %30 = vector.load %arg8[%c109_40, %c0_41] : memref<160x128xf32, #tpu.memory_space<vmem>>, vector<2x128xf32>
    tpu.vector_store %arg8[%c109_40, %c0_41], %1 {strides = array<i32>} : memref<160x128xf32, #tpu.memory_space<vmem>>, vector<2x128xf32>,
    %c119_42 = arith.constant 119 : index
    %c0_43 = arith.constant 0 : index
    %31 = vector.load %arg8[%c119_42, %c0_43] : memref<160x128xf32, #tpu.memory_space<vmem>>, vector<2x128xf32>
    tpu.vector_store %arg8[%c119_42, %c0_43], %1 {strides = array<i32>} : memref<160x128xf32, #tpu.memory_space<vmem>>, vector<2x128xf32>,
    %c129_44 = arith.constant 129 : index
    %c0_45 = arith.constant 0 : index
    %32 = vector.load %arg8[%c129_44, %c0_45] : memref<160x128xf32, #tpu.memory_space<vmem>>, vector<2x128xf32>
    tpu.vector_store %arg8[%c129_44, %c0_45], %1 {strides = array<i32>} : memref<160x128xf32, #tpu.memory_space<vmem>>, vector<2x128xf32>,
    %c139_46 = arith.constant 139 : index
    %c0_47 = arith.constant 0 : index
    %33 = vector.load %arg8[%c139_46, %c0_47] : memref<160x128xf32, #tpu.memory_space<vmem>>, vector<2x128xf32>
    tpu.vector_store %arg8[%c139_46, %c0_47], %1 {strides = array<i32>} : memref<160x128xf32, #tpu.memory_space<vmem>>, vector<2x128xf32>,
    %c149_48 = arith.constant 149 : index
    %c0_49 = arith.constant 0 : index
    %34 = vector.load %arg8[%c149_48, %c0_49] : memref<160x128xf32, #tpu.memory_space<vmem>>, vector<2x128xf32>
    tpu.vector_store %arg8[%c149_48, %c0_49], %1 {strides = array<i32>} : memref<160x128xf32, #tpu.memory_space<vmem>>, vector<2x128xf32>,
    %c159_50 = arith.constant 159 : index
    %c0_51 = arith.constant 0 : index
    %35 = vector.load %arg8[%c159_50, %c0_51] : memref<160x128xf32, #tpu.memory_space<vmem>>, vector<1x128xf32>
    tpu.vector_store %arg8[%c159_50, %c0_51], %0 {strides = array<i32>} : memref<160x128xf32, #tpu.memory_space<vmem>>, vector<1x128xf32>,
    %c0_52 = arith.constant 0 : index
    %c0_53 = arith.constant 0 : index
    %c0_54 = arith.constant 0 : index
    %36 = vector.load %arg1[%c0_52, %c0_53, %c0_54] : memref<16x8x128xf32, #tpu.memory_space<vmem>>, vector<1x8x128xf32>
    %37 = vector.shape_cast %36 : vector<1x8x128xf32> to vector<8x128xf32>
    %c1 = arith.constant 1 : index
    %c0_55 = arith.constant 0 : index
    %38 = vector.load %arg7[%c1, %c0_55] : memref<160x128xf32, #tpu.memory_space<vmem>>, vector<8x128xf32>
    tpu.vector_store %arg7[%c1, %c0_55], %37 {strides = array<i32>} : memref<160x128xf32, #tpu.memory_space<vmem>>, vector<8x128xf32>,
    %c1_56 = arith.constant 1 : index
    %c0_57 = arith.constant 0 : index
    %c0_58 = arith.constant 0 : index
    %39 = vector.load %arg1[%c1_56, %c0_57, %c0_58] : memref<16x8x128xf32, #tpu.memory_space<vmem>>, vector<1x8x128xf32>
    %40 = vector.shape_cast %39 : vector<1x8x128xf32> to vector<8x128xf32>
    %c11 = arith.constant 11 : index
    %c0_59 = arith.constant 0 : index
    %41 = vector.load %arg7[%c11, %c0_59] : memref<160x128xf32, #tpu.memory_space<vmem>>, vector<8x128xf32>
    tpu.vector_store %arg7[%c11, %c0_59], %40 {strides = array<i32>} : memref<160x128xf32, #tpu.memory_space<vmem>>, vector<8x128xf32>,
    %c2 = arith.constant 2 : index
    %c0_60 = arith.constant 0 : index
    %c0_61 = arith.constant 0 : index
    %42 = vector.load %arg1[%c2, %c0_60, %c0_61] : memref<16x8x128xf32, #tpu.memory_space<vmem>>, vector<1x8x128xf32>
    %43 = vector.shape_cast %42 : vector<1x8x128xf32> to vector<8x128xf32>
    %c21 = arith.constant 21 : index
    %c0_62 = arith.constant 0 : index
    %44 = vector.load %arg7[%c21, %c0_62] : memref<160x128xf32, #tpu.memory_space<vmem>>, vector<8x128xf32>
    tpu.vector_store %arg7[%c21, %c0_62], %43 {strides = array<i32>} : memref<160x128xf32, #tpu.memory_space<vmem>>, vector<8x128xf32>,
    %c3 = arith.constant 3 : index
    %c0_63 = arith.constant 0 : index
    %c0_64 = arith.constant 0 : index
    %45 = vector.load %arg1[%c3, %c0_63, %c0_64] : memref<16x8x128xf32, #tpu.memory_space<vmem>>, vector<1x8x128xf32>
    %46 = vector.shape_cast %45 : vector<1x8x128xf32> to vector<8x128xf32>
    %c31 = arith.constant 31 : index
    %c0_65 = arith.constant 0 : index
    %47 = vector.load %arg7[%c31, %c0_65] : memref<160x128xf32, #tpu.memory_space<vmem>>, vector<8x128xf32>
    tpu.vector_store %arg7[%c31, %c0_65], %46 {strides = array<i32>} : memref<160x128xf32, #tpu.memory_space<vmem>>, vector<8x128xf32>,
    %c4 = arith.constant 4 : index
    %c0_66 = arith.constant 0 : index
    %c0_67 = arith.constant 0 : index
    %48 = vector.load %arg1[%c4, %c0_66, %c0_67] : memref<16x8x128xf32, #tpu.memory_space<vmem>>, vector<1x8x128xf32>
    %49 = vector.shape_cast %48 : vector<1x8x128xf32> to vector<8x128xf32>
    %c41 = arith.constant 41 : index
    %c0_68 = arith.constant 0 : index
    %50 = vector.load %arg7[%c41, %c0_68] : memref<160x128xf32, #tpu.memory_space<vmem>>, vector<8x128xf32>
    tpu.vector_store %arg7[%c41, %c0_68], %49 {strides = array<i32>} : memref<160x128xf32, #tpu.memory_space<vmem>>, vector<8x128xf32>,
    %c5 = arith.constant 5 : index
    %c0_69 = arith.constant 0 : index
    %c0_70 = arith.constant 0 : index
    %51 = vector.load %arg1[%c5, %c0_69, %c0_70] : memref<16x8x128xf32, #tpu.memory_space<vmem>>, vector<1x8x128xf32>
    %52 = vector.shape_cast %51 : vector<1x8x128xf32> to vector<8x128xf32>
    %c51 = arith.constant 51 : index
    %c0_71 = arith.constant 0 : index
    %53 = vector.load %arg7[%c51, %c0_71] : memref<160x128xf32, #tpu.memory_space<vmem>>, vector<8x128xf32>
    tpu.vector_store %arg7[%c51, %c0_71], %52 {strides = array<i32>} : memref<160x128xf32, #tpu.memory_space<vmem>>, vector<8x128xf32>,
    %c6 = arith.constant 6 : index
    %c0_72 = arith.constant 0 : index
    %c0_73 = arith.constant 0 : index
    %54 = vector.load %arg1[%c6, %c0_72, %c0_73] : memref<16x8x128xf32, #tpu.memory_space<vmem>>, vector<1x8x128xf32>
    %55 = vector.shape_cast %54 : vector<1x8x128xf32> to vector<8x128xf32>
    %c61 = arith.constant 61 : index
    %c0_74 = arith.constant 0 : index
    %56 = vector.load %arg7[%c61, %c0_74] : memref<160x128xf32, #tpu.memory_space<vmem>>, vector<8x128xf32>
    tpu.vector_store %arg7[%c61, %c0_74], %55 {strides = array<i32>} : memref<160x128xf32, #tpu.memory_space<vmem>>, vector<8x128xf32>,
    %c7 = arith.constant 7 : index
    %c0_75 = arith.constant 0 : index
    %c0_76 = arith.constant 0 : index
    %57 = vector.load %arg1[%c7, %c0_75, %c0_76] : memref<16x8x128xf32, #tpu.memory_space<vmem>>, vector<1x8x128xf32>
    %58 = vector.shape_cast %57 : vector<1x8x128xf32> to vector<8x128xf32>
    %c71 = arith.constant 71 : index
    %c0_77 = arith.constant 0 : index
    %59 = vector.load %arg7[%c71, %c0_77] : memref<160x128xf32, #tpu.memory_space<vmem>>, vector<8x128xf32>
    tpu.vector_store %arg7[%c71, %c0_77], %58 {strides = array<i32>} : memref<160x128xf32, #tpu.memory_space<vmem>>, vector<8x128xf32>,
    %c8 = arith.constant 8 : index
    %c0_78 = arith.constant 0 : index
    %c0_79 = arith.constant 0 : index
    %60 = vector.load %arg1[%c8, %c0_78, %c0_79] : memref<16x8x128xf32, #tpu.memory_space<vmem>>, vector<1x8x128xf32>
    %61 = vector.shape_cast %60 : vector<1x8x128xf32> to vector<8x128xf32>
    %c81 = arith.constant 81 : index
    %c0_80 = arith.constant 0 : index
    %62 = vector.load %arg7[%c81, %c0_80] : memref<160x128xf32, #tpu.memory_space<vmem>>, vector<8x128xf32>
    tpu.vector_store %arg7[%c81, %c0_80], %61 {strides = array<i32>} : memref<160x128xf32, #tpu.memory_space<vmem>>, vector<8x128xf32>,
    %c9_81 = arith.constant 9 : index
    %c0_82 = arith.constant 0 : index
    %c0_83 = arith.constant 0 : index
    %63 = vector.load %arg1[%c9_81, %c0_82, %c0_83] : memref<16x8x128xf32, #tpu.memory_space<vmem>>, vector<1x8x128xf32>
    %64 = vector.shape_cast %63 : vector<1x8x128xf32> to vector<8x128xf32>
    %c91 = arith.constant 91 : index
    %c0_84 = arith.constant 0 : index
    %65 = vector.load %arg7[%c91, %c0_84] : memref<160x128xf32, #tpu.memory_space<vmem>>, vector<8x128xf32>
    tpu.vector_store %arg7[%c91, %c0_84], %64 {strides = array<i32>} : memref<160x128xf32, #tpu.memory_space<vmem>>, vector<8x128xf32>,
    %c10 = arith.constant 10 : index
    %c0_85 = arith.constant 0 : index
    %c0_86 = arith.constant 0 : index
    %66 = vector.load %arg1[%c10, %c0_85, %c0_86] : memref<16x8x128xf32, #tpu.memory_space<vmem>>, vector<1x8x128xf32>
    %67 = vector.shape_cast %66 : vector<1x8x128xf32> to vector<8x128xf32>
    %c101 = arith.constant 101 : index
    %c0_87 = arith.constant 0 : index
    %68 = vector.load %arg7[%c101, %c0_87] : memref<160x128xf32, #tpu.memory_space<vmem>>, vector<8x128xf32>
    tpu.vector_store %arg7[%c101, %c0_87], %67 {strides = array<i32>} : memref<160x128xf32, #tpu.memory_space<vmem>>, vector<8x128xf32>,
    %c11_88 = arith.constant 11 : index
    %c0_89 = arith.constant 0 : index
    %c0_90 = arith.constant 0 : index
    %69 = vector.load %arg1[%c11_88, %c0_89, %c0_90] : memref<16x8x128xf32, #tpu.memory_space<vmem>>, vector<1x8x128xf32>
    %70 = vector.shape_cast %69 : vector<1x8x128xf32> to vector<8x128xf32>
    %c111 = arith.constant 111 : index
    %c0_91 = arith.constant 0 : index
    %71 = vector.load %arg7[%c111, %c0_91] : memref<160x128xf32, #tpu.memory_space<vmem>>, vector<8x128xf32>
    tpu.vector_store %arg7[%c111, %c0_91], %70 {strides = array<i32>} : memref<160x128xf32, #tpu.memory_space<vmem>>, vector<8x128xf32>,
    %c12 = arith.constant 12 : index
    %c0_92 = arith.constant 0 : index
    %c0_93 = arith.constant 0 : index
    %72 = vector.load %arg1[%c12, %c0_92, %c0_93] : memref<16x8x128xf32, #tpu.memory_space<vmem>>, vector<1x8x128xf32>
    %73 = vector.shape_cast %72 : vector<1x8x128xf32> to vector<8x128xf32>
    %c121 = arith.constant 121 : index
    %c0_94 = arith.constant 0 : index
    %74 = vector.load %arg7[%c121, %c0_94] : memref<160x128xf32, #tpu.memory_space<vmem>>, vector<8x128xf32>
    tpu.vector_store %arg7[%c121, %c0_94], %73 {strides = array<i32>} : memref<160x128xf32, #tpu.memory_space<vmem>>, vector<8x128xf32>,
    %c13 = arith.constant 13 : index
    %c0_95 = arith.constant 0 : index
    %c0_96 = arith.constant 0 : index
    %75 = vector.load %arg1[%c13, %c0_95, %c0_96] : memref<16x8x128xf32, #tpu.memory_space<vmem>>, vector<1x8x128xf32>
    %76 = vector.shape_cast %75 : vector<1x8x128xf32> to vector<8x128xf32>
    %c131 = arith.constant 131 : index
    %c0_97 = arith.constant 0 : index
    %77 = vector.load %arg7[%c131, %c0_97] : memref<160x128xf32, #tpu.memory_space<vmem>>, vector<8x128xf32>
    tpu.vector_store %arg7[%c131, %c0_97], %76 {strides = array<i32>} : memref<160x128xf32, #tpu.memory_space<vmem>>, vector<8x128xf32>,
    %c14 = arith.constant 14 : index
    %c0_98 = arith.constant 0 : index
    %c0_99 = arith.constant 0 : index
    %78 = vector.load %arg1[%c14, %c0_98, %c0_99] : memref<16x8x128xf32, #tpu.memory_space<vmem>>, vector<1x8x128xf32>
    %79 = vector.shape_cast %78 : vector<1x8x128xf32> to vector<8x128xf32>
    %c141 = arith.constant 141 : index
    %c0_100 = arith.constant 0 : index
    %80 = vector.load %arg7[%c141, %c0_100] : memref<160x128xf32, #tpu.memory_space<vmem>>, vector<8x128xf32>
    tpu.vector_store %arg7[%c141, %c0_100], %79 {strides = array<i32>} : memref<160x128xf32, #tpu.memory_space<vmem>>, vector<8x128xf32>,
    %c15 = arith.constant 15 : index
    %c0_101 = arith.constant 0 : index
    %c0_102 = arith.constant 0 : index
    %81 = vector.load %arg1[%c15, %c0_101, %c0_102] : memref<16x8x128xf32, #tpu.memory_space<vmem>>, vector<1x8x128xf32>
    %82 = vector.shape_cast %81 : vector<1x8x128xf32> to vector<8x128xf32>
    %c151 = arith.constant 151 : index
    %c0_103 = arith.constant 0 : index
    %83 = vector.load %arg7[%c151, %c0_103] : memref<160x128xf32, #tpu.memory_space<vmem>>, vector<8x128xf32>
    tpu.vector_store %arg7[%c151, %c0_103], %82 {strides = array<i32>} : memref<160x128xf32, #tpu.memory_space<vmem>>, vector<8x128xf32>,
    %c0_104 = arith.constant 0 : index
    %c0_105 = arith.constant 0 : index
    %84 = vector.load %arg7[%c0_104, %c0_105] : memref<160x128xf32, #tpu.memory_space<vmem>>, vector<158x128xf32>
    %c0_106 = arith.constant 0 : index
    %c0_107 = arith.constant 0 : index
    %c0_108 = arith.constant 0 : index
    %85 = vector.load %arg2[%c0_106, %c0_107, %c0_108] : memref<3x128x128xf32, #tpu.memory_space<vmem>>, vector<1x128x128xf32>
    %86 = vector.shape_cast %85 : vector<1x128x128xf32> to vector<128x128xf32>
    %cst_109 = arith.constant dense<0.000000e+00> : vector<158x128xf32>
    %87 = tpu.matmul %84, %86, %cst_109 {dimension_numbers = #tpu.dot_dimension_numbers<[1], [0], [0], [1], [0, 0, 1, 1], [], []>} : vector<158x128xf32>, vector<128x128xf32>, vector<158x128xf32> -> vector<158x128xf32>
    %c1_110 = arith.constant 1 : index
    %c0_111 = arith.constant 0 : index
    %88 = vector.load %arg7[%c1_110, %c0_111] : memref<160x128xf32, #tpu.memory_space<vmem>>, vector<158x128xf32>
    %c1_112 = arith.constant 1 : index
    %c0_113 = arith.constant 0 : index
    %c0_114 = arith.constant 0 : index
    %89 = vector.load %arg2[%c1_112, %c0_113, %c0_114] : memref<3x128x128xf32, #tpu.memory_space<vmem>>, vector<1x128x128xf32>
    %90 = vector.shape_cast %89 : vector<1x128x128xf32> to vector<128x128xf32>
    %cst_115 = arith.constant dense<0.000000e+00> : vector<158x128xf32>
    %91 = tpu.matmul %88, %90, %cst_115 {dimension_numbers = #tpu.dot_dimension_numbers<[1], [0], [0], [1], [0, 0, 1, 1], [], []>} : vector<158x128xf32>, vector<128x128xf32>, vector<158x128xf32> -> vector<158x128xf32>
    %92 = arith.addf %87, %91 : vector<158x128xf32>
    %c2_116 = arith.constant 2 : index
    %c0_117 = arith.constant 0 : index
    %93 = vector.load %arg7[%c2_116, %c0_117] : memref<160x128xf32, #tpu.memory_space<vmem>>, vector<158x128xf32>
    %c2_118 = arith.constant 2 : index
    %c0_119 = arith.constant 0 : index
    %c0_120 = arith.constant 0 : index
    %94 = vector.load %arg2[%c2_118, %c0_119, %c0_120] : memref<3x128x128xf32, #tpu.memory_space<vmem>>, vector<1x128x128xf32>
    %95 = vector.shape_cast %94 : vector<1x128x128xf32> to vector<128x128xf32>
    %cst_121 = arith.constant dense<0.000000e+00> : vector<158x128xf32>
    %96 = tpu.matmul %93, %95, %cst_121 {dimension_numbers = #tpu.dot_dimension_numbers<[1], [0], [0], [1], [0, 0, 1, 1], [], []>} : vector<158x128xf32>, vector<128x128xf32>, vector<158x128xf32> -> vector<158x128xf32>
    %97 = arith.addf %92, %96 : vector<158x128xf32>
    %c0_122 = arith.constant 0 : index
    %c0_123 = arith.constant 0 : index
    %98 = vector.load %arg3[%c0_122, %c0_123] : memref<1x128xf32, #tpu.memory_space<vmem>>, vector<1x128xf32>
    %99 = vector.extract_strided_slice %97 {offsets = [0, 0], sizes = [8, 128], strides = [1, 1]} : vector<158x128xf32> to vector<8x128xf32>
    %100 = vector.broadcast %98 : vector<1x128xf32> to vector<8x128xf32>
    %101 = arith.addf %99, %100 : vector<8x128xf32>
    %cst_124 = arith.constant 0.000000e+00 : f32
    %102 = vector.broadcast %cst_124 : f32 to vector<8x128xf32>
    %103 = arith.maximumf %101, %102 : vector<8x128xf32>
    %c1_125 = arith.constant 1 : index
    %c0_126 = arith.constant 0 : index
    %104 = vector.load %arg8[%c1_125, %c0_126] : memref<160x128xf32, #tpu.memory_space<vmem>>, vector<8x128xf32>
    tpu.vector_store %arg8[%c1_125, %c0_126], %103 {strides = array<i32>} : memref<160x128xf32, #tpu.memory_space<vmem>>, vector<8x128xf32>,
    %105 = vector.extract_strided_slice %97 {offsets = [10, 0], sizes = [8, 128], strides = [1, 1]} : vector<158x128xf32> to vector<8x128xf32>
    %106 = vector.broadcast %98 : vector<1x128xf32> to vector<8x128xf32>
    %107 = arith.addf %105, %106 : vector<8x128xf32>
    %cst_127 = arith.constant 0.000000e+00 : f32
    %108 = vector.broadcast %cst_127 : f32 to vector<8x128xf32>
    %109 = arith.maximumf %107, %108 : vector<8x128xf32>
    %c11_128 = arith.constant 11 : index
    %c0_129 = arith.constant 0 : index
    %110 = vector.load %arg8[%c11_128, %c0_129] : memref<160x128xf32, #tpu.memory_space<vmem>>, vector<8x128xf32>
    tpu.vector_store %arg8[%c11_128, %c0_129], %109 {strides = array<i32>} : memref<160x128xf32, #tpu.memory_space<vmem>>, vector<8x128xf32>,
    %111 = vector.extract_strided_slice %97 {offsets = [20, 0], sizes = [8, 128], strides = [1, 1]} : vector<158x128xf32> to vector<8x128xf32>
    %112 = vector.broadcast %98 : vector<1x128xf32> to vector<8x128xf32>
    %113 = arith.addf %111, %112 : vector<8x128xf32>
    %cst_130 = arith.constant 0.000000e+00 : f32
    %114 = vector.broadcast %cst_130 : f32 to vector<8x128xf32>
    %115 = arith.maximumf %113, %114 : vector<8x128xf32>
    %c21_131 = arith.constant 21 : index
    %c0_132 = arith.constant 0 : index
    %116 = vector.load %arg8[%c21_131, %c0_132] : memref<160x128xf32, #tpu.memory_space<vmem>>, vector<8x128xf32>
    tpu.vector_store %arg8[%c21_131, %c0_132], %115 {strides = array<i32>} : memref<160x128xf32, #tpu.memory_space<vmem>>, vector<8x128xf32>,
    %117 = vector.extract_strided_slice %97 {offsets = [30, 0], sizes = [8, 128], strides = [1, 1]} : vector<158x128xf32> to vector<8x128xf32>
    %118 = vector.broadcast %98 : vector<1x128xf32> to vector<8x128xf32>
    %119 = arith.addf %117, %118 : vector<8x128xf32>
    %cst_133 = arith.constant 0.000000e+00 : f32
    %120 = vector.broadcast %cst_133 : f32 to vector<8x128xf32>
    %121 = arith.maximumf %119, %120 : vector<8x128xf32>
    %c31_134 = arith.constant 31 : index
    %c0_135 = arith.constant 0 : index
    %122 = vector.load %arg8[%c31_134, %c0_135] : memref<160x128xf32, #tpu.memory_space<vmem>>, vector<8x128xf32>
    tpu.vector_store %arg8[%c31_134, %c0_135], %121 {strides = array<i32>} : memref<160x128xf32, #tpu.memory_space<vmem>>, vector<8x128xf32>,
    %123 = vector.extract_strided_slice %97 {offsets = [40, 0], sizes = [8, 128], strides = [1, 1]} : vector<158x128xf32> to vector<8x128xf32>
    %124 = vector.broadcast %98 : vector<1x128xf32> to vector<8x128xf32>
    %125 = arith.addf %123, %124 : vector<8x128xf32>
    %cst_136 = arith.constant 0.000000e+00 : f32
    %126 = vector.broadcast %cst_136 : f32 to vector<8x128xf32>
    %127 = arith.maximumf %125, %126 : vector<8x128xf32>
    %c41_137 = arith.constant 41 : index
    %c0_138 = arith.constant 0 : index
    %128 = vector.load %arg8[%c41_137, %c0_138] : memref<160x128xf32, #tpu.memory_space<vmem>>, vector<8x128xf32>
    tpu.vector_store %arg8[%c41_137, %c0_138], %127 {strides = array<i32>} : memref<160x128xf32, #tpu.memory_space<vmem>>, vector<8x128xf32>,
    %129 = vector.extract_strided_slice %97 {offsets = [50, 0], sizes = [8, 128], strides = [1, 1]} : vector<158x128xf32> to vector<8x128xf32>
    %130 = vector.broadcast %98 : vector<1x128xf32> to vector<8x128xf32>
    %131 = arith.addf %129, %130 : vector<8x128xf32>
    %cst_139 = arith.constant 0.000000e+00 : f32
    %132 = vector.broadcast %cst_139 : f32 to vector<8x128xf32>
    %133 = arith.maximumf %131, %132 : vector<8x128xf32>
    %c51_140 = arith.constant 51 : index
    %c0_141 = arith.constant 0 : index
    %134 = vector.load %arg8[%c51_140, %c0_141] : memref<160x128xf32, #tpu.memory_space<vmem>>, vector<8x128xf32>
    tpu.vector_store %arg8[%c51_140, %c0_141], %133 {strides = array<i32>} : memref<160x128xf32, #tpu.memory_space<vmem>>, vector<8x128xf32>,
    %135 = vector.extract_strided_slice %97 {offsets = [60, 0], sizes = [8, 128], strides = [1, 1]} : vector<158x128xf32> to vector<8x128xf32>
    %136 = vector.broadcast %98 : vector<1x128xf32> to vector<8x128xf32>
    %137 = arith.addf %135, %136 : vector<8x128xf32>
    %cst_142 = arith.constant 0.000000e+00 : f32
    %138 = vector.broadcast %cst_142 : f32 to vector<8x128xf32>
    %139 = arith.maximumf %137, %138 : vector<8x128xf32>
    %c61_143 = arith.constant 61 : index
    %c0_144 = arith.constant 0 : index
    %140 = vector.load %arg8[%c61_143, %c0_144] : memref<160x128xf32, #tpu.memory_space<vmem>>, vector<8x128xf32>
    tpu.vector_store %arg8[%c61_143, %c0_144], %139 {strides = array<i32>} : memref<160x128xf32, #tpu.memory_space<vmem>>, vector<8x128xf32>,
    %141 = vector.extract_strided_slice %97 {offsets = [70, 0], sizes = [8, 128], strides = [1, 1]} : vector<158x128xf32> to vector<8x128xf32>
    %142 = vector.broadcast %98 : vector<1x128xf32> to vector<8x128xf32>
    %143 = arith.addf %141, %142 : vector<8x128xf32>
    %cst_145 = arith.constant 0.000000e+00 : f32
    %144 = vector.broadcast %cst_145 : f32 to vector<8x128xf32>
    %145 = arith.maximumf %143, %144 : vector<8x128xf32>
    %c71_146 = arith.constant 71 : index
    %c0_147 = arith.constant 0 : index
    %146 = vector.load %arg8[%c71_146, %c0_147] : memref<160x128xf32, #tpu.memory_space<vmem>>, vector<8x128xf32>
    tpu.vector_store %arg8[%c71_146, %c0_147], %145 {strides = array<i32>} : memref<160x128xf32, #tpu.memory_space<vmem>>, vector<8x128xf32>,
    %147 = vector.extract_strided_slice %97 {offsets = [80, 0], sizes = [8, 128], strides = [1, 1]} : vector<158x128xf32> to vector<8x128xf32>
    %148 = vector.broadcast %98 : vector<1x128xf32> to vector<8x128xf32>
    %149 = arith.addf %147, %148 : vector<8x128xf32>
    %cst_148 = arith.constant 0.000000e+00 : f32
    %150 = vector.broadcast %cst_148 : f32 to vector<8x128xf32>
    %151 = arith.maximumf %149, %150 : vector<8x128xf32>
    %c81_149 = arith.constant 81 : index
    %c0_150 = arith.constant 0 : index
    %152 = vector.load %arg8[%c81_149, %c0_150] : memref<160x128xf32, #tpu.memory_space<vmem>>, vector<8x128xf32>
    tpu.vector_store %arg8[%c81_149, %c0_150], %151 {strides = array<i32>} : memref<160x128xf32, #tpu.memory_space<vmem>>, vector<8x128xf32>,
    %153 = vector.extract_strided_slice %97 {offsets = [90, 0], sizes = [8, 128], strides = [1, 1]} : vector<158x128xf32> to vector<8x128xf32>
    %154 = vector.broadcast %98 : vector<1x128xf32> to vector<8x128xf32>
    %155 = arith.addf %153, %154 : vector<8x128xf32>
    %cst_151 = arith.constant 0.000000e+00 : f32
    %156 = vector.broadcast %cst_151 : f32 to vector<8x128xf32>
    %157 = arith.maximumf %155, %156 : vector<8x128xf32>
    %c91_152 = arith.constant 91 : index
    %c0_153 = arith.constant 0 : index
    %158 = vector.load %arg8[%c91_152, %c0_153] : memref<160x128xf32, #tpu.memory_space<vmem>>, vector<8x128xf32>
    tpu.vector_store %arg8[%c91_152, %c0_153], %157 {strides = array<i32>} : memref<160x128xf32, #tpu.memory_space<vmem>>, vector<8x128xf32>,
    %159 = vector.extract_strided_slice %97 {offsets = [100, 0], sizes = [8, 128], strides = [1, 1]} : vector<158x128xf32> to vector<8x128xf32>
    %160 = vector.broadcast %98 : vector<1x128xf32> to vector<8x128xf32>
    %161 = arith.addf %159, %160 : vector<8x128xf32>
    %cst_154 = arith.constant 0.000000e+00 : f32
    %162 = vector.broadcast %cst_154 : f32 to vector<8x128xf32>
    %163 = arith.maximumf %161, %162 : vector<8x128xf32>
    %c101_155 = arith.constant 101 : index
    %c0_156 = arith.constant 0 : index
    %164 = vector.load %arg8[%c101_155, %c0_156] : memref<160x128xf32, #tpu.memory_space<vmem>>, vector<8x128xf32>
    tpu.vector_store %arg8[%c101_155, %c0_156], %163 {strides = array<i32>} : memref<160x128xf32, #tpu.memory_space<vmem>>, vector<8x128xf32>,
    %165 = vector.extract_strided_slice %97 {offsets = [110, 0], sizes = [8, 128], strides = [1, 1]} : vector<158x128xf32> to vector<8x128xf32>
    %166 = vector.broadcast %98 : vector<1x128xf32> to vector<8x128xf32>
    %167 = arith.addf %165, %166 : vector<8x128xf32>
    %cst_157 = arith.constant 0.000000e+00 : f32
    %168 = vector.broadcast %cst_157 : f32 to vector<8x128xf32>
    %169 = arith.maximumf %167, %168 : vector<8x128xf32>
    %c111_158 = arith.constant 111 : index
    %c0_159 = arith.constant 0 : index
    %170 = vector.load %arg8[%c111_158, %c0_159] : memref<160x128xf32, #tpu.memory_space<vmem>>, vector<8x128xf32>
    tpu.vector_store %arg8[%c111_158, %c0_159], %169 {strides = array<i32>} : memref<160x128xf32, #tpu.memory_space<vmem>>, vector<8x128xf32>,
    %171 = vector.extract_strided_slice %97 {offsets = [120, 0], sizes = [8, 128], strides = [1, 1]} : vector<158x128xf32> to vector<8x128xf32>
    %172 = vector.broadcast %98 : vector<1x128xf32> to vector<8x128xf32>
    %173 = arith.addf %171, %172 : vector<8x128xf32>
    %cst_160 = arith.constant 0.000000e+00 : f32
    %174 = vector.broadcast %cst_160 : f32 to vector<8x128xf32>
    %175 = arith.maximumf %173, %174 : vector<8x128xf32>
    %c121_161 = arith.constant 121 : index
    %c0_162 = arith.constant 0 : index
    %176 = vector.load %arg8[%c121_161, %c0_162] : memref<160x128xf32, #tpu.memory_space<vmem>>, vector<8x128xf32>
    tpu.vector_store %arg8[%c121_161, %c0_162], %175 {strides = array<i32>} : memref<160x128xf32, #tpu.memory_space<vmem>>, vector<8x128xf32>,
    %177 = vector.extract_strided_slice %97 {offsets = [130, 0], sizes = [8, 128], strides = [1, 1]} : vector<158x128xf32> to vector<8x128xf32>
    %178 = vector.broadcast %98 : vector<1x128xf32> to vector<8x128xf32>
    %179 = arith.addf %177, %178 : vector<8x128xf32>
    %cst_163 = arith.constant 0.000000e+00 : f32
    %180 = vector.broadcast %cst_163 : f32 to vector<8x128xf32>
    %181 = arith.maximumf %179, %180 : vector<8x128xf32>
    %c131_164 = arith.constant 131 : index
    %c0_165 = arith.constant 0 : index
    %182 = vector.load %arg8[%c131_164, %c0_165] : memref<160x128xf32, #tpu.memory_space<vmem>>, vector<8x128xf32>
    tpu.vector_store %arg8[%c131_164, %c0_165], %181 {strides = array<i32>} : memref<160x128xf32, #tpu.memory_space<vmem>>, vector<8x128xf32>,
    %183 = vector.extract_strided_slice %97 {offsets = [140, 0], sizes = [8, 128], strides = [1, 1]} : vector<158x128xf32> to vector<8x128xf32>
    %184 = vector.broadcast %98 : vector<1x128xf32> to vector<8x128xf32>
    %185 = arith.addf %183, %184 : vector<8x128xf32>
    %cst_166 = arith.constant 0.000000e+00 : f32
    %186 = vector.broadcast %cst_166 : f32 to vector<8x128xf32>
    %187 = arith.maximumf %185, %186 : vector<8x128xf32>
    %c141_167 = arith.constant 141 : index
    %c0_168 = arith.constant 0 : index
    %188 = vector.load %arg8[%c141_167, %c0_168] : memref<160x128xf32, #tpu.memory_space<vmem>>, vector<8x128xf32>
    tpu.vector_store %arg8[%c141_167, %c0_168], %187 {strides = array<i32>} : memref<160x128xf32, #tpu.memory_space<vmem>>, vector<8x128xf32>,
    %189 = vector.extract_strided_slice %97 {offsets = [150, 0], sizes = [8, 128], strides = [1, 1]} : vector<158x128xf32> to vector<8x128xf32>
    %190 = vector.broadcast %98 : vector<1x128xf32> to vector<8x128xf32>
    %191 = arith.addf %189, %190 : vector<8x128xf32>
    %cst_169 = arith.constant 0.000000e+00 : f32
    %192 = vector.broadcast %cst_169 : f32 to vector<8x128xf32>
    %193 = arith.maximumf %191, %192 : vector<8x128xf32>
    %c151_170 = arith.constant 151 : index
    %c0_171 = arith.constant 0 : index
    %194 = vector.load %arg8[%c151_170, %c0_171] : memref<160x128xf32, #tpu.memory_space<vmem>>, vector<8x128xf32>
    tpu.vector_store %arg8[%c151_170, %c0_171], %193 {strides = array<i32>} : memref<160x128xf32, #tpu.memory_space<vmem>>, vector<8x128xf32>,
    %c0_172 = arith.constant 0 : index
    %c0_173 = arith.constant 0 : index
    %195 = vector.load %arg8[%c0_172, %c0_173] : memref<160x128xf32, #tpu.memory_space<vmem>>, vector<158x128xf32>
    %c0_174 = arith.constant 0 : index
    %c0_175 = arith.constant 0 : index
    %c0_176 = arith.constant 0 : index
    %196 = vector.load %arg4[%c0_174, %c0_175, %c0_176] : memref<3x128x128xf32, #tpu.memory_space<vmem>>, vector<1x128x128xf32>
    %197 = vector.shape_cast %196 : vector<1x128x128xf32> to vector<128x128xf32>
    %cst_177 = arith.constant dense<0.000000e+00> : vector<158x128xf32>
    %198 = tpu.matmul %195, %197, %cst_177 {dimension_numbers = #tpu.dot_dimension_numbers<[1], [0], [0], [1], [0, 0, 1, 1], [], []>} : vector<158x128xf32>, vector<128x128xf32>, vector<158x128xf32> -> vector<158x128xf32>
    %c1_178 = arith.constant 1 : index
    %c0_179 = arith.constant 0 : index
    %199 = vector.load %arg8[%c1_178, %c0_179] : memref<160x128xf32, #tpu.memory_space<vmem>>, vector<158x128xf32>
    %c1_180 = arith.constant 1 : index
    %c0_181 = arith.constant 0 : index
    %c0_182 = arith.constant 0 : index
    %200 = vector.load %arg4[%c1_180, %c0_181, %c0_182] : memref<3x128x128xf32, #tpu.memory_space<vmem>>, vector<1x128x128xf32>
    %201 = vector.shape_cast %200 : vector<1x128x128xf32> to vector<128x128xf32>
    %cst_183 = arith.constant dense<0.000000e+00> : vector<158x128xf32>
    %202 = tpu.matmul %199, %201, %cst_183 {dimension_numbers = #tpu.dot_dimension_numbers<[1], [0], [0], [1], [0, 0, 1, 1], [], []>} : vector<158x128xf32>, vector<128x128xf32>, vector<158x128xf32> -> vector<158x128xf32>
    %203 = arith.addf %198, %202 : vector<158x128xf32>
    %c2_184 = arith.constant 2 : index
    %c0_185 = arith.constant 0 : index
    %204 = vector.load %arg8[%c2_184, %c0_185] : memref<160x128xf32, #tpu.memory_space<vmem>>, vector<158x128xf32>
    %c2_186 = arith.constant 2 : index
    %c0_187 = arith.constant 0 : index
    %c0_188 = arith.constant 0 : index
    %205 = vector.load %arg4[%c2_186, %c0_187, %c0_188] : memref<3x128x128xf32, #tpu.memory_space<vmem>>, vector<1x128x128xf32>
    %206 = vector.shape_cast %205 : vector<1x128x128xf32> to vector<128x128xf32>
    %cst_189 = arith.constant dense<0.000000e+00> : vector<158x128xf32>
    %207 = tpu.matmul %204, %206, %cst_189 {dimension_numbers = #tpu.dot_dimension_numbers<[1], [0], [0], [1], [0, 0, 1, 1], [], []>} : vector<158x128xf32>, vector<128x128xf32>, vector<158x128xf32> -> vector<158x128xf32>
    %208 = arith.addf %203, %207 : vector<158x128xf32>
    %c0_190 = arith.constant 0 : index
    %c0_191 = arith.constant 0 : index
    %209 = vector.load %arg5[%c0_190, %c0_191] : memref<1x128xf32, #tpu.memory_space<vmem>>, vector<1x128xf32>
    %210 = vector.extract_strided_slice %208 {offsets = [0, 0], sizes = [8, 128], strides = [1, 1]} : vector<158x128xf32> to vector<8x128xf32>
    %211 = vector.broadcast %209 : vector<1x128xf32> to vector<8x128xf32>
    %212 = arith.addf %210, %211 : vector<8x128xf32>
    %c0_192 = arith.constant 0 : index
    %c0_193 = arith.constant 0 : index
    %c0_194 = arith.constant 0 : index
    %213 = vector.load %arg1[%c0_192, %c0_193, %c0_194] : memref<16x8x128xf32, #tpu.memory_space<vmem>>, vector<1x8x128xf32>
    %214 = vector.shape_cast %213 : vector<1x8x128xf32> to vector<8x128xf32>
    %215 = arith.addf %212, %214 : vector<8x128xf32>
    %cst_195 = arith.constant 0.000000e+00 : f32
    %216 = vector.broadcast %cst_195 : f32 to vector<8x128xf32>
    %217 = arith.maximumf %215, %216 : vector<8x128xf32>
    %c0_196 = arith.constant 0 : index
    %c0_197 = arith.constant 0 : index
    %c0_198 = arith.constant 0 : index
    %218 = vector.load %arg6[%c0_196, %c0_197, %c0_198] : memref<16x8x128xf32, #tpu.memory_space<vmem>>, vector<1x8x128xf32>
    %219 = vector.shape_cast %218 : vector<1x8x128xf32> to vector<8x128xf32>
    %220 = vector.shape_cast %217 : vector<8x128xf32> to vector<1x8x128xf32>
    tpu.vector_store %arg6[%c0_196, %c0_197, %c0_198], %220 {strides = array<i32>} : memref<16x8x128xf32, #tpu.memory_space<vmem>>, vector<1x8x128xf32>,
    %221 = vector.extract_strided_slice %208 {offsets = [10, 0], sizes = [8, 128], strides = [1, 1]} : vector<158x128xf32> to vector<8x128xf32>
    %222 = vector.broadcast %209 : vector<1x128xf32> to vector<8x128xf32>
    %223 = arith.addf %221, %222 : vector<8x128xf32>
    %c1_199 = arith.constant 1 : index
    %c0_200 = arith.constant 0 : index
    %c0_201 = arith.constant 0 : index
    %224 = vector.load %arg1[%c1_199, %c0_200, %c0_201] : memref<16x8x128xf32, #tpu.memory_space<vmem>>, vector<1x8x128xf32>
    %225 = vector.shape_cast %224 : vector<1x8x128xf32> to vector<8x128xf32>
    %226 = arith.addf %223, %225 : vector<8x128xf32>
    %cst_202 = arith.constant 0.000000e+00 : f32
    %227 = vector.broadcast %cst_202 : f32 to vector<8x128xf32>
    %228 = arith.maximumf %226, %227 : vector<8x128xf32>
    %c1_203 = arith.constant 1 : index
    %c0_204 = arith.constant 0 : index
    %c0_205 = arith.constant 0 : index
    %229 = vector.load %arg6[%c1_203, %c0_204, %c0_205] : memref<16x8x128xf32, #tpu.memory_space<vmem>>, vector<1x8x128xf32>
    %230 = vector.shape_cast %229 : vector<1x8x128xf32> to vector<8x128xf32>
    %231 = vector.shape_cast %228 : vector<8x128xf32> to vector<1x8x128xf32>
    tpu.vector_store %arg6[%c1_203, %c0_204, %c0_205], %231 {strides = array<i32>} : memref<16x8x128xf32, #tpu.memory_space<vmem>>, vector<1x8x128xf32>,
    %232 = vector.extract_strided_slice %208 {offsets = [20, 0], sizes = [8, 128], strides = [1, 1]} : vector<158x128xf32> to vector<8x128xf32>
    %233 = vector.broadcast %209 : vector<1x128xf32> to vector<8x128xf32>
    %234 = arith.addf %232, %233 : vector<8x128xf32>
    %c2_206 = arith.constant 2 : index
    %c0_207 = arith.constant 0 : index
    %c0_208 = arith.constant 0 : index
    %235 = vector.load %arg1[%c2_206, %c0_207, %c0_208] : memref<16x8x128xf32, #tpu.memory_space<vmem>>, vector<1x8x128xf32>
    %236 = vector.shape_cast %235 : vector<1x8x128xf32> to vector<8x128xf32>
    %237 = arith.addf %234, %236 : vector<8x128xf32>
    %cst_209 = arith.constant 0.000000e+00 : f32
    %238 = vector.broadcast %cst_209 : f32 to vector<8x128xf32>
    %239 = arith.maximumf %237, %238 : vector<8x128xf32>
    %c2_210 = arith.constant 2 : index
    %c0_211 = arith.constant 0 : index
    %c0_212 = arith.constant 0 : index
    %240 = vector.load %arg6[%c2_210, %c0_211, %c0_212] : memref<16x8x128xf32, #tpu.memory_space<vmem>>, vector<1x8x128xf32>
    %241 = vector.shape_cast %240 : vector<1x8x128xf32> to vector<8x128xf32>
    %242 = vector.shape_cast %239 : vector<8x128xf32> to vector<1x8x128xf32>
    tpu.vector_store %arg6[%c2_210, %c0_211, %c0_212], %242 {strides = array<i32>} : memref<16x8x128xf32, #tpu.memory_space<vmem>>, vector<1x8x128xf32>,
    %243 = vector.extract_strided_slice %208 {offsets = [30, 0], sizes = [8, 128], strides = [1, 1]} : vector<158x128xf32> to vector<8x128xf32>
    %244 = vector.broadcast %209 : vector<1x128xf32> to vector<8x128xf32>
    %245 = arith.addf %243, %244 : vector<8x128xf32>
    %c3_213 = arith.constant 3 : index
    %c0_214 = arith.constant 0 : index
    %c0_215 = arith.constant 0 : index
    %246 = vector.load %arg1[%c3_213, %c0_214, %c0_215] : memref<16x8x128xf32, #tpu.memory_space<vmem>>, vector<1x8x128xf32>
    %247 = vector.shape_cast %246 : vector<1x8x128xf32> to vector<8x128xf32>
    %248 = arith.addf %245, %247 : vector<8x128xf32>
    %cst_216 = arith.constant 0.000000e+00 : f32
    %249 = vector.broadcast %cst_216 : f32 to vector<8x128xf32>
    %250 = arith.maximumf %248, %249 : vector<8x128xf32>
    %c3_217 = arith.constant 3 : index
    %c0_218 = arith.constant 0 : index
    %c0_219 = arith.constant 0 : index
    %251 = vector.load %arg6[%c3_217, %c0_218, %c0_219] : memref<16x8x128xf32, #tpu.memory_space<vmem>>, vector<1x8x128xf32>
    %252 = vector.shape_cast %251 : vector<1x8x128xf32> to vector<8x128xf32>
    %253 = vector.shape_cast %250 : vector<8x128xf32> to vector<1x8x128xf32>
    tpu.vector_store %arg6[%c3_217, %c0_218, %c0_219], %253 {strides = array<i32>} : memref<16x8x128xf32, #tpu.memory_space<vmem>>, vector<1x8x128xf32>,
    %254 = vector.extract_strided_slice %208 {offsets = [40, 0], sizes = [8, 128], strides = [1, 1]} : vector<158x128xf32> to vector<8x128xf32>
    %255 = vector.broadcast %209 : vector<1x128xf32> to vector<8x128xf32>
    %256 = arith.addf %254, %255 : vector<8x128xf32>
    %c4_220 = arith.constant 4 : index
    %c0_221 = arith.constant 0 : index
    %c0_222 = arith.constant 0 : index
    %257 = vector.load %arg1[%c4_220, %c0_221, %c0_222] : memref<16x8x128xf32, #tpu.memory_space<vmem>>, vector<1x8x128xf32>
    %258 = vector.shape_cast %257 : vector<1x8x128xf32> to vector<8x128xf32>
    %259 = arith.addf %256, %258 : vector<8x128xf32>
    %cst_223 = arith.constant 0.000000e+00 : f32
    %260 = vector.broadcast %cst_223 : f32 to vector<8x128xf32>
    %261 = arith.maximumf %259, %260 : vector<8x128xf32>
    %c4_224 = arith.constant 4 : index
    %c0_225 = arith.constant 0 : index
    %c0_226 = arith.constant 0 : index
    %262 = vector.load %arg6[%c4_224, %c0_225, %c0_226] : memref<16x8x128xf32, #tpu.memory_space<vmem>>, vector<1x8x128xf32>
    %263 = vector.shape_cast %262 : vector<1x8x128xf32> to vector<8x128xf32>
    %264 = vector.shape_cast %261 : vector<8x128xf32> to vector<1x8x128xf32>
    tpu.vector_store %arg6[%c4_224, %c0_225, %c0_226], %264 {strides = array<i32>} : memref<16x8x128xf32, #tpu.memory_space<vmem>>, vector<1x8x128xf32>,
    %265 = vector.extract_strided_slice %208 {offsets = [50, 0], sizes = [8, 128], strides = [1, 1]} : vector<158x128xf32> to vector<8x128xf32>
    %266 = vector.broadcast %209 : vector<1x128xf32> to vector<8x128xf32>
    %267 = arith.addf %265, %266 : vector<8x128xf32>
    %c5_227 = arith.constant 5 : index
    %c0_228 = arith.constant 0 : index
    %c0_229 = arith.constant 0 : index
    %268 = vector.load %arg1[%c5_227, %c0_228, %c0_229] : memref<16x8x128xf32, #tpu.memory_space<vmem>>, vector<1x8x128xf32>
    %269 = vector.shape_cast %268 : vector<1x8x128xf32> to vector<8x128xf32>
    %270 = arith.addf %267, %269 : vector<8x128xf32>
    %cst_230 = arith.constant 0.000000e+00 : f32
    %271 = vector.broadcast %cst_230 : f32 to vector<8x128xf32>
    %272 = arith.maximumf %270, %271 : vector<8x128xf32>
    %c5_231 = arith.constant 5 : index
    %c0_232 = arith.constant 0 : index
    %c0_233 = arith.constant 0 : index
    %273 = vector.load %arg6[%c5_231, %c0_232, %c0_233] : memref<16x8x128xf32, #tpu.memory_space<vmem>>, vector<1x8x128xf32>
    %274 = vector.shape_cast %273 : vector<1x8x128xf32> to vector<8x128xf32>
    %275 = vector.shape_cast %272 : vector<8x128xf32> to vector<1x8x128xf32>
    tpu.vector_store %arg6[%c5_231, %c0_232, %c0_233], %275 {strides = array<i32>} : memref<16x8x128xf32, #tpu.memory_space<vmem>>, vector<1x8x128xf32>,
    %276 = vector.extract_strided_slice %208 {offsets = [60, 0], sizes = [8, 128], strides = [1, 1]} : vector<158x128xf32> to vector<8x128xf32>
    %277 = vector.broadcast %209 : vector<1x128xf32> to vector<8x128xf32>
    %278 = arith.addf %276, %277 : vector<8x128xf32>
    %c6_234 = arith.constant 6 : index
    %c0_235 = arith.constant 0 : index
    %c0_236 = arith.constant 0 : index
    %279 = vector.load %arg1[%c6_234, %c0_235, %c0_236] : memref<16x8x128xf32, #tpu.memory_space<vmem>>, vector<1x8x128xf32>
    %280 = vector.shape_cast %279 : vector<1x8x128xf32> to vector<8x128xf32>
    %281 = arith.addf %278, %280 : vector<8x128xf32>
    %cst_237 = arith.constant 0.000000e+00 : f32
    %282 = vector.broadcast %cst_237 : f32 to vector<8x128xf32>
    %283 = arith.maximumf %281, %282 : vector<8x128xf32>
    %c6_238 = arith.constant 6 : index
    %c0_239 = arith.constant 0 : index
    %c0_240 = arith.constant 0 : index
    %284 = vector.load %arg6[%c6_238, %c0_239, %c0_240] : memref<16x8x128xf32, #tpu.memory_space<vmem>>, vector<1x8x128xf32>
    %285 = vector.shape_cast %284 : vector<1x8x128xf32> to vector<8x128xf32>
    %286 = vector.shape_cast %283 : vector<8x128xf32> to vector<1x8x128xf32>
    tpu.vector_store %arg6[%c6_238, %c0_239, %c0_240], %286 {strides = array<i32>} : memref<16x8x128xf32, #tpu.memory_space<vmem>>, vector<1x8x128xf32>,
    %287 = vector.extract_strided_slice %208 {offsets = [70, 0], sizes = [8, 128], strides = [1, 1]} : vector<158x128xf32> to vector<8x128xf32>
    %288 = vector.broadcast %209 : vector<1x128xf32> to vector<8x128xf32>
    %289 = arith.addf %287, %288 : vector<8x128xf32>
    %c7_241 = arith.constant 7 : index
    %c0_242 = arith.constant 0 : index
    %c0_243 = arith.constant 0 : index
    %290 = vector.load %arg1[%c7_241, %c0_242, %c0_243] : memref<16x8x128xf32, #tpu.memory_space<vmem>>, vector<1x8x128xf32>
    %291 = vector.shape_cast %290 : vector<1x8x128xf32> to vector<8x128xf32>
    %292 = arith.addf %289, %291 : vector<8x128xf32>
    %cst_244 = arith.constant 0.000000e+00 : f32
    %293 = vector.broadcast %cst_244 : f32 to vector<8x128xf32>
    %294 = arith.maximumf %292, %293 : vector<8x128xf32>
    %c7_245 = arith.constant 7 : index
    %c0_246 = arith.constant 0 : index
    %c0_247 = arith.constant 0 : index
    %295 = vector.load %arg6[%c7_245, %c0_246, %c0_247] : memref<16x8x128xf32, #tpu.memory_space<vmem>>, vector<1x8x128xf32>
    %296 = vector.shape_cast %295 : vector<1x8x128xf32> to vector<8x128xf32>
    %297 = vector.shape_cast %294 : vector<8x128xf32> to vector<1x8x128xf32>
    tpu.vector_store %arg6[%c7_245, %c0_246, %c0_247], %297 {strides = array<i32>} : memref<16x8x128xf32, #tpu.memory_space<vmem>>, vector<1x8x128xf32>,
    %298 = vector.extract_strided_slice %208 {offsets = [80, 0], sizes = [8, 128], strides = [1, 1]} : vector<158x128xf32> to vector<8x128xf32>
    %299 = vector.broadcast %209 : vector<1x128xf32> to vector<8x128xf32>
    %300 = arith.addf %298, %299 : vector<8x128xf32>
    %c8_248 = arith.constant 8 : index
    %c0_249 = arith.constant 0 : index
    %c0_250 = arith.constant 0 : index
    %301 = vector.load %arg1[%c8_248, %c0_249, %c0_250] : memref<16x8x128xf32, #tpu.memory_space<vmem>>, vector<1x8x128xf32>
    %302 = vector.shape_cast %301 : vector<1x8x128xf32> to vector<8x128xf32>
    %303 = arith.addf %300, %302 : vector<8x128xf32>
    %cst_251 = arith.constant 0.000000e+00 : f32
    %304 = vector.broadcast %cst_251 : f32 to vector<8x128xf32>
    %305 = arith.maximumf %303, %304 : vector<8x128xf32>
    %c8_252 = arith.constant 8 : index
    %c0_253 = arith.constant 0 : index
    %c0_254 = arith.constant 0 : index
    %306 = vector.load %arg6[%c8_252, %c0_253, %c0_254] : memref<16x8x128xf32, #tpu.memory_space<vmem>>, vector<1x8x128xf32>
    %307 = vector.shape_cast %306 : vector<1x8x128xf32> to vector<8x128xf32>
    %308 = vector.shape_cast %305 : vector<8x128xf32> to vector<1x8x128xf32>
    tpu.vector_store %arg6[%c8_252, %c0_253, %c0_254], %308 {strides = array<i32>} : memref<16x8x128xf32, #tpu.memory_space<vmem>>, vector<1x8x128xf32>,
    %309 = vector.extract_strided_slice %208 {offsets = [90, 0], sizes = [8, 128], strides = [1, 1]} : vector<158x128xf32> to vector<8x128xf32>
    %310 = vector.broadcast %209 : vector<1x128xf32> to vector<8x128xf32>
    %311 = arith.addf %309, %310 : vector<8x128xf32>
    %c9_255 = arith.constant 9 : index
    %c0_256 = arith.constant 0 : index
    %c0_257 = arith.constant 0 : index
    %312 = vector.load %arg1[%c9_255, %c0_256, %c0_257] : memref<16x8x128xf32, #tpu.memory_space<vmem>>, vector<1x8x128xf32>
    %313 = vector.shape_cast %312 : vector<1x8x128xf32> to vector<8x128xf32>
    %314 = arith.addf %311, %313 : vector<8x128xf32>
    %cst_258 = arith.constant 0.000000e+00 : f32
    %315 = vector.broadcast %cst_258 : f32 to vector<8x128xf32>
    %316 = arith.maximumf %314, %315 : vector<8x128xf32>
    %c9_259 = arith.constant 9 : index
    %c0_260 = arith.constant 0 : index
    %c0_261 = arith.constant 0 : index
    %317 = vector.load %arg6[%c9_259, %c0_260, %c0_261] : memref<16x8x128xf32, #tpu.memory_space<vmem>>, vector<1x8x128xf32>
    %318 = vector.shape_cast %317 : vector<1x8x128xf32> to vector<8x128xf32>
    %319 = vector.shape_cast %316 : vector<8x128xf32> to vector<1x8x128xf32>
    tpu.vector_store %arg6[%c9_259, %c0_260, %c0_261], %319 {strides = array<i32>} : memref<16x8x128xf32, #tpu.memory_space<vmem>>, vector<1x8x128xf32>,
    %320 = vector.extract_strided_slice %208 {offsets = [100, 0], sizes = [8, 128], strides = [1, 1]} : vector<158x128xf32> to vector<8x128xf32>
    %321 = vector.broadcast %209 : vector<1x128xf32> to vector<8x128xf32>
    %322 = arith.addf %320, %321 : vector<8x128xf32>
    %c10_262 = arith.constant 10 : index
    %c0_263 = arith.constant 0 : index
    %c0_264 = arith.constant 0 : index
    %323 = vector.load %arg1[%c10_262, %c0_263, %c0_264] : memref<16x8x128xf32, #tpu.memory_space<vmem>>, vector<1x8x128xf32>
    %324 = vector.shape_cast %323 : vector<1x8x128xf32> to vector<8x128xf32>
    %325 = arith.addf %322, %324 : vector<8x128xf32>
    %cst_265 = arith.constant 0.000000e+00 : f32
    %326 = vector.broadcast %cst_265 : f32 to vector<8x128xf32>
    %327 = arith.maximumf %325, %326 : vector<8x128xf32>
    %c10_266 = arith.constant 10 : index
    %c0_267 = arith.constant 0 : index
    %c0_268 = arith.constant 0 : index
    %328 = vector.load %arg6[%c10_266, %c0_267, %c0_268] : memref<16x8x128xf32, #tpu.memory_space<vmem>>, vector<1x8x128xf32>
    %329 = vector.shape_cast %328 : vector<1x8x128xf32> to vector<8x128xf32>
    %330 = vector.shape_cast %327 : vector<8x128xf32> to vector<1x8x128xf32>
    tpu.vector_store %arg6[%c10_266, %c0_267, %c0_268], %330 {strides = array<i32>} : memref<16x8x128xf32, #tpu.memory_space<vmem>>, vector<1x8x128xf32>,
    %331 = vector.extract_strided_slice %208 {offsets = [110, 0], sizes = [8, 128], strides = [1, 1]} : vector<158x128xf32> to vector<8x128xf32>
    %332 = vector.broadcast %209 : vector<1x128xf32> to vector<8x128xf32>
    %333 = arith.addf %331, %332 : vector<8x128xf32>
    %c11_269 = arith.constant 11 : index
    %c0_270 = arith.constant 0 : index
    %c0_271 = arith.constant 0 : index
    %334 = vector.load %arg1[%c11_269, %c0_270, %c0_271] : memref<16x8x128xf32, #tpu.memory_space<vmem>>, vector<1x8x128xf32>
    %335 = vector.shape_cast %334 : vector<1x8x128xf32> to vector<8x128xf32>
    %336 = arith.addf %333, %335 : vector<8x128xf32>
    %cst_272 = arith.constant 0.000000e+00 : f32
    %337 = vector.broadcast %cst_272 : f32 to vector<8x128xf32>
    %338 = arith.maximumf %336, %337 : vector<8x128xf32>
    %c11_273 = arith.constant 11 : index
    %c0_274 = arith.constant 0 : index
    %c0_275 = arith.constant 0 : index
    %339 = vector.load %arg6[%c11_273, %c0_274, %c0_275] : memref<16x8x128xf32, #tpu.memory_space<vmem>>, vector<1x8x128xf32>
    %340 = vector.shape_cast %339 : vector<1x8x128xf32> to vector<8x128xf32>
    %341 = vector.shape_cast %338 : vector<8x128xf32> to vector<1x8x128xf32>
    tpu.vector_store %arg6[%c11_273, %c0_274, %c0_275], %341 {strides = array<i32>} : memref<16x8x128xf32, #tpu.memory_space<vmem>>, vector<1x8x128xf32>,
    %342 = vector.extract_strided_slice %208 {offsets = [120, 0], sizes = [8, 128], strides = [1, 1]} : vector<158x128xf32> to vector<8x128xf32>
    %343 = vector.broadcast %209 : vector<1x128xf32> to vector<8x128xf32>
    %344 = arith.addf %342, %343 : vector<8x128xf32>
    %c12_276 = arith.constant 12 : index
    %c0_277 = arith.constant 0 : index
    %c0_278 = arith.constant 0 : index
    %345 = vector.load %arg1[%c12_276, %c0_277, %c0_278] : memref<16x8x128xf32, #tpu.memory_space<vmem>>, vector<1x8x128xf32>
    %346 = vector.shape_cast %345 : vector<1x8x128xf32> to vector<8x128xf32>
    %347 = arith.addf %344, %346 : vector<8x128xf32>
    %cst_279 = arith.constant 0.000000e+00 : f32
    %348 = vector.broadcast %cst_279 : f32 to vector<8x128xf32>
    %349 = arith.maximumf %347, %348 : vector<8x128xf32>
    %c12_280 = arith.constant 12 : index
    %c0_281 = arith.constant 0 : index
    %c0_282 = arith.constant 0 : index
    %350 = vector.load %arg6[%c12_280, %c0_281, %c0_282] : memref<16x8x128xf32, #tpu.memory_space<vmem>>, vector<1x8x128xf32>
    %351 = vector.shape_cast %350 : vector<1x8x128xf32> to vector<8x128xf32>
    %352 = vector.shape_cast %349 : vector<8x128xf32> to vector<1x8x128xf32>
    tpu.vector_store %arg6[%c12_280, %c0_281, %c0_282], %352 {strides = array<i32>} : memref<16x8x128xf32, #tpu.memory_space<vmem>>, vector<1x8x128xf32>,
    %353 = vector.extract_strided_slice %208 {offsets = [130, 0], sizes = [8, 128], strides = [1, 1]} : vector<158x128xf32> to vector<8x128xf32>
    %354 = vector.broadcast %209 : vector<1x128xf32> to vector<8x128xf32>
    %355 = arith.addf %353, %354 : vector<8x128xf32>
    %c13_283 = arith.constant 13 : index
    %c0_284 = arith.constant 0 : index
    %c0_285 = arith.constant 0 : index
    %356 = vector.load %arg1[%c13_283, %c0_284, %c0_285] : memref<16x8x128xf32, #tpu.memory_space<vmem>>, vector<1x8x128xf32>
    %357 = vector.shape_cast %356 : vector<1x8x128xf32> to vector<8x128xf32>
    %358 = arith.addf %355, %357 : vector<8x128xf32>
    %cst_286 = arith.constant 0.000000e+00 : f32
    %359 = vector.broadcast %cst_286 : f32 to vector<8x128xf32>
    %360 = arith.maximumf %358, %359 : vector<8x128xf32>
    %c13_287 = arith.constant 13 : index
    %c0_288 = arith.constant 0 : index
    %c0_289 = arith.constant 0 : index
    %361 = vector.load %arg6[%c13_287, %c0_288, %c0_289] : memref<16x8x128xf32, #tpu.memory_space<vmem>>, vector<1x8x128xf32>
    %362 = vector.shape_cast %361 : vector<1x8x128xf32> to vector<8x128xf32>
    %363 = vector.shape_cast %360 : vector<8x128xf32> to vector<1x8x128xf32>
    tpu.vector_store %arg6[%c13_287, %c0_288, %c0_289], %363 {strides = array<i32>} : memref<16x8x128xf32, #tpu.memory_space<vmem>>, vector<1x8x128xf32>,
    %364 = vector.extract_strided_slice %208 {offsets = [140, 0], sizes = [8, 128], strides = [1, 1]} : vector<158x128xf32> to vector<8x128xf32>
    %365 = vector.broadcast %209 : vector<1x128xf32> to vector<8x128xf32>
    %366 = arith.addf %364, %365 : vector<8x128xf32>
    %c14_290 = arith.constant 14 : index
    %c0_291 = arith.constant 0 : index
    %c0_292 = arith.constant 0 : index
    %367 = vector.load %arg1[%c14_290, %c0_291, %c0_292] : memref<16x8x128xf32, #tpu.memory_space<vmem>>, vector<1x8x128xf32>
    %368 = vector.shape_cast %367 : vector<1x8x128xf32> to vector<8x128xf32>
    %369 = arith.addf %366, %368 : vector<8x128xf32>
    %cst_293 = arith.constant 0.000000e+00 : f32
    %370 = vector.broadcast %cst_293 : f32 to vector<8x128xf32>
    %371 = arith.maximumf %369, %370 : vector<8x128xf32>
    %c14_294 = arith.constant 14 : index
    %c0_295 = arith.constant 0 : index
    %c0_296 = arith.constant 0 : index
    %372 = vector.load %arg6[%c14_294, %c0_295, %c0_296] : memref<16x8x128xf32, #tpu.memory_space<vmem>>, vector<1x8x128xf32>
    %373 = vector.shape_cast %372 : vector<1x8x128xf32> to vector<8x128xf32>
    %374 = vector.shape_cast %371 : vector<8x128xf32> to vector<1x8x128xf32>
    tpu.vector_store %arg6[%c14_294, %c0_295, %c0_296], %374 {strides = array<i32>} : memref<16x8x128xf32, #tpu.memory_space<vmem>>, vector<1x8x128xf32>,
    %375 = vector.extract_strided_slice %208 {offsets = [150, 0], sizes = [8, 128], strides = [1, 1]} : vector<158x128xf32> to vector<8x128xf32>
    %376 = vector.broadcast %209 : vector<1x128xf32> to vector<8x128xf32>
    %377 = arith.addf %375, %376 : vector<8x128xf32>
    %c15_297 = arith.constant 15 : index
    %c0_298 = arith.constant 0 : index
    %c0_299 = arith.constant 0 : index
    %378 = vector.load %arg1[%c15_297, %c0_298, %c0_299] : memref<16x8x128xf32, #tpu.memory_space<vmem>>, vector<1x8x128xf32>
    %379 = vector.shape_cast %378 : vector<1x8x128xf32> to vector<8x128xf32>
    %380 = arith.addf %377, %379 : vector<8x128xf32>
    %cst_300 = arith.constant 0.000000e+00 : f32
    %381 = vector.broadcast %cst_300 : f32 to vector<8x128xf32>
    %382 = arith.maximumf %380, %381 : vector<8x128xf32>
    %c15_301 = arith.constant 15 : index
    %c0_302 = arith.constant 0 : index
    %c0_303 = arith.constant 0 : index
    %383 = vector.load %arg6[%c15_301, %c0_302, %c0_303] : memref<16x8x128xf32, #tpu.memory_space<vmem>>, vector<1x8x128xf32>
    %384 = vector.shape_cast %383 : vector<1x8x128xf32> to vector<8x128xf32>
    %385 = vector.shape_cast %382 : vector<8x128xf32> to vector<1x8x128xf32>
    tpu.vector_store %arg6[%c15_301, %c0_302, %c0_303], %385 {strides = array<i32>} : memref<16x8x128xf32, #tpu.memory_space<vmem>>, vector<1x8x128xf32>,
    return
  }
  func.func @transform_0(%arg0: i32) -> (i32, i32, i32) {
    %c0_i32 = arith.constant 0 : i32
    %c0_i32_0 = arith.constant 0 : i32
    %c0_i32_1 = arith.constant 0 : i32
    return %arg0, %c0_i32, %c0_i32_0 : i32, i32, i32
  }
  func.func @transform_1(%arg0: i32) -> (i32, i32, i32) {
    %c0_i32 = arith.constant 0 : i32
    %c0_i32_0 = arith.constant 0 : i32
    %c0_i32_1 = arith.constant 0 : i32
    %c0_i32_2 = arith.constant 0 : i32
    return %c0_i32, %c0_i32_0, %c0_i32_1 : i32, i32, i32
  }
  func.func @transform_2(%arg0: i32) -> (i32, i32) {
    %c0_i32 = arith.constant 0 : i32
    %c0_i32_0 = arith.constant 0 : i32
    %c0_i32_1 = arith.constant 0 : i32
    return %c0_i32, %c0_i32_0 : i32, i32
  }
  func.func @transform_3(%arg0: i32) -> (i32, i32, i32) {
    %c0_i32 = arith.constant 0 : i32
    %c0_i32_0 = arith.constant 0 : i32
    %c0_i32_1 = arith.constant 0 : i32
    %c0_i32_2 = arith.constant 0 : i32
    return %c0_i32, %c0_i32_0, %c0_i32_1 : i32, i32, i32
  }
  func.func @transform_4(%arg0: i32) -> (i32, i32) {
    %c0_i32 = arith.constant 0 : i32
    %c0_i32_0 = arith.constant 0 : i32
    %c0_i32_1 = arith.constant 0 : i32
    return %c0_i32, %c0_i32_0 : i32, i32
  }
  func.func @transform_5(%arg0: i32) -> (i32, i32, i32) {
    %c0_i32 = arith.constant 0 : i32
    %c0_i32_0 = arith.constant 0 : i32
    %c0_i32_1 = arith.constant 0 : i32
    return %arg0, %c0_i32, %c0_i32_0 : i32, i32, i32
  }
}

</mosaic_0001>

<llo_original>
// kernel: tpu_custom_call.1
$region0: #{tpu_custom_call.1}
  #allocation0 [shape = 'u32[]', space=smem, size = 0x4, offset = 0x4, fixed_abs, tag = 'smem constant byte address 0x4 - core index']
  #allocation1 [shape = 'u32[144,128]{1,0:T(1,128)}', space=vmem, size = 0x12000, scoped, tag = 'internal scratch']
  #allocation2 [shape = 'f32[160,128]{1,0:T(8,128)}', space=vmem, size = 0x14000, scoped, tag = 'scratch operand']
  #allocation3 [shape = 'f32[160,128]{1,0:T(8,128)}', space=vmem, size = 0x14000, scoped, tag = 'scratch operand']
  %s0 = inlined_call_operand.hbm [shape: f32[32,8,128], index: 0, kind: input, shape index: {}]
  %s1 = inlined_call_operand.hbm [shape: f32[3,128,128], index: 1, kind: input, shape index: {}]
  %s2 = inlined_call_operand.vmem [shape: f32[1,128], index: 2, kind: input, shape index: {}]
  %s3 = inlined_call_operand.hbm [shape: f32[3,128,128], index: 3, kind: input, shape index: {}]
  %s4 = inlined_call_operand.vmem [shape: f32[1,128], index: 4, kind: input, shape index: {}]
  %s5 = inlined_call_operand.hbm [shape: f32[32,8,128], index: 5, kind: output, shape index: {}]
  %s6 = sld [smem:[#allocation0]]
  $region65: #{tpu_custom_call.1} parent=0
    _
  %s8 = ssub.s32 1, %s6
  %s9 = scalar_select 0, %s8, %s6
  $region1: #{tpu_custom_call.1} parent=0
    #allocation4 [shape = 'u8[131072]{0}', space=vmem, size = 0x20000, scoped, tag = 'input window, operand 0']
    #allocation5 [shape = 's32[2]{0}', space=sflag, size = 0x8, scoped, tag = 'scoped memory for tpu_custom_call.1']
    #allocation6 [shape = 's32[2]{0}', space=sflag, size = 0x8, scoped, tag = 'scoped memory for tpu_custom_call.1']
    #allocation7 [shape = 'u8[196608]{0}', space=vmem, size = 0x30000, scoped, tag = 'input window, operand 1, single buffered']
    #allocation8 [shape = 's32[1]{0}', space=sflag, size = 0x4, scoped, tag = 'scoped memory for tpu_custom_call.1']
    #allocation9 [shape = 'u8[196608]{0}', space=vmem, size = 0x30000, scoped, tag = 'input window, operand 3, single buffered']
    #allocation10 [shape = 'u8[131072]{0}', space=vmem, size = 0x20000, scoped, tag = 'output window, operand 0']
    %10 = vsyncpa [#allocation5], 0
    %s11 = scalar_lea.sflag [#allocation5], 1
    %12 = vsyncpa %s11, 0
    %13 = vsyncpa [#allocation8], 0
    %14 = vsyncpa [#allocation6], 0
    %s15 = scalar_lea.sflag [#allocation6], 1
    %16 = vsyncpa %s15, 0
    loop: start=0, step=1, limit=4
    $region2: #{tpu_custom_call.1} parent=1 // loop_pre_header
      _
    $region3: #{tpu_custom_call.1} parent=1 // loop_header
      %s18 = sphi 0, %s22
      %p19 = scmp.ge.s32.totalorder %s18, 4
      %s28 = sphi 0, %s30
      %s31 = sphi 0, %s28
      %s32 = sphi 0, %s31
      %s48 = sphi 0, %s32
      %s52 = sphi 0, %s52
      %s54 = sphi 0, %s52
      %s55 = sphi 0, %s54
      %s69 = sphi 0, %s55
      %s73 = sphi 0, %s73
      %s75 = sphi 0, %s73
      %s76 = sphi 0, %s75
      %s90 = sphi 0, %s76
      %s94 = sphi 0, %s94
      %s96 = sphi 0, %s94
      %s97 = sphi 0, %s96
      %s111 = sphi 0, %s97
      %s115 = sphi 0, %s115
      %s117 = sphi 0, %s115
      %s118 = sphi 0, %s117
      %s132 = sphi 0, %s118
      %s138 = sphi 0, %s140
      %s141 = sphi 0, %s138
      %s142 = sphi 0, %s141
      %s158 = sphi 0, %s142
    $region4: #{tpu_custom_call.1} parent=1 // loop_header_branch
      %21 = sbr.rel (%p19) target = $region8
    $region5: #{tpu_custom_call.1} parent=1 // loop_body
      %s23 = ssub.s32 %s18, 1
      %s24 = ssub.s32 %s18, 2
      %s25 = sadd.s32 %s18, 1
      %s26 = ssub.s32 %s18, %s25
      %p27 = scmp.eq.s32.totalorder %s26, 0
      %s29 = sadd.s32 %s28, 1
      %s30 = scalar_select %p27, %s28, %s29
      %p33 = pneg %p27
      %p34 = scmp.eq.s32.totalorder %s18, 1
      %p35 = por %p33, %p34
      %p36 = scmp.ne.s32.totalorder %s28, %s31
      %p37 = scmp.eq.s32.totalorder %s18, 0
      %p38 = por %p36, %p37
      %p39 = scmp.ne.s32.totalorder %s28, %s31
      %p40 = scmp.eq.s32.totalorder %s23, 1
      %p41 = por %p39, %p40
      %p42 = scmp.ne.s32.totalorder %s31, %s32
      %p43 = scmp.eq.s32.totalorder %s23, 0
      %p44 = por %p42, %p43
      %p45 = scmp.ne.s32.totalorder %s31, %s32
      %p46 = scmp.eq.s32.totalorder %s24, 1
      %p47 = por %p45, %p46
      %p49 = scmp.ne.s32.totalorder %s32, %s48
      %p50 = scmp.eq.s32.totalorder %s24, 0
      %p51 = por %p49, %p50
      %s53 = sadd.s32 %s52, 1
      %p56 = scmp.eq.s32.totalorder %s18, 1
      %p57 = scmp.ne.s32.totalorder %s52, %s54
      %p58 = scmp.eq.s32.totalorder %s18, 0
      %p59 = por %p57, %p58
      %p60 = scmp.ne.s32.totalorder %s52, %s54
      %p61 = scmp.eq.s32.totalorder %s23, 1
      %p62 = por %p60, %p61
      %p63 = scmp.ne.s32.totalorder %s54, %s55
      %p64 = scmp.eq.s32.totalorder %s23, 0
      %p65 = por %p63, %p64
      %p66 = scmp.ne.s32.totalorder %s54, %s55
      %p67 = scmp.eq.s32.totalorder %s24, 1
      %p68 = por %p66, %p67
      %p70 = scmp.ne.s32.totalorder %s55, %s69
      %p71 = scmp.eq.s32.totalorder %s24, 0
      %p72 = por %p70, %p71
      %s74 = sadd.s32 %s73, 1
      %p77 = scmp.eq.s32.totalorder %s18, 1
      %p78 = scmp.ne.s32.totalorder %s73, %s75
      %p79 = scmp.eq.s32.totalorder %s18, 0
      %p80 = por %p78, %p79
      %p81 = scmp.ne.s32.totalorder %s73, %s75
      %p82 = scmp.eq.s32.totalorder %s23, 1
      %p83 = por %p81, %p82
      %p84 = scmp.ne.s32.totalorder %s75, %s76
      %p85 = scmp.eq.s32.totalorder %s23, 0
      %p86 = por %p84, %p85
      %p87 = scmp.ne.s32.totalorder %s75, %s76
      %p88 = scmp.eq.s32.totalorder %s24, 1
      %p89 = por %p87, %p88
      %p91 = scmp.ne.s32.totalorder %s76, %s90
      %p92 = scmp.eq.s32.totalorder %s24, 0
      %p93 = por %p91, %p92
      %s95 = sadd.s32 %s94, 1
      %p98 = scmp.eq.s32.totalorder %s18, 1
      %p99 = scmp.ne.s32.totalorder %s94, %s96
      %p100 = scmp.eq.s32.totalorder %s18, 0
      %p101 = por %p99, %p100
      %p102 = scmp.ne.s32.totalorder %s94, %s96
      %p103 = scmp.eq.s32.totalorder %s23, 1
      %p104 = por %p102, %p103
      %p105 = scmp.ne.s32.totalorder %s96, %s97
      %p106 = scmp.eq.s32.totalorder %s23, 0
      %p107 = por %p105, %p106
      %p108 = scmp.ne.s32.totalorder %s96, %s97
      %p109 = scmp.eq.s32.totalorder %s24, 1
      %p110 = por %p108, %p109
      %p112 = scmp.ne.s32.totalorder %s97, %s111
      %p113 = scmp.eq.s32.totalorder %s24, 0
      %p114 = por %p112, %p113
      %s116 = sadd.s32 %s115, 1
      %p119 = scmp.eq.s32.totalorder %s18, 1
      %p120 = scmp.ne.s32.totalorder %s115, %s117
      %p121 = scmp.eq.s32.totalorder %s18, 0
      %p122 = por %p120, %p121
      %p123 = scmp.ne.s32.totalorder %s115, %s117
      %p124 = scmp.eq.s32.totalorder %s23, 1
      %p125 = por %p123, %p124
      %p126 = scmp.ne.s32.totalorder %s117, %s118
      %p127 = scmp.eq.s32.totalorder %s23, 0
      %p128 = por %p126, %p127
      %p129 = scmp.ne.s32.totalorder %s117, %s118
      %p130 = scmp.eq.s32.totalorder %s24, 1
      %p131 = por %p129, %p130
      %p133 = scmp.ne.s32.totalorder %s118, %s132
      %p134 = scmp.eq.s32.totalorder %s24, 0
      %p135 = por %p133, %p134
      %s136 = ssub.s32 %s18, %s25
      %p137 = scmp.eq.s32.totalorder %s136, 0
      %s139 = sadd.s32 %s138, 1
      %s140 = scalar_select %p137, %s138, %s139
      %p143 = pneg %p137
      %p144 = scmp.eq.s32.totalorder %s18, 1
      %p145 = por %p143, %p144
      %p146 = scmp.ne.s32.totalorder %s138, %s141
      %p147 = scmp.eq.s32.totalorder %s18, 0
      %p148 = por %p146, %p147
      %p149 = scmp.ne.s32.totalorder %s138, %s141
      %p150 = scmp.eq.s32.totalorder %s23, 1
      %p151 = por %p149, %p150
      %p152 = scmp.ne.s32.totalorder %s141, %s142
      %p153 = scmp.eq.s32.totalorder %s23, 0
      %p154 = por %p152, %p153
      %p155 = scmp.ne.s32.totalorder %s141, %s142
      %p156 = scmp.eq.s32.totalorder %s24, 1
      %p157 = por %p155, %p156
      %p159 = scmp.ne.s32.totalorder %s142, %s158
      %p160 = scmp.eq.s32.totalorder %s24, 0
      %p161 = por %p159, %p160
      %p162 = scmp.le.s32.totalorder 1, %s18
      %p163 = scmp.lt.s32.totalorder %s18, 3
      %p164 = pnand %p162, %p163
      %p165 = pneg %p164
      // Predicated region
      $region9: #{tpu_custom_call.1} parent=5 // pred_check
        _
      $region10: #{tpu_custom_call.1} parent=5 // pred_check_branch
        %167 = sbr.rel (%p164) target = $region12
      $region11: #{tpu_custom_call.1} parent=5 // pred_region
        %s168 = ssub.s32 %s18, 1
        // Predicated region
        $region13: #{tpu_custom_call.1} parent=11 // pred_check
          %p169 = pneg %p65
        $region14: #{tpu_custom_call.1} parent=11 // pred_check_branch
          %171 = sbr.rel (%p169) target = $region16
        $region15: #{tpu_custom_call.1} parent=11 // pred_region
          %s173 = ssub.s32 6144, 6144
          %174 = vsyncadd [#allocation8], %s173
          %s175 = sshll.u32 [#allocation7], 4
          %s176 = int_to_ptr.vmem [resolvable:$true] %s175
          %181 = dma.hbm_to_vmem [thread:$0]  %s1, 6144, %s176, [#allocation8], 128, 128, 8
        $region16: #{tpu_custom_call.1} parent=11 // pred_fallthru
          _
        // Predicated region
        $region17: #{tpu_custom_call.1} parent=11 // pred_check
          %p182 = pneg %p86
        $region18: #{tpu_custom_call.1} parent=11 // pred_check_branch
          %184 = sbr.rel (%p182) target = $region20
        $region19: #{tpu_custom_call.1} parent=11 // pred_region
          _
        $region20: #{tpu_custom_call.1} parent=11 // pred_fallthru
          _
        // Predicated region
        $region21: #{tpu_custom_call.1} parent=11 // pred_check
          %p185 = pneg %p107
        $region22: #{tpu_custom_call.1} parent=11 // pred_check_branch
          %187 = sbr.rel (%p185) target = $region24
        $region23: #{tpu_custom_call.1} parent=11 // pred_region
          %s189 = ssub.s32 6144, 6144
          %190 = vsyncadd [#allocation8], %s189
          %s191 = sshll.u32 [#allocation9], 4
          %s192 = int_to_ptr.vmem [resolvable:$true] %s191
          %197 = dma.hbm_to_vmem [thread:$0]  %s3, 6144, %s192, [#allocation8], 128, 128, 8
        $region24: #{tpu_custom_call.1} parent=11 // pred_fallthru
          _
        // Predicated region
        $region25: #{tpu_custom_call.1} parent=11 // pred_check
          %p198 = pneg %p128
        $region26: #{tpu_custom_call.1} parent=11 // pred_check_branch
          %200 = sbr.rel (%p198) target = $region28
        $region27: #{tpu_custom_call.1} parent=11 // pred_region
          _
        $region28: #{tpu_custom_call.1} parent=11 // pred_fallthru
          _
      $region12: #{tpu_custom_call.1} parent=5 // pred_fallthru
        _
      %p201 = scmp.lt.s32.totalorder %s18, 2
      // Predicated region
      $region29: #{tpu_custom_call.1} parent=5 // pred_check
        %p202 = pneg %p201
      $region30: #{tpu_custom_call.1} parent=5 // pred_check_branch
        %204 = sbr.rel (%p202) target = $region32
      $region31: #{tpu_custom_call.1} parent=5 // pred_region
        // Predicated region
        $region33: #{tpu_custom_call.1} parent=31 // pred_check
          %p205 = pneg %p38
        $region34: #{tpu_custom_call.1} parent=31 // pred_check_branch
          %207 = sbr.rel (%p205) target = $region36
        $region35: #{tpu_custom_call.1} parent=31 // pred_region
          %s208 = sand.u32 %s28, 1
          %s209 = scalar_lea.sflag [#allocation5], %s208
          %s210 = sand.u32 %s28, 1
          %s211 = smul.addr %s210, 128
          %s212 = scalar_lea.vmem [#allocation4], %s211
          %s213 = smul.u32 16, %s18
          %s215 = ssub.s32 2048, 2048
          %216 = vsyncadd %s209, %s215
          %s217 = smul.addr %s213, 128
          %s218 = scalar_lea.hbm %s0, %s217
          %s219 = sshll.u32 %s212, 4
          %s220 = int_to_ptr.vmem [resolvable:$true] %s219
          %225 = dma.hbm_to_vmem [thread:$0]  %s218, 2048, %s220, %s209, 128, 128, 8
        $region36: #{tpu_custom_call.1} parent=31 // pred_fallthru
          _
      $region32: #{tpu_custom_call.1} parent=5 // pred_fallthru
        _
      %p226 = scmp.le.s32.totalorder 1, %s18
      %p227 = scmp.lt.s32.totalorder %s18, 3
      %p228 = pnand %p226, %p227
      %p229 = pneg %p228
      // Predicated region
      $region37: #{tpu_custom_call.1} parent=5 // pred_check
        _
      $region38: #{tpu_custom_call.1} parent=5 // pred_check_branch
        %231 = sbr.rel (%p228) target = $region40
      $region39: #{tpu_custom_call.1} parent=5 // pred_region
        %s232 = ssub.s32 %s18, 1
        %s233 = sand.u32 %s31, 1
        %s234 = scalar_lea.sflag [#allocation5], %s233
        %s235 = sand.u32 %s31, 1
        %s236 = smul.addr %s235, 128
        %s237 = scalar_lea.vmem [#allocation4], %s236
        // Predicated region
        $region41: #{tpu_custom_call.1} parent=39 // pred_check
          %p238 = pneg %p44
        $region42: #{tpu_custom_call.1} parent=39 // pred_check_branch
          %240 = sbr.rel (%p238) target = $region44
        $region43: #{tpu_custom_call.1} parent=39 // pred_region
          %241 = dma.done %s234, 2048
        $region44: #{tpu_custom_call.1} parent=39 // pred_fallthru
          _
        // Predicated region
        $region45: #{tpu_custom_call.1} parent=39 // pred_check
          %p242 = pneg %p65
        $region46: #{tpu_custom_call.1} parent=39 // pred_check_branch
          %244 = sbr.rel (%p242) target = $region48
        $region47: #{tpu_custom_call.1} parent=39 // pred_region
          %245 = dma.done [#allocation8], 6144
        $region48: #{tpu_custom_call.1} parent=39 // pred_fallthru
          _
        // Predicated region
        $region49: #{tpu_custom_call.1} parent=39 // pred_check
          %p246 = pneg %p107
        $region50: #{tpu_custom_call.1} parent=39 // pred_check_branch
          %248 = sbr.rel (%p246) target = $region52
        $region51: #{tpu_custom_call.1} parent=39 // pred_region
          %249 = dma.done [#allocation8], 6144
        $region52: #{tpu_custom_call.1} parent=39 // pred_fallthru
          _
        %s250 = sand.u32 %s31, 1
        %s251 = scalar_lea.sflag [#allocation5], %s250
        %s252 = sand.u32 %s31, 1
        %s253 = smul.addr %s252, 128
        %s254 = scalar_lea.vmem [#allocation4], %s253
        %p255 = pneg %p44
        %p256 = pneg %p41
        %p257 = pneg %p65
        %p258 = pneg %p62
        %p259 = pneg %p86
        %p260 = pneg %p83
        %p261 = pneg %p107
        %p262 = pneg %p104
        %p263 = pneg %p128
        %p264 = pneg %p125
        %p265 = pneg %p154
        %p266 = pneg %p151
        %s267 = sand.u32 %s141, 1
        %s268 = scalar_lea.sflag [#allocation6], %s267
        %s269 = sand.u32 %s141, 1
        %s270 = smul.addr %s269, 128
        %s271 = scalar_lea.vmem [#allocation10], %s270
        %s272 = smul.u32 16, %s23
        %s273 = smul.u32 16, %s23
        %274 = vst [vmem:[#allocation2] sm:$0x1] 0.0
        %275 = vst [vmem:[#allocation2 + $0x9] sm:$0x3] 0.0
        %276 = vst [vmem:[#allocation2 + $0x13] sm:$0x3] 0.0
        %277 = vst [vmem:[#allocation2 + $0x1d] sm:$0x3] 0.0
        %278 = vst [vmem:[#allocation2 + $0x27] sm:$0x3] 0.0
        %279 = vst [vmem:[#allocation2 + $0x31] sm:$0x3] 0.0
        %280 = vst [vmem:[#allocation2 + $0x3b] sm:$0x3] 0.0
        %281 = vst [vmem:[#allocation2 + $0x45] sm:$0x3] 0.0
        %282 = vst [vmem:[#allocation2 + $0x4f] sm:$0x3] 0.0
        %283 = vst [vmem:[#allocation2 + $0x59] sm:$0x3] 0.0
        %284 = vst [vmem:[#allocation2 + $0x63] sm:$0x3] 0.0
        %285 = vst [vmem:[#allocation2 + $0x6d] sm:$0x3] 0.0
        %286 = vst [vmem:[#allocation2 + $0x77] sm:$0x3] 0.0
        %287 = vst [vmem:[#allocation2 + $0x81] sm:$0x3] 0.0
        %288 = vst [vmem:[#allocation2 + $0x8b] sm:$0x3] 0.0
        %289 = vst [vmem:[#allocation2 + $0x95] sm:$0x3] 0.0
        %290 = vst [vmem:[#allocation2 + $0x9f] sm:$0x1] 0.0
        %291 = vst [vmem:[#allocation3] sm:$0x1] 0.0
        %292 = vst [vmem:[#allocation3 + $0x9] sm:$0x3] 0.0
        %293 = vst [vmem:[#allocation3 + $0x13] sm:$0x3] 0.0
        %294 = vst [vmem:[#allocation3 + $0x1d] sm:$0x3] 0.0
        %295 = vst [vmem:[#allocation3 + $0x27] sm:$0x3] 0.0
        %296 = vst [vmem:[#allocation3 + $0x31] sm:$0x3] 0.0
        %297 = vst [vmem:[#allocation3 + $0x3b] sm:$0x3] 0.0
        %298 = vst [vmem:[#allocation3 + $0x45] sm:$0x3] 0.0
        %299 = vst [vmem:[#allocation3 + $0x4f] sm:$0x3] 0.0
        %300 = vst [vmem:[#allocation3 + $0x59] sm:$0x3] 0.0
        %301 = vst [vmem:[#allocation3 + $0x63] sm:$0x3] 0.0
        %302 = vst [vmem:[#allocation3 + $0x6d] sm:$0x3] 0.0
        %303 = vst [vmem:[#allocation3 + $0x77] sm:$0x3] 0.0
        %304 = vst [vmem:[#allocation3 + $0x81] sm:$0x3] 0.0
        %305 = vst [vmem:[#allocation3 + $0x8b] sm:$0x3] 0.0
        %306 = vst [vmem:[#allocation3 + $0x95] sm:$0x3] 0.0
        %307 = vst [vmem:[#allocation3 + $0x9f] sm:$0x1] 0.0
        %v308 = vld [vmem:[%s237] sm:$0xff]
        %309 = vst [vmem:[#allocation2 + $0x1] sm:$0xff] %v308
        %s310 = scalar_lea.vmem %s237, 8 [#allocation4]
        %v311 = vld [vmem:[%s310] sm:$0xff]
        %312 = vst [vmem:[#allocation2 + $0xb] sm:$0xff] %v311
        %s313 = scalar_lea.vmem %s237, 16 [#allocation4]
        %v314 = vld [vmem:[%s313] sm:$0xff]
        %315 = vst [vmem:[#allocation2 + $0x15] sm:$0xff] %v314
        %s316 = scalar_lea.vmem %s237, 24 [#allocation4]
        %v317 = vld [vmem:[%s316] sm:$0xff]
        %318 = vst [vmem:[#allocation2 + $0x1f] sm:$0xff] %v317
        %s319 = scalar_lea.vmem %s237, 32 [#allocation4]
        %v320 = vld [vmem:[%s319] sm:$0xff]
        %321 = vst [vmem:[#allocation2 + $0x29] sm:$0xff] %v320
        %s322 = scalar_lea.vmem %s237, 40 [#allocation4]
        %v323 = vld [vmem:[%s322] sm:$0xff]
        %324 = vst [vmem:[#allocation2 + $0x33] sm:$0xff] %v323
        %s325 = scalar_lea.vmem %s237, 48 [#allocation4]
        %v326 = vld [vmem:[%s325] sm:$0xff]
        %327 = vst [vmem:[#allocation2 + $0x3d] sm:$0xff] %v326
        %s328 = scalar_lea.vmem %s237, 56 [#allocation4]
        %v329 = vld [vmem:[%s328] sm:$0xff]
        %330 = vst [vmem:[#allocation2 + $0x47] sm:$0xff] %v329
        %s331 = scalar_lea.vmem %s237, 64 [#allocation4]
        %v332 = vld [vmem:[%s331] sm:$0xff]
        %333 = vst [vmem:[#allocation2 + $0x51] sm:$0xff] %v332
        %s334 = scalar_lea.vmem %s237, 72 [#allocation4]
        %v335 = vld [vmem:[%s334] sm:$0xff]
        %336 = vst [vmem:[#allocation2 + $0x5b] sm:$0xff] %v335
        %s337 = scalar_lea.vmem %s237, 80 [#allocation4]
        %v338 = vld [vmem:[%s337] sm:$0xff]
        %339 = vst [vmem:[#allocation2 + $0x65] sm:$0xff] %v338
        %s340 = scalar_lea.vmem %s237, 88 [#allocation4]
        %v341 = vld [vmem:[%s340] sm:$0xff]
        %342 = vst [vmem:[#allocation2 + $0x6f] sm:$0xff] %v341
        %s343 = scalar_lea.vmem %s237, 96 [#allocation4]
        %v344 = vld [vmem:[%s343] sm:$0xff]
        %345 = vst [vmem:[#allocation2 + $0x79] sm:$0xff] %v344
        %s346 = scalar_lea.vmem %s237, 104 [#allocation4]
        %v347 = vld [vmem:[%s346] sm:$0xff]
        %348 = vst [vmem:[#allocation2 + $0x83] sm:$0xff] %v347
        %s349 = scalar_lea.vmem %s237, 112 [#allocation4]
        %v350 = vld [vmem:[%s349] sm:$0xff]
        %351 = vst [vmem:[#allocation2 + $0x8d] sm:$0xff] %v350
        %s352 = scalar_lea.vmem %s237, 120 [#allocation4]
        %v353 = vld [vmem:[%s352] sm:$0xff]
        %354 = vst [vmem:[#allocation2 + $0x97] sm:$0xff] %v353
        %v355 = vld [vmem:[#allocation2] sm:$0xff]
        %v356 = vld [vmem:[#allocation2 + $0x8] sm:$0xff]
        %v357 = vld [vmem:[#allocation2 + $0x10] sm:$0xff]
        %v358 = vld [vmem:[#allocation2 + $0x18] sm:$0xff]
        %v359 = vld [vmem:[#allocation2 + $0x20] sm:$0xff]
        %v360 = vld [vmem:[#allocation2 + $0x28] sm:$0xff]
        %v361 = vld [vmem:[#allocation2 + $0x30] sm:$0xff]
        %v362 = vld [vmem:[#allocation2 + $0x38] sm:$0xff]
        %v363 = vld [vmem:[#allocation2 + $0x40] sm:$0xff]
        %v364 = vld [vmem:[#allocation2 + $0x48] sm:$0xff]
        %v365 = vld [vmem:[#allocation2 + $0x50] sm:$0xff]
        %v366 = vld [vmem:[#allocation2 + $0x58] sm:$0xff]
        %v367 = vld [vmem:[#allocation2 + $0x60] sm:$0xff]
        %v368 = vld [vmem:[#allocation2 + $0x68] sm:$0xff]
        %v369 = vld [vmem:[#allocation2 + $0x70] sm:$0xff]
        %v370 = vld [vmem:[#allocation2 + $0x78] sm:$0xff]
        %v371 = vld [vmem:[#allocation2 + $0x80] sm:$0xff]
        %v372 = vld [vmem:[#allocation2 + $0x88] sm:$0xff]
        %v373 = vld [vmem:[#allocation2 + $0x90] sm:$0xff]
        %v374 = vld [vmem:[#allocation2 + $0x98] sm:$0x3f]
        %v375 = vld [vmem:[#allocation7] sm:$0xff]
        %v376 = vld [vmem:[#allocation7 + $0x8] sm:$0xff]
        %v377 = vld [vmem:[#allocation7 + $0x10] sm:$0xff]
        %v378 = vld [vmem:[#allocation7 + $0x18] sm:$0xff]
        %v379 = vld [vmem:[#allocation7 + $0x20] sm:$0xff]
        %v380 = vld [vmem:[#allocation7 + $0x28] sm:$0xff]
        %v381 = vld [vmem:[#allocation7 + $0x30] sm:$0xff]
        %v382 = vld [vmem:[#allocation7 + $0x38] sm:$0xff]
        %v383 = vld [vmem:[#allocation7 + $0x40] sm:$0xff]
        %v384 = vld [vmem:[#allocation7 + $0x48] sm:$0xff]
        %v385 = vld [vmem:[#allocation7 + $0x50] sm:$0xff]
        %v386 = vld [vmem:[#allocation7 + $0x58] sm:$0xff]
        %v387 = vld [vmem:[#allocation7 + $0x60] sm:$0xff]
        %v388 = vld [vmem:[#allocation7 + $0x68] sm:$0xff]
        %v389 = vld [vmem:[#allocation7 + $0x70] sm:$0xff]
        %v390 = vld [vmem:[#allocation7 + $0x78] sm:$0xff]
        %v391 = vld [vmem:[#allocation2 + $0x1] sm:$0xff]
        %v392 = vld [vmem:[#allocation2 + $0x9] sm:$0xff]
        %v393 = vld [vmem:[#allocation2 + $0x11] sm:$0xff]
        %v394 = vld [vmem:[#allocation2 + $0x19] sm:$0xff]
        %v395 = vld [vmem:[#allocation2 + $0x21] sm:$0xff]
        %v396 = vld [vmem:[#allocation2 + $0x29] sm:$0xff]
        %v397 = vld [vmem:[#allocation2 + $0x31] sm:$0xff]
        %v398 = vld [vmem:[#allocation2 + $0x39] sm:$0xff]
        %v399 = vld [vmem:[#allocation2 + $0x41] sm:$0xff]
        %v400 = vld [vmem:[#allocation2 + $0x49] sm:$0xff]
        %v401 = vld [vmem:[#allocation2 + $0x51] sm:$0xff]
        %v402 = vld [vmem:[#allocation2 + $0x59] sm:$0xff]
        %v403 = vld [vmem:[#allocation2 + $0x61] sm:$0xff]
        %v404 = vld [vmem:[#allocation2 + $0x69] sm:$0xff]
        %v405 = vld [vmem:[#allocation2 + $0x71] sm:$0xff]
        %v406 = vld [vmem:[#allocation2 + $0x79] sm:$0xff]
        %v407 = vld [vmem:[#allocation2 + $0x81] sm:$0xff]
        %v408 = vld [vmem:[#allocation2 + $0x89] sm:$0xff]
        %v409 = vld [vmem:[#allocation2 + $0x91] sm:$0xff]
        %v410 = vld [vmem:[#allocation2 + $0x99] sm:$0x3f]
        %s411 = scalar_lea.vmem [#allocation7], 128
        %v412 = vld [vmem:[%s411] sm:$0xff]
        %v413 = vld [vmem:[%s411 + $0x8] sm:$0xff]
        %v414 = vld [vmem:[%s411 + $0x10] sm:$0xff]
        %v415 = vld [vmem:[%s411 + $0x18] sm:$0xff]
        %v416 = vld [vmem:[%s411 + $0x20] sm:$0xff]
        %v417 = vld [vmem:[%s411 + $0x28] sm:$0xff]
        %v418 = vld [vmem:[%s411 + $0x30] sm:$0xff]
        %v419 = vld [vmem:[%s411 + $0x38] sm:$0xff]
        %v420 = vld [vmem:[%s411 + $0x40] sm:$0xff]
        %v421 = vld [vmem:[%s411 + $0x48] sm:$0xff]
        %v422 = vld [vmem:[%s411 + $0x50] sm:$0xff]
        %v423 = vld [vmem:[%s411 + $0x58] sm:$0xff]
        %v424 = vld [vmem:[%s411 + $0x60] sm:$0xff]
        %v425 = vld [vmem:[%s411 + $0x68] sm:$0xff]
        %v426 = vld [vmem:[%s411 + $0x70] sm:$0xff]
        %v427 = vld [vmem:[%s411 + $0x78] sm:$0xff]
        %428 = vmatprep.subr.mxu0 0.0
        %429 = vmatpush1.msra.mxu0 %v427
        %430 = vmatprep.subr.mxu0 0.0
        %431 = vmatpush1.msra.mxu0 %v426
        %432 = vmatprep.subr.mxu0 0.0
        %433 = vmatpush1.msra.mxu0 %v425
        %434 = vmatprep.subr.mxu0 0.0
        %435 = vmatpush1.msra.mxu0 %v424
        %436 = vmatprep.subr.mxu0 0.0
        %437 = vmatpush1.msra.mxu0 %v423
        %438 = vmatprep.subr.mxu0 0.0
        %439 = vmatpush1.msra.mxu0 %v422
        %440 = vmatprep.subr.mxu0 0.0
        %441 = vmatpush1.msra.mxu0 %v421
        %442 = vmatprep.subr.mxu0 0.0
        %443 = vmatpush1.msra.mxu0 %v420
        %444 = vmatprep.subr.mxu0 0.0
        %445 = vmatpush1.msra.mxu0 %v419
        %446 = vmatprep.subr.mxu0 0.0
        %447 = vmatpush1.msra.mxu0 %v418
        %448 = vmatprep.subr.mxu0 0.0
        %449 = vmatpush1.msra.mxu0 %v417
        %450 = vmatprep.subr.mxu0 0.0
        %451 = vmatpush1.msra.mxu0 %v416
        %452 = vmatprep.subr.mxu0 0.0
        %453 = vmatpush1.msra.mxu0 %v415
        %454 = vmatprep.subr.mxu0 0.0
        %455 = vmatpush1.msra.mxu0 %v414
        %456 = vmatprep.subr.mxu0 0.0
        %457 = vmatpush1.msra.mxu0 %v413
        %458 = vmatprep.subr.mxu0 0.0
        %459 = vmatpush1.msra.mxu0 %v412
        %460 = vmatprep.subr.mxu0 0.0
        %461 = vmatpush2.msra.mxu0 0.0
        %462 = vmatprep.subr.mxu0 0.0
        %463 = vmatpush2.msra.mxu0 0.0
        %464 = vmatprep.subr.mxu0 0.0
        %465 = vmatpush2.msra.mxu0 0.0
        %466 = vmatprep.subr.mxu0 0.0
        %467 = vmatpush2.msra.mxu0 0.0
        %468 = vmatprep.subr.mxu0 0.0
        %469 = vmatpush2.msra.mxu0 0.0
        %470 = vmatprep.subr.mxu0 0.0
        %471 = vmatpush2.msra.mxu0 0.0
        %472 = vmatprep.subr.mxu0 0.0
        %473 = vmatpush2.msra.mxu0 0.0
        %474 = vmatprep.subr.mxu0 0.0
        %475 = vmatpush2.msra.mxu0 0.0
        %476 = vmatprep.subr.mxu0 0.0
        %477 = vmatpush2.msra.mxu0 0.0
        %478 = vmatprep.subr.mxu0 0.0
        %479 = vmatpush2.msra.mxu0 0.0
        %480 = vmatprep.subr.mxu0 0.0
        %481 = vmatpush2.msra.mxu0 0.0
        %482 = vmatprep.subr.mxu0 0.0
        %483 = vmatpush2.msra.mxu0 0.0
        %484 = vmatprep.subr.mxu0 0.0
        %485 = vmatpush2.msra.mxu0 0.0
        %486 = vmatprep.subr.mxu0 0.0
        %487 = vmatpush2.msra.mxu0 0.0
        %488 = vmatprep.subr.mxu0 0.0
        %489 = vmatpush2.msra.mxu0 0.0
        %490 = vmatprep.subr.mxu0 0.0
        %491 = vmatpush2.msra.mxu0 0.0
        %492 = vmatprep.mubr.f32.mxu0 0.0
        %493 = vmatmul.mubr.f32.gmra.mxu0 %v391
        %v494 = vpop.f32.mrf.mxu0
        %v495 = vadd.f32 0.0, %v494
        %v496 = vpop.f32.mrf.mxu0
        %497 = vmatprep.mubr.f32.mxu0 0.0
        %498 = vmatmul.mubr.f32.gmra.mxu0 %v392
        %v499 = vpop.f32.mrf.mxu0
        %v500 = vadd.f32 0.0, %v499
        %v501 = vpop.f32.mrf.mxu0
        %502 = vmatprep.mubr.f32.mxu0 0.0
        %503 = vmatmul.mubr.f32.gmra.mxu0 %v393
        %v504 = vpop.f32.mrf.mxu0
        %v505 = vadd.f32 0.0, %v504
        %v506 = vpop.f32.mrf.mxu0
        %507 = vmatprep.mubr.f32.mxu0 0.0
        %508 = vmatmul.mubr.f32.gmra.mxu0 %v394
        %v509 = vpop.f32.mrf.mxu0
        %v510 = vadd.f32 0.0, %v509
        %v511 = vpop.f32.mrf.mxu0
        %512 = vmatprep.mubr.f32.mxu0 0.0
        %513 = vmatmul.mubr.f32.gmra.mxu0 %v395
        %v514 = vpop.f32.mrf.mxu0
        %v515 = vadd.f32 0.0, %v514
        %v516 = vpop.f32.mrf.mxu0
        %517 = vmatprep.mubr.f32.mxu0 0.0
        %518 = vmatmul.mubr.f32.gmra.mxu0 %v396
        %v519 = vpop.f32.mrf.mxu0
        %v520 = vadd.f32 0.0, %v519
        %v521 = vpop.f32.mrf.mxu0
        %522 = vmatprep.mubr.f32.mxu0 0.0
        %523 = vmatmul.mubr.f32.gmra.mxu0 %v397
        %v524 = vpop.f32.mrf.mxu0
        %v525 = vadd.f32 0.0, %v524
        %v526 = vpop.f32.mrf.mxu0
        %527 = vmatprep.mubr.f32.mxu0 0.0
        %528 = vmatmul.mubr.f32.gmra.mxu0 %v398
        %v529 = vpop.f32.mrf.mxu0
        %v530 = vadd.f32 0.0, %v529
        %v531 = vpop.f32.mrf.mxu0
        %532 = vmatprep.mubr.f32.mxu0 0.0
        %533 = vmatmul.mubr.f32.gmra.mxu0 %v399
        %v534 = vpop.f32.mrf.mxu0
        %v535 = vadd.f32 0.0, %v534
        %v536 = vpop.f32.mrf.mxu0
        %537 = vmatprep.mubr.f32.mxu0 0.0
        %538 = vmatmul.mubr.f32.gmra.mxu0 %v400
        %v539 = vpop.f32.mrf.mxu0
        %v540 = vadd.f32 0.0, %v539
        %v541 = vpop.f32.mrf.mxu0
        %542 = vmatprep.mubr.f32.mxu0 0.0
        %543 = vmatmul.mubr.f32.gmra.mxu0 %v401
        %v544 = vpop.f32.mrf.mxu0
        %v545 = vadd.f32 0.0, %v544
        %v546 = vpop.f32.mrf.mxu0
        %547 = vmatprep.mubr.f32.mxu0 0.0
        %548 = vmatmul.mubr.f32.gmra.mxu0 %v402
        %v549 = vpop.f32.mrf.mxu0
        %v550 = vadd.f32 0.0, %v549
        %v551 = vpop.f32.mrf.mxu0
        %552 = vmatprep.mubr.f32.mxu0 0.0
        %553 = vmatmul.mubr.f32.gmra.mxu0 %v403
        %v554 = vpop.f32.mrf.mxu0
        %v555 = vadd.f32 0.0, %v554
        %v556 = vpop.f32.mrf.mxu0
        %557 = vmatprep.mubr.f32.mxu0 0.0
        %558 = vmatmul.mubr.f32.gmra.mxu0 %v404
        %v559 = vpop.f32.mrf.mxu0
        %v560 = vadd.f32 0.0, %v559
        %v561 = vpop.f32.mrf.mxu0
        %562 = vmatprep.mubr.f32.mxu0 0.0
        %563 = vmatmul.mubr.f32.gmra.mxu0 %v405
        %v564 = vpop.f32.mrf.mxu0
        %v565 = vadd.f32 0.0, %v564
        %v566 = vpop.f32.mrf.mxu0
        %567 = vmatprep.mubr.f32.mxu0 0.0
        %568 = vmatmul.mubr.f32.gmra.mxu0 %v406
        %v569 = vpop.f32.mrf.mxu0
        %v570 = vadd.f32 0.0, %v569
        %v571 = vpop.f32.mrf.mxu0
        %572 = vmatprep.mubr.f32.mxu0 0.0
        %573 = vmatmul.mubr.f32.gmra.mxu0 %v407
        %v574 = vpop.f32.mrf.mxu0
        %v575 = vadd.f32 0.0, %v574
        %v576 = vpop.f32.mrf.mxu0
        %577 = vmatprep.mubr.f32.mxu0 0.0
        %578 = vmatmul.mubr.f32.gmra.mxu0 %v408
        %v579 = vpop.f32.mrf.mxu0
        %v580 = vadd.f32 0.0, %v579
        %v581 = vpop.f32.mrf.mxu0
        %582 = vmatprep.mubr.f32.mxu0 0.0
        %583 = vmatmul.mubr.f32.gmra.mxu0 %v409
        %v584 = vpop.f32.mrf.mxu0
        %v585 = vadd.f32 0.0, %v584
        %v586 = vpop.f32.mrf.mxu0
        %587 = vmatprep.mubr.f32.mxu0 0.0
        %588 = vmatmul.mubr.f32.gmra.mxu0 %v410
        %v589 = vpop.f32.mrf.mxu0
        %v590 = vadd.f32 0.0, %v589
        %v591 = vpop.f32.mrf.mxu0
        %592 = vdwg.mxu0
        %593 = vmatprep.subr.mxu0 0.0
        %594 = vmatpush1.msra.mxu0 %v390
        %595 = vmatprep.subr.mxu0 0.0
        %596 = vmatpush1.msra.mxu0 %v389
        %597 = vmatprep.subr.mxu0 0.0
        %598 = vmatpush1.msra.mxu0 %v388
        %599 = vmatprep.subr.mxu0 0.0
        %600 = vmatpush1.msra.mxu0 %v387
        %601 = vmatprep.subr.mxu0 0.0
        %602 = vmatpush1.msra.mxu0 %v386
        %603 = vmatprep.subr.mxu0 0.0
        %604 = vmatpush1.msra.mxu0 %v385
        %605 = vmatprep.subr.mxu0 0.0
        %606 = vmatpush1.msra.mxu0 %v384
        %607 = vmatprep.subr.mxu0 0.0
        %608 = vmatpush1.msra.mxu0 %v383
        %609 = vmatprep.subr.mxu0 0.0
        %610 = vmatpush1.msra.mxu0 %v382
        %611 = vmatprep.subr.mxu0 0.0
        %612 = vmatpush1.msra.mxu0 %v381
        %613 = vmatprep.subr.mxu0 0.0
        %614 = vmatpush1.msra.mxu0 %v380
        %615 = vmatprep.subr.mxu0 0.0
        %616 = vmatpush1.msra.mxu0 %v379
        %617 = vmatprep.subr.mxu0 0.0
        %618 = vmatpush1.msra.mxu0 %v378
        %619 = vmatprep.subr.mxu0 0.0
        %620 = vmatpush1.msra.mxu0 %v377
        %621 = vmatprep.subr.mxu0 0.0
        %622 = vmatpush1.msra.mxu0 %v376
        %623 = vmatprep.subr.mxu0 0.0
        %624 = vmatpush1.msra.mxu0 %v375
        %625 = vmatprep.subr.mxu0 0.0
        %626 = vmatpush2.msra.mxu0 0.0
        %627 = vmatprep.subr.mxu0 0.0
        %628 = vmatpush2.msra.mxu0 0.0
        %629 = vmatprep.subr.mxu0 0.0
        %630 = vmatpush2.msra.mxu0 0.0
        %631 = vmatprep.subr.mxu0 0.0
        %632 = vmatpush2.msra.mxu0 0.0
        %633 = vmatprep.subr.mxu0 0.0
        %634 = vmatpush2.msra.mxu0 0.0
        %635 = vmatprep.subr.mxu0 0.0
        %636 = vmatpush2.msra.mxu0 0.0
        %637 = vmatprep.subr.mxu0 0.0
        %638 = vmatpush2.msra.mxu0 0.0
        %639 = vmatprep.subr.mxu0 0.0
        %640 = vmatpush2.msra.mxu0 0.0
        %641 = vmatprep.subr.mxu0 0.0
        %642 = vmatpush2.msra.mxu0 0.0
        %643 = vmatprep.subr.mxu0 0.0
        %644 = vmatpush2.msra.mxu0 0.0
        %645 = vmatprep.subr.mxu0 0.0
        %646 = vmatpush2.msra.mxu0 0.0
        %647 = vmatprep.subr.mxu0 0.0
        %648 = vmatpush2.msra.mxu0 0.0
        %649 = vmatprep.subr.mxu0 0.0
        %650 = vmatpush2.msra.mxu0 0.0
        %651 = vmatprep.subr.mxu0 0.0
        %652 = vmatpush2.msra.mxu0 0.0
        %653 = vmatprep.subr.mxu0 0.0
        %654 = vmatpush2.msra.mxu0 0.0
        %655 = vmatprep.subr.mxu0 0.0
        %656 = vmatpush2.msra.mxu0 0.0
        %657 = vmatprep.mubr.f32.mxu0 0.0
        %658 = vmatmul.mubr.f32.gmra.mxu0 %v355
        %v659 = vpop.f32.mrf.mxu0
        %v660 = vadd.f32 %v495, %v659
        %v661 = vpop.f32.mrf.mxu0
        %662 = vmatprep.mubr.f32.mxu0 0.0
        %663 = vmatmul.mubr.f32.gmra.mxu0 %v356
        %v664 = vpop.f32.mrf.mxu0
        %v665 = vadd.f32 %v500, %v664
        %v666 = vpop.f32.mrf.mxu0
        %667 = vmatprep.mubr.f32.mxu0 0.0
        %668 = vmatmul.mubr.f32.gmra.mxu0 %v357
        %v669 = vpop.f32.mrf.mxu0
        %v670 = vadd.f32 %v505, %v669
        %v671 = vpop.f32.mrf.mxu0
        %672 = vmatprep.mubr.f32.mxu0 0.0
        %673 = vmatmul.mubr.f32.gmra.mxu0 %v358
        %v674 = vpop.f32.mrf.mxu0
        %v675 = vadd.f32 %v510, %v674
        %v676 = vpop.f32.mrf.mxu0
        %677 = vmatprep.mubr.f32.mxu0 0.0
        %678 = vmatmul.mubr.f32.gmra.mxu0 %v359
        %v679 = vpop.f32.mrf.mxu0
        %v680 = vadd.f32 %v515, %v679
        %v681 = vpop.f32.mrf.mxu0
        %682 = vmatprep.mubr.f32.mxu0 0.0
        %683 = vmatmul.mubr.f32.gmra.mxu0 %v360
        %v684 = vpop.f32.mrf.mxu0
        %v685 = vadd.f32 %v520, %v684
        %v686 = vpop.f32.mrf.mxu0
        %687 = vmatprep.mubr.f32.mxu0 0.0
        %688 = vmatmul.mubr.f32.gmra.mxu0 %v361
        %v689 = vpop.f32.mrf.mxu0
        %v690 = vadd.f32 %v525, %v689
        %v691 = vpop.f32.mrf.mxu0
        %692 = vmatprep.mubr.f32.mxu0 0.0
        %693 = vmatmul.mubr.f32.gmra.mxu0 %v362
        %v694 = vpop.f32.mrf.mxu0
        %v695 = vadd.f32 %v530, %v694
        %v696 = vpop.f32.mrf.mxu0
        %697 = vmatprep.mubr.f32.mxu0 0.0
        %698 = vmatmul.mubr.f32.gmra.mxu0 %v363
        %v699 = vpop.f32.mrf.mxu0
        %v700 = vadd.f32 %v535, %v699
        %v701 = vpop.f32.mrf.mxu0
        %702 = vmatprep.mubr.f32.mxu0 0.0
        %703 = vmatmul.mubr.f32.gmra.mxu0 %v364
        %v704 = vpop.f32.mrf.mxu0
        %v705 = vadd.f32 %v540, %v704
        %v706 = vpop.f32.mrf.mxu0
        %707 = vmatprep.mubr.f32.mxu0 0.0
        %708 = vmatmul.mubr.f32.gmra.mxu0 %v365
        %v709 = vpop.f32.mrf.mxu0
        %v710 = vadd.f32 %v545, %v709
        %v711 = vpop.f32.mrf.mxu0
        %712 = vmatprep.mubr.f32.mxu0 0.0
        %713 = vmatmul.mubr.f32.gmra.mxu0 %v366
        %v714 = vpop.f32.mrf.mxu0
        %v715 = vadd.f32 %v550, %v714
        %v716 = vpop.f32.mrf.mxu0
        %717 = vmatprep.mubr.f32.mxu0 0.0
        %718 = vmatmul.mubr.f32.gmra.mxu0 %v367
        %v719 = vpop.f32.mrf.mxu0
        %v720 = vadd.f32 %v555, %v719
        %v721 = vpop.f32.mrf.mxu0
        %722 = vmatprep.mubr.f32.mxu0 0.0
        %723 = vmatmul.mubr.f32.gmra.mxu0 %v368
        %v724 = vpop.f32.mrf.mxu0
        %v725 = vadd.f32 %v560, %v724
        %v726 = vpop.f32.mrf.mxu0
        %727 = vmatprep.mubr.f32.mxu0 0.0
        %728 = vmatmul.mubr.f32.gmra.mxu0 %v369
        %v729 = vpop.f32.mrf.mxu0
        %v730 = vadd.f32 %v565, %v729
        %v731 = vpop.f32.mrf.mxu0
        %732 = vmatprep.mubr.f32.mxu0 0.0
        %733 = vmatmul.mubr.f32.gmra.mxu0 %v370
        %v734 = vpop.f32.mrf.mxu0
        %v735 = vadd.f32 %v570, %v734
        %v736 = vpop.f32.mrf.mxu0
        %737 = vmatprep.mubr.f32.mxu0 0.0
        %738 = vmatmul.mubr.f32.gmra.mxu0 %v371
        %v739 = vpop.f32.mrf.mxu0
        %v740 = vadd.f32 %v575, %v739
        %v741 = vpop.f32.mrf.mxu0
        %742 = vmatprep.mubr.f32.mxu0 0.0
        %743 = vmatmul.mubr.f32.gmra.mxu0 %v372
        %v744 = vpop.f32.mrf.mxu0
        %v745 = vadd.f32 %v580, %v744
        %v746 = vpop.f32.mrf.mxu0
        %747 = vmatprep.mubr.f32.mxu0 0.0
        %748 = vmatmul.mubr.f32.gmra.mxu0 %v373
        %v749 = vpop.f32.mrf.mxu0
        %v750 = vadd.f32 %v585, %v749
        %v751 = vpop.f32.mrf.mxu0
        %752 = vmatprep.mubr.f32.mxu0 0.0
        %753 = vmatmul.mubr.f32.gmra.mxu0 %v374
        %v754 = vpop.f32.mrf.mxu0
        %v755 = vadd.f32 %v590, %v754
        %v756 = vpop.f32.mrf.mxu0
        %757 = vdwg.mxu0
        %v758 = vld [vmem:[#allocation2 + $0x2] sm:$0xff]
        %v759 = vld [vmem:[#allocation2 + $0xa] sm:$0xff]
        %v760 = vld [vmem:[#allocation2 + $0x12] sm:$0xff]
        %v761 = vld [vmem:[#allocation2 + $0x1a] sm:$0xff]
        %v762 = vld [vmem:[#allocation2 + $0x22] sm:$0xff]
        %v763 = vld [vmem:[#allocation2 + $0x2a] sm:$0xff]
        %v764 = vld [vmem:[#allocation2 + $0x32] sm:$0xff]
        %v765 = vld [vmem:[#allocation2 + $0x3a] sm:$0xff]
        %v766 = vld [vmem:[#allocation2 + $0x42] sm:$0xff]
        %v767 = vld [vmem:[#allocation2 + $0x4a] sm:$0xff]
        %v768 = vld [vmem:[#allocation2 + $0x52] sm:$0xff]
        %v769 = vld [vmem:[#allocation2 + $0x5a] sm:$0xff]
        %v770 = vld [vmem:[#allocation2 + $0x62] sm:$0xff]
        %v771 = vld [vmem:[#allocation2 + $0x6a] sm:$0xff]
        %v772 = vld [vmem:[#allocation2 + $0x72] sm:$0xff]
        %v773 = vld [vmem:[#allocation2 + $0x7a] sm:$0xff]
        %v774 = vld [vmem:[#allocation2 + $0x82] sm:$0xff]
        %v775 = vld [vmem:[#allocation2 + $0x8a] sm:$0xff]
        %v776 = vld [vmem:[#allocation2 + $0x92] sm:$0xff]
        %v777 = vld [vmem:[#allocation2 + $0x9a] sm:$0x3f]
        %s778 = scalar_lea.vmem [#allocation7], 256
        %v779 = vld [vmem:[%s778] sm:$0xff]
        %v780 = vld [vmem:[%s778 + $0x8] sm:$0xff]
        %v781 = vld [vmem:[%s778 + $0x10] sm:$0xff]
        %v782 = vld [vmem:[%s778 + $0x18] sm:$0xff]
        %v783 = vld [vmem:[%s778 + $0x20] sm:$0xff]
        %v784 = vld [vmem:[%s778 + $0x28] sm:$0xff]
        %v785 = vld [vmem:[%s778 + $0x30] sm:$0xff]
        %v786 = vld [vmem:[%s778 + $0x38] sm:$0xff]
        %v787 = vld [vmem:[%s778 + $0x40] sm:$0xff]
        %v788 = vld [vmem:[%s778 + $0x48] sm:$0xff]
        %v789 = vld [vmem:[%s778 + $0x50] sm:$0xff]
        %v790 = vld [vmem:[%s778 + $0x58] sm:$0xff]
        %v791 = vld [vmem:[%s778 + $0x60] sm:$0xff]
        %v792 = vld [vmem:[%s778 + $0x68] sm:$0xff]
        %v793 = vld [vmem:[%s778 + $0x70] sm:$0xff]
        %v794 = vld [vmem:[%s778 + $0x78] sm:$0xff]
        %795 = vmatprep.subr.mxu0 0.0
        %796 = vmatpush1.msra.mxu0 %v794
        %797 = vmatprep.subr.mxu0 0.0
        %798 = vmatpush1.msra.mxu0 %v793
        %799 = vmatprep.subr.mxu0 0.0
        %800 = vmatpush1.msra.mxu0 %v792
        %801 = vmatprep.subr.mxu0 0.0
        %802 = vmatpush1.msra.mxu0 %v791
        %803 = vmatprep.subr.mxu0 0.0
        %804 = vmatpush1.msra.mxu0 %v790
        %805 = vmatprep.subr.mxu0 0.0
        %806 = vmatpush1.msra.mxu0 %v789
        %807 = vmatprep.subr.mxu0 0.0
        %808 = vmatpush1.msra.mxu0 %v788
        %809 = vmatprep.subr.mxu0 0.0
        %810 = vmatpush1.msra.mxu0 %v787
        %811 = vmatprep.subr.mxu0 0.0
        %812 = vmatpush1.msra.mxu0 %v786
        %813 = vmatprep.subr.mxu0 0.0
        %814 = vmatpush1.msra.mxu0 %v785
        %815 = vmatprep.subr.mxu0 0.0
        %816 = vmatpush1.msra.mxu0 %v784
        %817 = vmatprep.subr.mxu0 0.0
        %818 = vmatpush1.msra.mxu0 %v783
        %819 = vmatprep.subr.mxu0 0.0
        %820 = vmatpush1.msra.mxu0 %v782
        %821 = vmatprep.subr.mxu0 0.0
        %822 = vmatpush1.msra.mxu0 %v781
        %823 = vmatprep.subr.mxu0 0.0
        %824 = vmatpush1.msra.mxu0 %v780
        %825 = vmatprep.subr.mxu0 0.0
        %826 = vmatpush1.msra.mxu0 %v779
        %827 = vmatprep.subr.mxu0 0.0
        %828 = vmatpush2.msra.mxu0 0.0
        %829 = vmatprep.subr.mxu0 0.0
        %830 = vmatpush2.msra.mxu0 0.0
        %831 = vmatprep.subr.mxu0 0.0
        %832 = vmatpush2.msra.mxu0 0.0
        %833 = vmatprep.subr.mxu0 0.0
        %834 = vmatpush2.msra.mxu0 0.0
        %835 = vmatprep.subr.mxu0 0.0
        %836 = vmatpush2.msra.mxu0 0.0
        %837 = vmatprep.subr.mxu0 0.0
        %838 = vmatpush2.msra.mxu0 0.0
        %839 = vmatprep.subr.mxu0 0.0
        %840 = vmatpush2.msra.mxu0 0.0
        %841 = vmatprep.subr.mxu0 0.0
        %842 = vmatpush2.msra.mxu0 0.0
        %843 = vmatprep.subr.mxu0 0.0
        %844 = vmatpush2.msra.mxu0 0.0
        %845 = vmatprep.subr.mxu0 0.0
        %846 = vmatpush2.msra.mxu0 0.0
        %847 = vmatprep.subr.mxu0 0.0
        %848 = vmatpush2.msra.mxu0 0.0
        %849 = vmatprep.subr.mxu0 0.0
        %850 = vmatpush2.msra.mxu0 0.0
        %851 = vmatprep.subr.mxu0 0.0
        %852 = vmatpush2.msra.mxu0 0.0
        %853 = vmatprep.subr.mxu0 0.0
        %854 = vmatpush2.msra.mxu0 0.0
        %855 = vmatprep.subr.mxu0 0.0
        %856 = vmatpush2.msra.mxu0 0.0
        %857 = vmatprep.subr.mxu0 0.0
        %858 = vmatpush2.msra.mxu0 0.0
        %859 = vmatprep.mubr.f32.mxu0 0.0
        %860 = vmatmul.mubr.f32.gmra.mxu0 %v758
        %v861 = vpop.f32.mrf.mxu0
        %v862 = vadd.f32 0.0, %v861
        %v863 = vpop.f32.mrf.mxu0
        %864 = vmatprep.mubr.f32.mxu0 0.0
        %865 = vmatmul.mubr.f32.gmra.mxu0 %v759
        %v866 = vpop.f32.mrf.mxu0
        %v867 = vadd.f32 0.0, %v866
        %v868 = vpop.f32.mrf.mxu0
        %869 = vmatprep.mubr.f32.mxu0 0.0
        %870 = vmatmul.mubr.f32.gmra.mxu0 %v760
        %v871 = vpop.f32.mrf.mxu0
        %v872 = vadd.f32 0.0, %v871
        %v873 = vpop.f32.mrf.mxu0
        %874 = vmatprep.mubr.f32.mxu0 0.0
        %875 = vmatmul.mubr.f32.gmra.mxu0 %v761
        %v876 = vpop.f32.mrf.mxu0
        %v877 = vadd.f32 0.0, %v876
        %v878 = vpop.f32.mrf.mxu0
        %879 = vmatprep.mubr.f32.mxu0 0.0
        %880 = vmatmul.mubr.f32.gmra.mxu0 %v762
        %v881 = vpop.f32.mrf.mxu0
        %v882 = vadd.f32 0.0, %v881
        %v883 = vpop.f32.mrf.mxu0
        %884 = vmatprep.mubr.f32.mxu0 0.0
        %885 = vmatmul.mubr.f32.gmra.mxu0 %v763
        %v886 = vpop.f32.mrf.mxu0
        %v887 = vadd.f32 0.0, %v886
        %v888 = vpop.f32.mrf.mxu0
        %889 = vmatprep.mubr.f32.mxu0 0.0
        %890 = vmatmul.mubr.f32.gmra.mxu0 %v764
        %v891 = vpop.f32.mrf.mxu0
        %v892 = vadd.f32 0.0, %v891
        %v893 = vpop.f32.mrf.mxu0
        %894 = vmatprep.mubr.f32.mxu0 0.0
        %895 = vmatmul.mubr.f32.gmra.mxu0 %v765
        %v896 = vpop.f32.mrf.mxu0
        %v897 = vadd.f32 0.0, %v896
        %v898 = vpop.f32.mrf.mxu0
        %899 = vmatprep.mubr.f32.mxu0 0.0
        %900 = vmatmul.mubr.f32.gmra.mxu0 %v766
        %v901 = vpop.f32.mrf.mxu0
        %v902 = vadd.f32 0.0, %v901
        %v903 = vpop.f32.mrf.mxu0
        %904 = vmatprep.mubr.f32.mxu0 0.0
        %905 = vmatmul.mubr.f32.gmra.mxu0 %v767
        %v906 = vpop.f32.mrf.mxu0
        %v907 = vadd.f32 0.0, %v906
        %v908 = vpop.f32.mrf.mxu0
        %909 = vmatprep.mubr.f32.mxu0 0.0
        %910 = vmatmul.mubr.f32.gmra.mxu0 %v768
        %v911 = vpop.f32.mrf.mxu0
        %v912 = vadd.f32 0.0, %v911
        %v913 = vpop.f32.mrf.mxu0
        %914 = vmatprep.mubr.f32.mxu0 0.0
        %915 = vmatmul.mubr.f32.gmra.mxu0 %v769
        %v916 = vpop.f32.mrf.mxu0
        %v917 = vadd.f32 0.0, %v916
        %v918 = vpop.f32.mrf.mxu0
        %919 = vmatprep.mubr.f32.mxu0 0.0
        %920 = vmatmul.mubr.f32.gmra.mxu0 %v770
        %v921 = vpop.f32.mrf.mxu0
        %v922 = vadd.f32 0.0, %v921
        %v923 = vpop.f32.mrf.mxu0
        %924 = vmatprep.mubr.f32.mxu0 0.0
        %925 = vmatmul.mubr.f32.gmra.mxu0 %v771
        %v926 = vpop.f32.mrf.mxu0
        %v927 = vadd.f32 0.0, %v926
        %v928 = vpop.f32.mrf.mxu0
        %929 = vmatprep.mubr.f32.mxu0 0.0
        %930 = vmatmul.mubr.f32.gmra.mxu0 %v772
        %v931 = vpop.f32.mrf.mxu0
        %v932 = vadd.f32 0.0, %v931
        %v933 = vpop.f32.mrf.mxu0
        %934 = vmatprep.mubr.f32.mxu0 0.0
        %935 = vmatmul.mubr.f32.gmra.mxu0 %v773
        %v936 = vpop.f32.mrf.mxu0
        %v937 = vadd.f32 0.0, %v936
        %v938 = vpop.f32.mrf.mxu0
        %939 = vmatprep.mubr.f32.mxu0 0.0
        %940 = vmatmul.mubr.f32.gmra.mxu0 %v774
        %v941 = vpop.f32.mrf.mxu0
        %v942 = vadd.f32 0.0, %v941
        %v943 = vpop.f32.mrf.mxu0
        %944 = vmatprep.mubr.f32.mxu0 0.0
        %945 = vmatmul.mubr.f32.gmra.mxu0 %v775
        %v946 = vpop.f32.mrf.mxu0
        %v947 = vadd.f32 0.0, %v946
        %v948 = vpop.f32.mrf.mxu0
        %949 = vmatprep.mubr.f32.mxu0 0.0
        %950 = vmatmul.mubr.f32.gmra.mxu0 %v776
        %v951 = vpop.f32.mrf.mxu0
        %v952 = vadd.f32 0.0, %v951
        %v953 = vpop.f32.mrf.mxu0
        %954 = vmatprep.mubr.f32.mxu0 0.0
        %955 = vmatmul.mubr.f32.gmra.mxu0 %v777
        %v956 = vpop.f32.mrf.mxu0
        %v957 = vadd.f32 0.0, %v956
        %v958 = vpop.f32.mrf.mxu0
        %959 = vdwg.mxu0
        %v960 = vadd.f32 %v660, %v862
        %v961 = vadd.f32 %v665, %v867
        %v962 = vadd.f32 %v670, %v872
        %v963 = vadd.f32 %v675, %v877
        %v964 = vadd.f32 %v680, %v882
        %v965 = vadd.f32 %v685, %v887
        %v966 = vadd.f32 %v690, %v892
        %v967 = vadd.f32 %v695, %v897
        %v968 = vadd.f32 %v700, %v902
        %v969 = vadd.f32 %v705, %v907
        %v970 = vadd.f32 %v710, %v912
        %v971 = vadd.f32 %v715, %v917
        %v972 = vadd.f32 %v720, %v922
        %v973 = vadd.f32 %v725, %v927
        %v974 = vadd.f32 %v730, %v932
        %v975 = vadd.f32 %v735, %v937
        %v976 = vadd.f32 %v740, %v942
        %v977 = vadd.f32 %v745, %v947
        %v978 = vadd.f32 %v750, %v952
        %v979 = vadd.f32 %v755, %v957
        %v980 = vld [vmem:[%s2] sm:$0x1]
        %v982 = vlaneseq
        %v983 = vshrl.u32 %v982, 7
        %v984 = vsub.s32 0, %v983
        %v985 = vrot.slane %v980, %v984
        %v987 = vadd.f32 %v960, %v985
        %v988 = vmax.f32 %v987, 0.0
        %989 = vst [vmem:[#allocation3 + $0x1] sm:$0xff] %v988
        %v990 = vadd.f32 %v961, %v985
        %v991 = vadd.f32 %v962, %v985
        %v992 = vmax.f32 %v990, 0.0
        %v993 = vmax.f32 %v991, 0.0
        %994 = vst [vmem:[#allocation3 + $0x9] sm:$0xfc] %v992
        %995 = vst [vmem:[#allocation3 + $0x11] sm:$0x3] %v993
        %v996 = vadd.f32 %v963, %v985
        %v997 = vmax.f32 %v996, 0.0
        %998 = vst [vmem:[#allocation3 + $0x11] sm:$0xf0] %v993
        %999 = vst [vmem:[#allocation3 + $0x19] sm:$0xf] %v997
        %v1000 = vadd.f32 %v964, %v985
        %v1001 = vmax.f32 %v1000, 0.0
        %1002 = vst [vmem:[#allocation3 + $0x19] sm:$0xc0] %v997
        %1003 = vst [vmem:[#allocation3 + $0x21] sm:$0x3f] %v1001
        %v1004 = vadd.f32 %v965, %v985
        %v1005 = vmax.f32 %v1004, 0.0
        %1006 = vst [vmem:[#allocation3 + $0x29] sm:$0xff] %v1005
        %v1007 = vadd.f32 %v966, %v985
        %v1008 = vadd.f32 %v967, %v985
        %v1009 = vmax.f32 %v1007, 0.0
        %v1010 = vmax.f32 %v1008, 0.0
        %1011 = vst [vmem:[#allocation3 + $0x31] sm:$0xfc] %v1009
        %1012 = vst [vmem:[#allocation3 + $0x39] sm:$0x3] %v1010
        %v1013 = vadd.f32 %v968, %v985
        %v1014 = vmax.f32 %v1013, 0.0
        %1015 = vst [vmem:[#allocation3 + $0x39] sm:$0xf0] %v1010
        %1016 = vst [vmem:[#allocation3 + $0x41] sm:$0xf] %v1014
        %v1017 = vadd.f32 %v969, %v985
        %v1018 = vmax.f32 %v1017, 0.0
        %1019 = vst [vmem:[#allocation3 + $0x41] sm:$0xc0] %v1014
        %1020 = vst [vmem:[#allocation3 + $0x49] sm:$0x3f] %v1018
        %v1021 = vadd.f32 %v970, %v985
        %v1022 = vmax.f32 %v1021, 0.0
        %1023 = vst [vmem:[#allocation3 + $0x51] sm:$0xff] %v1022
        %v1024 = vadd.f32 %v971, %v985
        %v1025 = vadd.f32 %v972, %v985
        %v1026 = vmax.f32 %v1024, 0.0
        %v1027 = vmax.f32 %v1025, 0.0
        %1028 = vst [vmem:[#allocation3 + $0x59] sm:$0xfc] %v1026
        %1029 = vst [vmem:[#allocation3 + $0x61] sm:$0x3] %v1027
        %v1030 = vadd.f32 %v973, %v985
        %v1031 = vmax.f32 %v1030, 0.0
        %1032 = vst [vmem:[#allocation3 + $0x61] sm:$0xf0] %v1027
        %1033 = vst [vmem:[#allocation3 + $0x69] sm:$0xf] %v1031
        %v1034 = vadd.f32 %v974, %v985
        %v1035 = vmax.f32 %v1034, 0.0
        %1036 = vst [vmem:[#allocation3 + $0x69] sm:$0xc0] %v1031
        %1037 = vst [vmem:[#allocation3 + $0x71] sm:$0x3f] %v1035
        %v1038 = vadd.f32 %v975, %v985
        %v1039 = vmax.f32 %v1038, 0.0
        %1040 = vst [vmem:[#allocation3 + $0x79] sm:$0xff] %v1039
        %v1041 = vadd.f32 %v976, %v985
        %v1042 = vadd.f32 %v977, %v985
        %v1043 = vmax.f32 %v1041, 0.0
        %v1044 = vmax.f32 %v1042, 0.0
        %1045 = vst [vmem:[#allocation3 + $0x81] sm:$0xfc] %v1043
        %1046 = vst [vmem:[#allocation3 + $0x89] sm:$0x3] %v1044
        %v1047 = vadd.f32 %v978, %v985
        %v1048 = vmax.f32 %v1047, 0.0
        %1049 = vst [vmem:[#allocation3 + $0x89] sm:$0xf0] %v1044
        %1050 = vst [vmem:[#allocation3 + $0x91] sm:$0xf] %v1048
        %v1051 = vadd.f32 %v979, %v985
        %v1052 = vmax.f32 %v1051, 0.0
        %1053 = vst [vmem:[#allocation3 + $0x91] sm:$0xc0] %v1048
        %1054 = vst [vmem:[#allocation3 + $0x99] sm:$0x3f] %v1052
        %v1055 = vld [vmem:[#allocation3] sm:$0xff]
        %v1056 = vld [vmem:[#allocation3 + $0x8] sm:$0xff]
        %v1057 = vld [vmem:[#allocation3 + $0x10] sm:$0xff]
        %v1058 = vld [vmem:[#allocation3 + $0x18] sm:$0xff]
        %v1059 = vld [vmem:[#allocation3 + $0x20] sm:$0xff]
        %v1060 = vld [vmem:[#allocation3 + $0x28] sm:$0xff]
        %v1061 = vld [vmem:[#allocation3 + $0x30] sm:$0xff]
        %v1062 = vld [vmem:[#allocation3 + $0x38] sm:$0xff]
        %v1063 = vld [vmem:[#allocation3 + $0x40] sm:$0xff]
        %v1064 = vld [vmem:[#allocation3 + $0x48] sm:$0xff]
        %v1065 = vld [vmem:[#allocation3 + $0x50] sm:$0xff]
        %v1066 = vld [vmem:[#allocation3 + $0x58] sm:$0xff]
        %v1067 = vld [vmem:[#allocation3 + $0x60] sm:$0xff]
        %v1068 = vld [vmem:[#allocation3 + $0x68] sm:$0xff]
        %v1069 = vld [vmem:[#allocation3 + $0x70] sm:$0xff]
        %v1070 = vld [vmem:[#allocation3 + $0x78] sm:$0xff]
        %v1071 = vld [vmem:[#allocation3 + $0x80] sm:$0xff]
        %v1072 = vld [vmem:[#allocation3 + $0x88] sm:$0xff]
        %v1073 = vld [vmem:[#allocation3 + $0x90] sm:$0xff]
        %v1074 = vld [vmem:[#allocation3 + $0x98] sm:$0x3f]
        %v1075 = vld [vmem:[#allocation9] sm:$0xff]
        %v1076 = vld [vmem:[#allocation9 + $0x8] sm:$0xff]
        %v1077 = vld [vmem:[#allocation9 + $0x10] sm:$0xff]
        %v1078 = vld [vmem:[#allocation9 + $0x18] sm:$0xff]
        %v1079 = vld [vmem:[#allocation9 + $0x20] sm:$0xff]
        %v1080 = vld [vmem:[#allocation9 + $0x28] sm:$0xff]
        %v1081 = vld [vmem:[#allocation9 + $0x30] sm:$0xff]
        %v1082 = vld [vmem:[#allocation9 + $0x38] sm:$0xff]
        %v1083 = vld [vmem:[#allocation9 + $0x40] sm:$0xff]
        %v1084 = vld [vmem:[#allocation9 + $0x48] sm:$0xff]
        %v1085 = vld [vmem:[#allocation9 + $0x50] sm:$0xff]
        %v1086 = vld [vmem:[#allocation9 + $0x58] sm:$0xff]
        %v1087 = vld [vmem:[#allocation9 + $0x60] sm:$0xff]
        %v1088 = vld [vmem:[#allocation9 + $0x68] sm:$0xff]
        %v1089 = vld [vmem:[#allocation9 + $0x70] sm:$0xff]
        %v1090 = vld [vmem:[#allocation9 + $0x78] sm:$0xff]
        %v1091 = vld [vmem:[#allocation3 + $0x1] sm:$0xff]
        %v1092 = vld [vmem:[#allocation3 + $0x9] sm:$0xff]
        %v1093 = vld [vmem:[#allocation3 + $0x11] sm:$0xff]
        %v1094 = vld [vmem:[#allocation3 + $0x19] sm:$0xff]
        %v1095 = vld [vmem:[#allocation3 + $0x21] sm:$0xff]
        %v1096 = vld [vmem:[#allocation3 + $0x29] sm:$0xff]
        %v1097 = vld [vmem:[#allocation3 + $0x31] sm:$0xff]
        %v1098 = vld [vmem:[#allocation3 + $0x39] sm:$0xff]
        %v1099 = vld [vmem:[#allocation3 + $0x41] sm:$0xff]
        %v1100 = vld [vmem:[#allocation3 + $0x49] sm:$0xff]
        %v1101 = vld [vmem:[#allocation3 + $0x51] sm:$0xff]
        %v1102 = vld [vmem:[#allocation3 + $0x59] sm:$0xff]
        %v1103 = vld [vmem:[#allocation3 + $0x61] sm:$0xff]
        %v1104 = vld [vmem:[#allocation3 + $0x69] sm:$0xff]
        %v1105 = vld [vmem:[#allocation3 + $0x71] sm:$0xff]
        %v1106 = vld [vmem:[#allocation3 + $0x79] sm:$0xff]
        %v1107 = vld [vmem:[#allocation3 + $0x81] sm:$0xff]
        %v1108 = vld [vmem:[#allocation3 + $0x89] sm:$0xff]
        %v1109 = vld [vmem:[#allocation3 + $0x91] sm:$0xff]
        %v1110 = vld [vmem:[#allocation3 + $0x99] sm:$0x3f]
        %s1111 = scalar_lea.vmem [#allocation9], 128
        %v1112 = vld [vmem:[%s1111] sm:$0xff]
        %v1113 = vld [vmem:[%s1111 + $0x8] sm:$0xff]
        %v1114 = vld [vmem:[%s1111 + $0x10] sm:$0xff]
        %v1115 = vld [vmem:[%s1111 + $0x18] sm:$0xff]
        %v1116 = vld [vmem:[%s1111 + $0x20] sm:$0xff]
        %v1117 = vld [vmem:[%s1111 + $0x28] sm:$0xff]
        %v1118 = vld [vmem:[%s1111 + $0x30] sm:$0xff]
        %v1119 = vld [vmem:[%s1111 + $0x38] sm:$0xff]
        %v1120 = vld [vmem:[%s1111 + $0x40] sm:$0xff]
        %v1121 = vld [vmem:[%s1111 + $0x48] sm:$0xff]
        %v1122 = vld [vmem:[%s1111 + $0x50] sm:$0xff]
        %v1123 = vld [vmem:[%s1111 + $0x58] sm:$0xff]
        %v1124 = vld [vmem:[%s1111 + $0x60] sm:$0xff]
        %v1125 = vld [vmem:[%s1111 + $0x68] sm:$0xff]
        %v1126 = vld [vmem:[%s1111 + $0x70] sm:$0xff]
        %v1127 = vld [vmem:[%s1111 + $0x78] sm:$0xff]
        %1128 = vmatprep.subr.mxu0 0.0
        %1129 = vmatpush1.msra.mxu0 %v1127
        %1130 = vmatprep.subr.mxu0 0.0
        %1131 = vmatpush1.msra.mxu0 %v1126
        %1132 = vmatprep.subr.mxu0 0.0
        %1133 = vmatpush1.msra.mxu0 %v1125
        %1134 = vmatprep.subr.mxu0 0.0
        %1135 = vmatpush1.msra.mxu0 %v1124
        %1136 = vmatprep.subr.mxu0 0.0
        %1137 = vmatpush1.msra.mxu0 %v1123
        %1138 = vmatprep.subr.mxu0 0.0
        %1139 = vmatpush1.msra.mxu0 %v1122
        %1140 = vmatprep.subr.mxu0 0.0
        %1141 = vmatpush1.msra.mxu0 %v1121
        %1142 = vmatprep.subr.mxu0 0.0
        %1143 = vmatpush1.msra.mxu0 %v1120
        %1144 = vmatprep.subr.mxu0 0.0
        %1145 = vmatpush1.msra.mxu0 %v1119
        %1146 = vmatprep.subr.mxu0 0.0
        %1147 = vmatpush1.msra.mxu0 %v1118
        %1148 = vmatprep.subr.mxu0 0.0
        %1149 = vmatpush1.msra.mxu0 %v1117
        %1150 = vmatprep.subr.mxu0 0.0
        %1151 = vmatpush1.msra.mxu0 %v1116
        %1152 = vmatprep.subr.mxu0 0.0
        %1153 = vmatpush1.msra.mxu0 %v1115
        %1154 = vmatprep.subr.mxu0 0.0
        %1155 = vmatpush1.msra.mxu0 %v1114
        %1156 = vmatprep.subr.mxu0 0.0
        %1157 = vmatpush1.msra.mxu0 %v1113
        %1158 = vmatprep.subr.mxu0 0.0
        %1159 = vmatpush1.msra.mxu0 %v1112
        %1160 = vmatprep.subr.mxu0 0.0
        %1161 = vmatpush2.msra.mxu0 0.0
        %1162 = vmatprep.subr.mxu0 0.0
        %1163 = vmatpush2.msra.mxu0 0.0
        %1164 = vmatprep.subr.mxu0 0.0
        %1165 = vmatpush2.msra.mxu0 0.0
        %1166 = vmatprep.subr.mxu0 0.0
        %1167 = vmatpush2.msra.mxu0 0.0
        %1168 = vmatprep.subr.mxu0 0.0
        %1169 = vmatpush2.msra.mxu0 0.0
        %1170 = vmatprep.subr.mxu0 0.0
        %1171 = vmatpush2.msra.mxu0 0.0
        %1172 = vmatprep.subr.mxu0 0.0
        %1173 = vmatpush2.msra.mxu0 0.0
        %1174 = vmatprep.subr.mxu0 0.0
        %1175 = vmatpush2.msra.mxu0 0.0
        %1176 = vmatprep.subr.mxu0 0.0
        %1177 = vmatpush2.msra.mxu0 0.0
        %1178 = vmatprep.subr.mxu0 0.0
        %1179 = vmatpush2.msra.mxu0 0.0
        %1180 = vmatprep.subr.mxu0 0.0
        %1181 = vmatpush2.msra.mxu0 0.0
        %1182 = vmatprep.subr.mxu0 0.0
        %1183 = vmatpush2.msra.mxu0 0.0
        %1184 = vmatprep.subr.mxu0 0.0
        %1185 = vmatpush2.msra.mxu0 0.0
        %1186 = vmatprep.subr.mxu0 0.0
        %1187 = vmatpush2.msra.mxu0 0.0
        %1188 = vmatprep.subr.mxu0 0.0
        %1189 = vmatpush2.msra.mxu0 0.0
        %1190 = vmatprep.subr.mxu0 0.0
        %1191 = vmatpush2.msra.mxu0 0.0
        %1192 = vmatprep.mubr.f32.mxu0 0.0
        %1193 = vmatmul.mubr.f32.gmra.mxu0 %v1091
        %v1194 = vpop.f32.mrf.mxu0
        %v1195 = vadd.f32 0.0, %v1194
        %v1196 = vpop.f32.mrf.mxu0
        %1197 = vmatprep.mubr.f32.mxu0 0.0
        %1198 = vmatmul.mubr.f32.gmra.mxu0 %v1092
        %v1199 = vpop.f32.mrf.mxu0
        %v1200 = vadd.f32 0.0, %v1199
        %v1201 = vpop.f32.mrf.mxu0
        %1202 = vmatprep.mubr.f32.mxu0 0.0
        %1203 = vmatmul.mubr.f32.gmra.mxu0 %v1093
        %v1204 = vpop.f32.mrf.mxu0
        %v1205 = vadd.f32 0.0, %v1204
        %v1206 = vpop.f32.mrf.mxu0
        %1207 = vmatprep.mubr.f32.mxu0 0.0
        %1208 = vmatmul.mubr.f32.gmra.mxu0 %v1094
        %v1209 = vpop.f32.mrf.mxu0
        %v1210 = vadd.f32 0.0, %v1209
        %v1211 = vpop.f32.mrf.mxu0
        %1212 = vmatprep.mubr.f32.mxu0 0.0
        %1213 = vmatmul.mubr.f32.gmra.mxu0 %v1095
        %v1214 = vpop.f32.mrf.mxu0
        %v1215 = vadd.f32 0.0, %v1214
        %v1216 = vpop.f32.mrf.mxu0
        %1217 = vmatprep.mubr.f32.mxu0 0.0
        %1218 = vmatmul.mubr.f32.gmra.mxu0 %v1096
        %v1219 = vpop.f32.mrf.mxu0
        %v1220 = vadd.f32 0.0, %v1219
        %v1221 = vpop.f32.mrf.mxu0
        %1222 = vmatprep.mubr.f32.mxu0 0.0
        %1223 = vmatmul.mubr.f32.gmra.mxu0 %v1097
        %v1224 = vpop.f32.mrf.mxu0
        %v1225 = vadd.f32 0.0, %v1224
        %v1226 = vpop.f32.mrf.mxu0
        %1227 = vmatprep.mubr.f32.mxu0 0.0
        %1228 = vmatmul.mubr.f32.gmra.mxu0 %v1098
        %v1229 = vpop.f32.mrf.mxu0
        %v1230 = vadd.f32 0.0, %v1229
        %v1231 = vpop.f32.mrf.mxu0
        %1232 = vmatprep.mubr.f32.mxu0 0.0
        %1233 = vmatmul.mubr.f32.gmra.mxu0 %v1099
        %v1234 = vpop.f32.mrf.mxu0
        %v1235 = vadd.f32 0.0, %v1234
        %v1236 = vpop.f32.mrf.mxu0
        %1237 = vmatprep.mubr.f32.mxu0 0.0
        %1238 = vmatmul.mubr.f32.gmra.mxu0 %v1100
        %v1239 = vpop.f32.mrf.mxu0
        %v1240 = vadd.f32 0.0, %v1239
        %v1241 = vpop.f32.mrf.mxu0
        %1242 = vmatprep.mubr.f32.mxu0 0.0
        %1243 = vmatmul.mubr.f32.gmra.mxu0 %v1101
        %v1244 = vpop.f32.mrf.mxu0
        %v1245 = vadd.f32 0.0, %v1244
        %v1246 = vpop.f32.mrf.mxu0
        %1247 = vmatprep.mubr.f32.mxu0 0.0
        %1248 = vmatmul.mubr.f32.gmra.mxu0 %v1102
        %v1249 = vpop.f32.mrf.mxu0
        %v1250 = vadd.f32 0.0, %v1249
        %v1251 = vpop.f32.mrf.mxu0
        %1252 = vmatprep.mubr.f32.mxu0 0.0
        %1253 = vmatmul.mubr.f32.gmra.mxu0 %v1103
        %v1254 = vpop.f32.mrf.mxu0
        %v1255 = vadd.f32 0.0, %v1254
        %v1256 = vpop.f32.mrf.mxu0
        %1257 = vmatprep.mubr.f32.mxu0 0.0
        %1258 = vmatmul.mubr.f32.gmra.mxu0 %v1104
        %v1259 = vpop.f32.mrf.mxu0
        %v1260 = vadd.f32 0.0, %v1259
        %v1261 = vpop.f32.mrf.mxu0
        %1262 = vmatprep.mubr.f32.mxu0 0.0
        %1263 = vmatmul.mubr.f32.gmra.mxu0 %v1105
        %v1264 = vpop.f32.mrf.mxu0
        %v1265 = vadd.f32 0.0, %v1264
        %v1266 = vpop.f32.mrf.mxu0
        %1267 = vmatprep.mubr.f32.mxu0 0.0
        %1268 = vmatmul.mubr.f32.gmra.mxu0 %v1106
        %v1269 = vpop.f32.mrf.mxu0
        %v1270 = vadd.f32 0.0, %v1269
        %v1271 = vpop.f32.mrf.mxu0
        %1272 = vmatprep.mubr.f32.mxu0 0.0
        %1273 = vmatmul.mubr.f32.gmra.mxu0 %v1107
        %v1274 = vpop.f32.mrf.mxu0
        %v1275 = vadd.f32 0.0, %v1274
        %v1276 = vpop.f32.mrf.mxu0
        %1277 = vmatprep.mubr.f32.mxu0 0.0
        %1278 = vmatmul.mubr.f32.gmra.mxu0 %v1108
        %v1279 = vpop.f32.mrf.mxu0
        %v1280 = vadd.f32 0.0, %v1279
        %v1281 = vpop.f32.mrf.mxu0
        %1282 = vmatprep.mubr.f32.mxu0 0.0
        %1283 = vmatmul.mubr.f32.gmra.mxu0 %v1109
        %v1284 = vpop.f32.mrf.mxu0
        %v1285 = vadd.f32 0.0, %v1284
        %v1286 = vpop.f32.mrf.mxu0
        %1287 = vmatprep.mubr.f32.mxu0 0.0
        %1288 = vmatmul.mubr.f32.gmra.mxu0 %v1110
        %v1289 = vpop.f32.mrf.mxu0
        %v1290 = vadd.f32 0.0, %v1289
        %v1291 = vpop.f32.mrf.mxu0
        %1292 = vdwg.mxu0
        %1293 = vmatprep.subr.mxu0 0.0
        %1294 = vmatpush1.msra.mxu0 %v1090
        %1295 = vmatprep.subr.mxu0 0.0
        %1296 = vmatpush1.msra.mxu0 %v1089
        %1297 = vmatprep.subr.mxu0 0.0
        %1298 = vmatpush1.msra.mxu0 %v1088
        %1299 = vmatprep.subr.mxu0 0.0
        %1300 = vmatpush1.msra.mxu0 %v1087
        %1301 = vmatprep.subr.mxu0 0.0
        %1302 = vmatpush1.msra.mxu0 %v1086
        %1303 = vmatprep.subr.mxu0 0.0
        %1304 = vmatpush1.msra.mxu0 %v1085
        %1305 = vmatprep.subr.mxu0 0.0
        %1306 = vmatpush1.msra.mxu0 %v1084
        %1307 = vmatprep.subr.mxu0 0.0
        %1308 = vmatpush1.msra.mxu0 %v1083
        %1309 = vmatprep.subr.mxu0 0.0
        %1310 = vmatpush1.msra.mxu0 %v1082
        %1311 = vmatprep.subr.mxu0 0.0
        %1312 = vmatpush1.msra.mxu0 %v1081
        %1313 = vmatprep.subr.mxu0 0.0
        %1314 = vmatpush1.msra.mxu0 %v1080
        %1315 = vmatprep.subr.mxu0 0.0
        %1316 = vmatpush1.msra.mxu0 %v1079
        %1317 = vmatprep.subr.mxu0 0.0
        %1318 = vmatpush1.msra.mxu0 %v1078
        %1319 = vmatprep.subr.mxu0 0.0
        %1320 = vmatpush1.msra.mxu0 %v1077
        %1321 = vmatprep.subr.mxu0 0.0
        %1322 = vmatpush1.msra.mxu0 %v1076
        %1323 = vmatprep.subr.mxu0 0.0
        %1324 = vmatpush1.msra.mxu0 %v1075
        %1325 = vmatprep.subr.mxu0 0.0
        %1326 = vmatpush2.msra.mxu0 0.0
        %1327 = vmatprep.subr.mxu0 0.0
        %1328 = vmatpush2.msra.mxu0 0.0
        %1329 = vmatprep.subr.mxu0 0.0
        %1330 = vmatpush2.msra.mxu0 0.0
        %1331 = vmatprep.subr.mxu0 0.0
        %1332 = vmatpush2.msra.mxu0 0.0
        %1333 = vmatprep.subr.mxu0 0.0
        %1334 = vmatpush2.msra.mxu0 0.0
        %1335 = vmatprep.subr.mxu0 0.0
        %1336 = vmatpush2.msra.mxu0 0.0
        %1337 = vmatprep.subr.mxu0 0.0
        %1338 = vmatpush2.msra.mxu0 0.0
        %1339 = vmatprep.subr.mxu0 0.0
        %1340 = vmatpush2.msra.mxu0 0.0
        %1341 = vmatprep.subr.mxu0 0.0
        %1342 = vmatpush2.msra.mxu0 0.0
        %1343 = vmatprep.subr.mxu0 0.0
        %1344 = vmatpush2.msra.mxu0 0.0
        %1345 = vmatprep.subr.mxu0 0.0
        %1346 = vmatpush2.msra.mxu0 0.0
        %1347 = vmatprep.subr.mxu0 0.0
        %1348 = vmatpush2.msra.mxu0 0.0
        %1349 = vmatprep.subr.mxu0 0.0
        %1350 = vmatpush2.msra.mxu0 0.0
        %1351 = vmatprep.subr.mxu0 0.0
        %1352 = vmatpush2.msra.mxu0 0.0
        %1353 = vmatprep.subr.mxu0 0.0
        %1354 = vmatpush2.msra.mxu0 0.0
        %1355 = vmatprep.subr.mxu0 0.0
        %1356 = vmatpush2.msra.mxu0 0.0
        %1357 = vmatprep.mubr.f32.mxu0 0.0
        %1358 = vmatmul.mubr.f32.gmra.mxu0 %v1055
        %v1359 = vpop.f32.mrf.mxu0
        %v1360 = vadd.f32 %v1195, %v1359
        %v1361 = vpop.f32.mrf.mxu0
        %1362 = vmatprep.mubr.f32.mxu0 0.0
        %1363 = vmatmul.mubr.f32.gmra.mxu0 %v1056
        %v1364 = vpop.f32.mrf.mxu0
        %v1365 = vadd.f32 %v1200, %v1364
        %v1366 = vpop.f32.mrf.mxu0
        %1367 = vmatprep.mubr.f32.mxu0 0.0
        %1368 = vmatmul.mubr.f32.gmra.mxu0 %v1057
        %v1369 = vpop.f32.mrf.mxu0
        %v1370 = vadd.f32 %v1205, %v1369
        %v1371 = vpop.f32.mrf.mxu0
        %1372 = vmatprep.mubr.f32.mxu0 0.0
        %1373 = vmatmul.mubr.f32.gmra.mxu0 %v1058
        %v1374 = vpop.f32.mrf.mxu0
        %v1375 = vadd.f32 %v1210, %v1374
        %v1376 = vpop.f32.mrf.mxu0
        %1377 = vmatprep.mubr.f32.mxu0 0.0
        %1378 = vmatmul.mubr.f32.gmra.mxu0 %v1059
        %v1379 = vpop.f32.mrf.mxu0
        %v1380 = vadd.f32 %v1215, %v1379
        %v1381 = vpop.f32.mrf.mxu0
        %1382 = vmatprep.mubr.f32.mxu0 0.0
        %1383 = vmatmul.mubr.f32.gmra.mxu0 %v1060
        %v1384 = vpop.f32.mrf.mxu0
        %v1385 = vadd.f32 %v1220, %v1384
        %v1386 = vpop.f32.mrf.mxu0
        %1387 = vmatprep.mubr.f32.mxu0 0.0
        %1388 = vmatmul.mubr.f32.gmra.mxu0 %v1061
        %v1389 = vpop.f32.mrf.mxu0
        %v1390 = vadd.f32 %v1225, %v1389
        %v1391 = vpop.f32.mrf.mxu0
        %1392 = vmatprep.mubr.f32.mxu0 0.0
        %1393 = vmatmul.mubr.f32.gmra.mxu0 %v1062
        %v1394 = vpop.f32.mrf.mxu0
        %v1395 = vadd.f32 %v1230, %v1394
        %v1396 = vpop.f32.mrf.mxu0
        %1397 = vmatprep.mubr.f32.mxu0 0.0
        %1398 = vmatmul.mubr.f32.gmra.mxu0 %v1063
        %v1399 = vpop.f32.mrf.mxu0
        %v1400 = vadd.f32 %v1235, %v1399
        %v1401 = vpop.f32.mrf.mxu0
        %1402 = vmatprep.mubr.f32.mxu0 0.0
        %1403 = vmatmul.mubr.f32.gmra.mxu0 %v1064
        %v1404 = vpop.f32.mrf.mxu0
        %v1405 = vadd.f32 %v1240, %v1404
        %v1406 = vpop.f32.mrf.mxu0
        %1407 = vmatprep.mubr.f32.mxu0 0.0
        %1408 = vmatmul.mubr.f32.gmra.mxu0 %v1065
        %v1409 = vpop.f32.mrf.mxu0
        %v1410 = vadd.f32 %v1245, %v1409
        %v1411 = vpop.f32.mrf.mxu0
        %1412 = vmatprep.mubr.f32.mxu0 0.0
        %1413 = vmatmul.mubr.f32.gmra.mxu0 %v1066
        %v1414 = vpop.f32.mrf.mxu0
        %v1415 = vadd.f32 %v1250, %v1414
        %v1416 = vpop.f32.mrf.mxu0
        %1417 = vmatprep.mubr.f32.mxu0 0.0
        %1418 = vmatmul.mubr.f32.gmra.mxu0 %v1067
        %v1419 = vpop.f32.mrf.mxu0
        %v1420 = vadd.f32 %v1255, %v1419
        %v1421 = vpop.f32.mrf.mxu0
        %1422 = vmatprep.mubr.f32.mxu0 0.0
        %1423 = vmatmul.mubr.f32.gmra.mxu0 %v1068
        %v1424 = vpop.f32.mrf.mxu0
        %v1425 = vadd.f32 %v1260, %v1424
        %v1426 = vpop.f32.mrf.mxu0
        %1427 = vmatprep.mubr.f32.mxu0 0.0
        %1428 = vmatmul.mubr.f32.gmra.mxu0 %v1069
        %v1429 = vpop.f32.mrf.mxu0
        %v1430 = vadd.f32 %v1265, %v1429
        %v1431 = vpop.f32.mrf.mxu0
        %1432 = vmatprep.mubr.f32.mxu0 0.0
        %1433 = vmatmul.mubr.f32.gmra.mxu0 %v1070
        %v1434 = vpop.f32.mrf.mxu0
        %v1435 = vadd.f32 %v1270, %v1434
        %v1436 = vpop.f32.mrf.mxu0
        %1437 = vmatprep.mubr.f32.mxu0 0.0
        %1438 = vmatmul.mubr.f32.gmra.mxu0 %v1071
        %v1439 = vpop.f32.mrf.mxu0
        %v1440 = vadd.f32 %v1275, %v1439
        %v1441 = vpop.f32.mrf.mxu0
        %1442 = vmatprep.mubr.f32.mxu0 0.0
        %1443 = vmatmul.mubr.f32.gmra.mxu0 %v1072
        %v1444 = vpop.f32.mrf.mxu0
        %v1445 = vadd.f32 %v1280, %v1444
        %v1446 = vpop.f32.mrf.mxu0
        %1447 = vmatprep.mubr.f32.mxu0 0.0
        %1448 = vmatmul.mubr.f32.gmra.mxu0 %v1073
        %v1449 = vpop.f32.mrf.mxu0
        %v1450 = vadd.f32 %v1285, %v1449
        %v1451 = vpop.f32.mrf.mxu0
        %1452 = vmatprep.mubr.f32.mxu0 0.0
        %1453 = vmatmul.mubr.f32.gmra.mxu0 %v1074
        %v1454 = vpop.f32.mrf.mxu0
        %v1455 = vadd.f32 %v1290, %v1454
        %v1456 = vpop.f32.mrf.mxu0
        %1457 = vdwg.mxu0
        %v1458 = vld [vmem:[#allocation3 + $0x2] sm:$0xff]
        %v1459 = vld [vmem:[#allocation3 + $0xa] sm:$0xff]
        %v1460 = vld [vmem:[#allocation3 + $0x12] sm:$0xff]
        %v1461 = vld [vmem:[#allocation3 + $0x1a] sm:$0xff]
        %v1462 = vld [vmem:[#allocation3 + $0x22] sm:$0xff]
        %v1463 = vld [vmem:[#allocation3 + $0x2a] sm:$0xff]
        %v1464 = vld [vmem:[#allocation3 + $0x32] sm:$0xff]
        %v1465 = vld [vmem:[#allocation3 + $0x3a] sm:$0xff]
        %v1466 = vld [vmem:[#allocation3 + $0x42] sm:$0xff]
        %v1467 = vld [vmem:[#allocation3 + $0x4a] sm:$0xff]
        %v1468 = vld [vmem:[#allocation3 + $0x52] sm:$0xff]
        %v1469 = vld [vmem:[#allocation3 + $0x5a] sm:$0xff]
        %v1470 = vld [vmem:[#allocation3 + $0x62] sm:$0xff]
        %v1471 = vld [vmem:[#allocation3 + $0x6a] sm:$0xff]
        %v1472 = vld [vmem:[#allocation3 + $0x72] sm:$0xff]
        %v1473 = vld [vmem:[#allocation3 + $0x7a] sm:$0xff]
        %v1474 = vld [vmem:[#allocation3 + $0x82] sm:$0xff]
        %v1475 = vld [vmem:[#allocation3 + $0x8a] sm:$0xff]
        %v1476 = vld [vmem:[#allocation3 + $0x92] sm:$0xff]
        %v1477 = vld [vmem:[#allocation3 + $0x9a] sm:$0x3f]
        %s1478 = scalar_lea.vmem [#allocation9], 256
        %v1479 = vld [vmem:[%s1478] sm:$0xff]
        %v1480 = vld [vmem:[%s1478 + $0x8] sm:$0xff]
        %v1481 = vld [vmem:[%s1478 + $0x10] sm:$0xff]
        %v1482 = vld [vmem:[%s1478 + $0x18] sm:$0xff]
        %v1483 = vld [vmem:[%s1478 + $0x20] sm:$0xff]
        %v1484 = vld [vmem:[%s1478 + $0x28] sm:$0xff]
        %v1485 = vld [vmem:[%s1478 + $0x30] sm:$0xff]
        %v1486 = vld [vmem:[%s1478 + $0x38] sm:$0xff]
        %v1487 = vld [vmem:[%s1478 + $0x40] sm:$0xff]
        %v1488 = vld [vmem:[%s1478 + $0x48] sm:$0xff]
        %v1489 = vld [vmem:[%s1478 + $0x50] sm:$0xff]
        %v1490 = vld [vmem:[%s1478 + $0x58] sm:$0xff]
        %v1491 = vld [vmem:[%s1478 + $0x60] sm:$0xff]
        %v1492 = vld [vmem:[%s1478 + $0x68] sm:$0xff]
        %v1493 = vld [vmem:[%s1478 + $0x70] sm:$0xff]
        %v1494 = vld [vmem:[%s1478 + $0x78] sm:$0xff]
        %1495 = vmatprep.subr.mxu0 0.0
        %1496 = vmatpush1.msra.mxu0 %v1494
        %1497 = vmatprep.subr.mxu0 0.0
        %1498 = vmatpush1.msra.mxu0 %v1493
        %1499 = vmatprep.subr.mxu0 0.0
        %1500 = vmatpush1.msra.mxu0 %v1492
        %1501 = vmatprep.subr.mxu0 0.0
        %1502 = vmatpush1.msra.mxu0 %v1491
        %1503 = vmatprep.subr.mxu0 0.0
        %1504 = vmatpush1.msra.mxu0 %v1490
        %1505 = vmatprep.subr.mxu0 0.0
        %1506 = vmatpush1.msra.mxu0 %v1489
        %1507 = vmatprep.subr.mxu0 0.0
        %1508 = vmatpush1.msra.mxu0 %v1488
        %1509 = vmatprep.subr.mxu0 0.0
        %1510 = vmatpush1.msra.mxu0 %v1487
        %1511 = vmatprep.subr.mxu0 0.0
        %1512 = vmatpush1.msra.mxu0 %v1486
        %1513 = vmatprep.subr.mxu0 0.0
        %1514 = vmatpush1.msra.mxu0 %v1485
        %1515 = vmatprep.subr.mxu0 0.0
        %1516 = vmatpush1.msra.mxu0 %v1484
        %1517 = vmatprep.subr.mxu0 0.0
        %1518 = vmatpush1.msra.mxu0 %v1483
        %1519 = vmatprep.subr.mxu0 0.0
        %1520 = vmatpush1.msra.mxu0 %v1482
        %1521 = vmatprep.subr.mxu0 0.0
        %1522 = vmatpush1.msra.mxu0 %v1481
        %1523 = vmatprep.subr.mxu0 0.0
        %1524 = vmatpush1.msra.mxu0 %v1480
        %1525 = vmatprep.subr.mxu0 0.0
        %1526 = vmatpush1.msra.mxu0 %v1479
        %1527 = vmatprep.subr.mxu0 0.0
        %1528 = vmatpush2.msra.mxu0 0.0
        %1529 = vmatprep.subr.mxu0 0.0
        %1530 = vmatpush2.msra.mxu0 0.0
        %1531 = vmatprep.subr.mxu0 0.0
        %1532 = vmatpush2.msra.mxu0 0.0
        %1533 = vmatprep.subr.mxu0 0.0
        %1534 = vmatpush2.msra.mxu0 0.0
        %1535 = vmatprep.subr.mxu0 0.0
        %1536 = vmatpush2.msra.mxu0 0.0
        %1537 = vmatprep.subr.mxu0 0.0
        %1538 = vmatpush2.msra.mxu0 0.0
        %1539 = vmatprep.subr.mxu0 0.0
        %1540 = vmatpush2.msra.mxu0 0.0
        %1541 = vmatprep.subr.mxu0 0.0
        %1542 = vmatpush2.msra.mxu0 0.0
        %1543 = vmatprep.subr.mxu0 0.0
        %1544 = vmatpush2.msra.mxu0 0.0
        %1545 = vmatprep.subr.mxu0 0.0
        %1546 = vmatpush2.msra.mxu0 0.0
        %1547 = vmatprep.subr.mxu0 0.0
        %1548 = vmatpush2.msra.mxu0 0.0
        %1549 = vmatprep.subr.mxu0 0.0
        %1550 = vmatpush2.msra.mxu0 0.0
        %1551 = vmatprep.subr.mxu0 0.0
        %1552 = vmatpush2.msra.mxu0 0.0
        %1553 = vmatprep.subr.mxu0 0.0
        %1554 = vmatpush2.msra.mxu0 0.0
        %1555 = vmatprep.subr.mxu0 0.0
        %1556 = vmatpush2.msra.mxu0 0.0
        %1557 = vmatprep.subr.mxu0 0.0
        %1558 = vmatpush2.msra.mxu0 0.0
        %1559 = vmatprep.mubr.f32.mxu0 0.0
        %1560 = vmatmul.mubr.f32.gmra.mxu0 %v1458
        %v1561 = vpop.f32.mrf.mxu0
        %v1562 = vadd.f32 0.0, %v1561
        %v1563 = vpop.f32.mrf.mxu0
        %1564 = vmatprep.mubr.f32.mxu0 0.0
        %1565 = vmatmul.mubr.f32.gmra.mxu0 %v1459
        %v1566 = vpop.f32.mrf.mxu0
        %v1567 = vadd.f32 0.0, %v1566
        %v1568 = vpop.f32.mrf.mxu0
        %1569 = vmatprep.mubr.f32.mxu0 0.0
        %1570 = vmatmul.mubr.f32.gmra.mxu0 %v1460
        %v1571 = vpop.f32.mrf.mxu0
        %v1572 = vadd.f32 0.0, %v1571
        %v1573 = vpop.f32.mrf.mxu0
        %1574 = vmatprep.mubr.f32.mxu0 0.0
        %1575 = vmatmul.mubr.f32.gmra.mxu0 %v1461
        %v1576 = vpop.f32.mrf.mxu0
        %v1577 = vadd.f32 0.0, %v1576
        %v1578 = vpop.f32.mrf.mxu0
        %1579 = vmatprep.mubr.f32.mxu0 0.0
        %1580 = vmatmul.mubr.f32.gmra.mxu0 %v1462
        %v1581 = vpop.f32.mrf.mxu0
        %v1582 = vadd.f32 0.0, %v1581
        %v1583 = vpop.f32.mrf.mxu0
        %1584 = vmatprep.mubr.f32.mxu0 0.0
        %1585 = vmatmul.mubr.f32.gmra.mxu0 %v1463
        %v1586 = vpop.f32.mrf.mxu0
        %v1587 = vadd.f32 0.0, %v1586
        %v1588 = vpop.f32.mrf.mxu0
        %1589 = vmatprep.mubr.f32.mxu0 0.0
        %1590 = vmatmul.mubr.f32.gmra.mxu0 %v1464
        %v1591 = vpop.f32.mrf.mxu0
        %v1592 = vadd.f32 0.0, %v1591
        %v1593 = vpop.f32.mrf.mxu0
        %1594 = vmatprep.mubr.f32.mxu0 0.0
        %1595 = vmatmul.mubr.f32.gmra.mxu0 %v1465
        %v1596 = vpop.f32.mrf.mxu0
        %v1597 = vadd.f32 0.0, %v1596
        %v1598 = vpop.f32.mrf.mxu0
        %1599 = vmatprep.mubr.f32.mxu0 0.0
        %1600 = vmatmul.mubr.f32.gmra.mxu0 %v1466
        %v1601 = vpop.f32.mrf.mxu0
        %v1602 = vadd.f32 0.0, %v1601
        %v1603 = vpop.f32.mrf.mxu0
        %1604 = vmatprep.mubr.f32.mxu0 0.0
        %1605 = vmatmul.mubr.f32.gmra.mxu0 %v1467
        %v1606 = vpop.f32.mrf.mxu0
        %v1607 = vadd.f32 0.0, %v1606
        %v1608 = vpop.f32.mrf.mxu0
        %1609 = vmatprep.mubr.f32.mxu0 0.0
        %1610 = vmatmul.mubr.f32.gmra.mxu0 %v1468
        %v1611 = vpop.f32.mrf.mxu0
        %v1612 = vadd.f32 0.0, %v1611
        %v1613 = vpop.f32.mrf.mxu0
        %1614 = vmatprep.mubr.f32.mxu0 0.0
        %1615 = vmatmul.mubr.f32.gmra.mxu0 %v1469
        %v1616 = vpop.f32.mrf.mxu0
        %v1617 = vadd.f32 0.0, %v1616
        %v1618 = vpop.f32.mrf.mxu0
        %1619 = vmatprep.mubr.f32.mxu0 0.0
        %1620 = vmatmul.mubr.f32.gmra.mxu0 %v1470
        %v1621 = vpop.f32.mrf.mxu0
        %v1622 = vadd.f32 0.0, %v1621
        %v1623 = vpop.f32.mrf.mxu0
        %1624 = vmatprep.mubr.f32.mxu0 0.0
        %1625 = vmatmul.mubr.f32.gmra.mxu0 %v1471
        %v1626 = vpop.f32.mrf.mxu0
        %v1627 = vadd.f32 0.0, %v1626
        %v1628 = vpop.f32.mrf.mxu0
        %1629 = vmatprep.mubr.f32.mxu0 0.0
        %1630 = vmatmul.mubr.f32.gmra.mxu0 %v1472
        %v1631 = vpop.f32.mrf.mxu0
        %v1632 = vadd.f32 0.0, %v1631
        %v1633 = vpop.f32.mrf.mxu0
        %1634 = vmatprep.mubr.f32.mxu0 0.0
        %1635 = vmatmul.mubr.f32.gmra.mxu0 %v1473
        %v1636 = vpop.f32.mrf.mxu0
        %v1637 = vadd.f32 0.0, %v1636
        %v1638 = vpop.f32.mrf.mxu0
        %1639 = vmatprep.mubr.f32.mxu0 0.0
        %1640 = vmatmul.mubr.f32.gmra.mxu0 %v1474
        %v1641 = vpop.f32.mrf.mxu0
        %v1642 = vadd.f32 0.0, %v1641
        %v1643 = vpop.f32.mrf.mxu0
        %1644 = vmatprep.mubr.f32.mxu0 0.0
        %1645 = vmatmul.mubr.f32.gmra.mxu0 %v1475
        %v1646 = vpop.f32.mrf.mxu0
        %v1647 = vadd.f32 0.0, %v1646
        %v1648 = vpop.f32.mrf.mxu0
        %1649 = vmatprep.mubr.f32.mxu0 0.0
        %1650 = vmatmul.mubr.f32.gmra.mxu0 %v1476
        %v1651 = vpop.f32.mrf.mxu0
        %v1652 = vadd.f32 0.0, %v1651
        %v1653 = vpop.f32.mrf.mxu0
        %1654 = vmatprep.mubr.f32.mxu0 0.0
        %1655 = vmatmul.mubr.f32.gmra.mxu0 %v1477
        %v1656 = vpop.f32.mrf.mxu0
        %v1657 = vadd.f32 0.0, %v1656
        %v1658 = vpop.f32.mrf.mxu0
        %1659 = vdwg.mxu0
        %v1660 = vadd.f32 %v1360, %v1562
        %v1661 = vadd.f32 %v1365, %v1567
        %v1662 = vadd.f32 %v1370, %v1572
        %v1663 = vadd.f32 %v1375, %v1577
        %v1664 = vadd.f32 %v1380, %v1582
        %v1665 = vadd.f32 %v1385, %v1587
        %v1666 = vadd.f32 %v1390, %v1592
        %v1667 = vadd.f32 %v1395, %v1597
        %v1668 = vadd.f32 %v1400, %v1602
        %v1669 = vadd.f32 %v1405, %v1607
        %v1670 = vadd.f32 %v1410, %v1612
        %v1671 = vadd.f32 %v1415, %v1617
        %v1672 = vadd.f32 %v1420, %v1622
        %v1673 = vadd.f32 %v1425, %v1627
        %v1674 = vadd.f32 %v1430, %v1632
        %v1675 = vadd.f32 %v1435, %v1637
        %v1676 = vadd.f32 %v1440, %v1642
        %v1677 = vadd.f32 %v1445, %v1647
        %v1678 = vadd.f32 %v1450, %v1652
        %v1679 = vadd.f32 %v1455, %v1657
        %v1680 = vld [vmem:[%s4] sm:$0x1]
        %v1682 = vlaneseq
        %v1683 = vshrl.u32 %v1682, 7
        %v1684 = vsub.s32 0, %v1683
        %v1685 = vrot.slane %v1680, %v1684
        %v1687 = vadd.f32 %v1660, %v1685
        %v1688 = vld [vmem:[%s237] sm:$0xff]
        %v1689 = vadd.f32 %v1687, %v1688
        %v1690 = vmax.f32 %v1689, 0.0
        %1691 = vst [vmem:[%s271] sm:$0xff] %v1690
        %v1692 = vadd.f32 %v1661, %v1685
        %v1693 = vadd.f32 %v1662, %v1685
        %v1694 = vld [vmem:[%s310] sm:$0xff]
        %v1696 = vrot.slane %v1694, 6
        %v1698 = vadd.f32 %v1692, %v1696
        %v1699 = vadd.f32 %v1693, %v1696
        %v1700 = vmax.f32 %v1698, 0.0
        %v1701 = vmax.f32 %v1699, 0.0
        %s1702 = scalar_lea.vmem %s271, 8 [#allocation10]
        %1703 = vst [vmem:[%s1702 - $0x2] sm:$0xfc] %v1700
        %1704 = vst [vmem:[%s1702 + $0x6] sm:$0x3] %v1701
        %v1705 = vadd.f32 %v1663, %v1685
        %v1706 = vld [vmem:[%s313] sm:$0xff]
        %v1708 = vrot.slane %v1706, 4
        %v1710 = vadd.f32 %v1693, %v1708
        %v1711 = vadd.f32 %v1705, %v1708
        %v1712 = vmax.f32 %v1710, 0.0
        %v1713 = vmax.f32 %v1711, 0.0
        %s1714 = scalar_lea.vmem %s271, 16 [#allocation10]
        %1715 = vst [vmem:[%s1714 - $0x4] sm:$0xf0] %v1712
        %1716 = vst [vmem:[%s1714 + $0x4] sm:$0xf] %v1713
        %v1717 = vadd.f32 %v1664, %v1685
        %v1718 = vld [vmem:[%s316] sm:$0xff]
        %v1720 = vrot.slane %v1718, 2
        %v1722 = vadd.f32 %v1705, %v1720
        %v1723 = vadd.f32 %v1717, %v1720
        %v1724 = vmax.f32 %v1722, 0.0
        %v1725 = vmax.f32 %v1723, 0.0
        %s1726 = scalar_lea.vmem %s271, 24 [#allocation10]
        %1727 = vst [vmem:[%s1726 - $0x6] sm:$0xc0] %v1724
        %1728 = vst [vmem:[%s1726 + $0x2] sm:$0x3f] %v1725
        %v1729 = vadd.f32 %v1665, %v1685
        %v1730 = vld [vmem:[%s319] sm:$0xff]
        %v1731 = vadd.f32 %v1729, %v1730
        %v1732 = vmax.f32 %v1731, 0.0
        %s1733 = scalar_lea.vmem %s271, 32 [#allocation10]
        %1734 = vst [vmem:[%s1733] sm:$0xff] %v1732
        %v1735 = vadd.f32 %v1666, %v1685
        %v1736 = vadd.f32 %v1667, %v1685
        %v1737 = vld [vmem:[%s322] sm:$0xff]
        %v1739 = vrot.slane %v1737, 6
        %v1741 = vadd.f32 %v1735, %v1739
        %v1742 = vadd.f32 %v1736, %v1739
        %v1743 = vmax.f32 %v1741, 0.0
        %v1744 = vmax.f32 %v1742, 0.0
        %s1745 = scalar_lea.vmem %s271, 40 [#allocation10]
        %1746 = vst [vmem:[%s1745 - $0x2] sm:$0xfc] %v1743
        %1747 = vst [vmem:[%s1745 + $0x6] sm:$0x3] %v1744
        %v1748 = vadd.f32 %v1668, %v1685
        %v1749 = vld [vmem:[%s325] sm:$0xff]
        %v1751 = vrot.slane %v1749, 4
        %v1753 = vadd.f32 %v1736, %v1751
        %v1754 = vadd.f32 %v1748, %v1751
        %v1755 = vmax.f32 %v1753, 0.0
        %v1756 = vmax.f32 %v1754, 0.0
        %s1757 = scalar_lea.vmem %s271, 48 [#allocation10]
        %1758 = vst [vmem:[%s1757 - $0x4] sm:$0xf0] %v1755
        %1759 = vst [vmem:[%s1757 + $0x4] sm:$0xf] %v1756
        %v1760 = vadd.f32 %v1669, %v1685
        %v1761 = vld [vmem:[%s328] sm:$0xff]
        %v1763 = vrot.slane %v1761, 2
        %v1765 = vadd.f32 %v1748, %v1763
        %v1766 = vadd.f32 %v1760, %v1763
        %v1767 = vmax.f32 %v1765, 0.0
        %v1768 = vmax.f32 %v1766, 0.0
        %s1769 = scalar_lea.vmem %s271, 56 [#allocation10]
        %1770 = vst [vmem:[%s1769 - $0x6] sm:$0xc0] %v1767
        %1771 = vst [vmem:[%s1769 + $0x2] sm:$0x3f] %v1768
        %v1772 = vadd.f32 %v1670, %v1685
        %v1773 = vld [vmem:[%s331] sm:$0xff]
        %v1774 = vadd.f32 %v1772, %v1773
        %v1775 = vmax.f32 %v1774, 0.0
        %s1776 = scalar_lea.vmem %s271, 64 [#allocation10]
        %1777 = vst [vmem:[%s1776] sm:$0xff] %v1775
        %v1778 = vadd.f32 %v1671, %v1685
        %v1779 = vadd.f32 %v1672, %v1685
        %v1780 = vld [vmem:[%s334] sm:$0xff]
        %v1782 = vrot.slane %v1780, 6
        %v1784 = vadd.f32 %v1778, %v1782
        %v1785 = vadd.f32 %v1779, %v1782
        %v1786 = vmax.f32 %v1784, 0.0
        %v1787 = vmax.f32 %v1785, 0.0
        %s1788 = scalar_lea.vmem %s271, 72 [#allocation10]
        %1789 = vst [vmem:[%s1788 - $0x2] sm:$0xfc] %v1786
        %1790 = vst [vmem:[%s1788 + $0x6] sm:$0x3] %v1787
        %v1791 = vadd.f32 %v1673, %v1685
        %v1792 = vld [vmem:[%s337] sm:$0xff]
        %v1794 = vrot.slane %v1792, 4
        %v1796 = vadd.f32 %v1779, %v1794
        %v1797 = vadd.f32 %v1791, %v1794
        %v1798 = vmax.f32 %v1796, 0.0
        %v1799 = vmax.f32 %v1797, 0.0
        %s1800 = scalar_lea.vmem %s271, 80 [#allocation10]
        %1801 = vst [vmem:[%s1800 - $0x4] sm:$0xf0] %v1798
        %1802 = vst [vmem:[%s1800 + $0x4] sm:$0xf] %v1799
        %v1803 = vadd.f32 %v1674, %v1685
        %v1804 = vld [vmem:[%s340] sm:$0xff]
        %v1806 = vrot.slane %v1804, 2
        %v1808 = vadd.f32 %v1791, %v1806
        %v1809 = vadd.f32 %v1803, %v1806
        %v1810 = vmax.f32 %v1808, 0.0
        %v1811 = vmax.f32 %v1809, 0.0
        %s1812 = scalar_lea.vmem %s271, 88 [#allocation10]
        %1813 = vst [vmem:[%s1812 - $0x6] sm:$0xc0] %v1810
        %1814 = vst [vmem:[%s1812 + $0x2] sm:$0x3f] %v1811
        %v1815 = vadd.f32 %v1675, %v1685
        %v1816 = vld [vmem:[%s343] sm:$0xff]
        %v1817 = vadd.f32 %v1815, %v1816
        %v1818 = vmax.f32 %v1817, 0.0
        %s1819 = scalar_lea.vmem %s271, 96 [#allocation10]
        %1820 = vst [vmem:[%s1819] sm:$0xff] %v1818
        %v1821 = vadd.f32 %v1676, %v1685
        %v1822 = vadd.f32 %v1677, %v1685
        %v1823 = vld [vmem:[%s346] sm:$0xff]
        %v1825 = vrot.slane %v1823, 6
        %v1827 = vadd.f32 %v1821, %v1825
        %v1828 = vadd.f32 %v1822, %v1825
        %v1829 = vmax.f32 %v1827, 0.0
        %v1830 = vmax.f32 %v1828, 0.0
        %s1831 = scalar_lea.vmem %s271, 104 [#allocation10]
        %1832 = vst [vmem:[%s1831 - $0x2] sm:$0xfc] %v1829
        %1833 = vst [vmem:[%s1831 + $0x6] sm:$0x3] %v1830
        %v1834 = vadd.f32 %v1678, %v1685
        %v1835 = vld [vmem:[%s349] sm:$0xff]
        %v1837 = vrot.slane %v1835, 4
        %v1839 = vadd.f32 %v1822, %v1837
        %v1840 = vadd.f32 %v1834, %v1837
        %v1841 = vmax.f32 %v1839, 0.0
        %v1842 = vmax.f32 %v1840, 0.0
        %s1843 = scalar_lea.vmem %s271, 112 [#allocation10]
        %1844 = vst [vmem:[%s1843 - $0x4] sm:$0xf0] %v1841
        %1845 = vst [vmem:[%s1843 + $0x4] sm:$0xf] %v1842
        %v1846 = vadd.f32 %v1679, %v1685
        %v1847 = vld [vmem:[%s352] sm:$0xff]
        %v1849 = vrot.slane %v1847, 2
        %v1851 = vadd.f32 %v1834, %v1849
        %v1852 = vadd.f32 %v1846, %v1849
        %v1853 = vmax.f32 %v1851, 0.0
        %v1854 = vmax.f32 %v1852, 0.0
        %s1855 = scalar_lea.vmem %s271, 120 [#allocation10]
        %1856 = vst [vmem:[%s1855 - $0x6] sm:$0xc0] %v1853
        %1857 = vst [vmem:[%s1855 + $0x2] sm:$0x3f] %v1854
        %s1858 = sand.u32 %s141, 1
        %s1859 = scalar_lea.sflag [#allocation6], %s1858
        %s1860 = sand.u32 %s141, 1
        %s1861 = smul.addr %s1860, 128
        %s1862 = scalar_lea.vmem [#allocation10], %s1861
        // Predicated region
        $region53: #{tpu_custom_call.1} parent=39 // pred_check
          %p1863 = pneg %p151
        $region54: #{tpu_custom_call.1} parent=39 // pred_check_branch
          %1865 = sbr.rel (%p1863) target = $region56
        $region55: #{tpu_custom_call.1} parent=39 // pred_region
          %s1866 = smul.u32 16, %s23
          %s1868 = ssub.s32 2048, 2048
          %1869 = vsyncadd %s1859, %s1868
          %s1870 = smul.addr %s1866, 128
          %s1871 = scalar_lea.hbm %s5, %s1870
          %s1872 = sshll.u32 %s1862, 4
          %s1873 = int_to_ptr.vmem [resolvable:$true] %s1872
          %1878 = dma.vmem_to_hbm [thread:$0]  %s1873, 2048, %s1871, %s1859, 128, 128, 8
        $region56: #{tpu_custom_call.1} parent=39 // pred_fallthru
          _
      $region40: #{tpu_custom_call.1} parent=5 // pred_fallthru
        _
      %p1879 = scmp.le.s32.totalorder 2, %s18
      // Predicated region
      $region57: #{tpu_custom_call.1} parent=5 // pred_check
        %p1880 = pneg %p1879
      $region58: #{tpu_custom_call.1} parent=5 // pred_check_branch
        %1882 = sbr.rel (%p1880) target = $region60
      $region59: #{tpu_custom_call.1} parent=5 // pred_region
        %s1883 = ssub.s32 %s18, 2
        // Predicated region
        $region61: #{tpu_custom_call.1} parent=59 // pred_check
          %p1884 = pneg %p157
        $region62: #{tpu_custom_call.1} parent=59 // pred_check_branch
          %1886 = sbr.rel (%p1884) target = $region64
        $region63: #{tpu_custom_call.1} parent=59 // pred_region
          %s1887 = sand.u32 %s142, 1
          %s1888 = scalar_lea.sflag [#allocation6], %s1887
          %s1889 = sand.u32 %s142, 1
          %s1890 = smul.addr %s1889, 128
          %s1891 = scalar_lea.vmem [#allocation10], %s1890
          %1892 = dma.done %s1888, 2048
        $region64: #{tpu_custom_call.1} parent=59 // pred_fallthru
          _
      $region60: #{tpu_custom_call.1} parent=5 // pred_fallthru
        _
    $region6: #{tpu_custom_call.1} parent=1 // loop_footer
      %s22 = sadd.s32 1, %s18
    $region7: #{tpu_custom_call.1} parent=1 // loop_footer_branch
      %17 = sbr.rel target = $region3
    $region8: #{tpu_custom_call.1} parent=1 // loop_exit
      _
    %1893 = vsyncpa [#allocation5], 1
    %s1894 = scalar_lea.sflag [#allocation5], 1
    %1895 = vsyncpa %s1894, 1
    %1896 = vsyncpa [#allocation8], 1
    %1897 = vsyncpa [#allocation6], 1
    %s1898 = scalar_lea.sflag [#allocation6], 1
    %1899 = vsyncpa %s1898, 1

</llo_original>
